<compile_context>
chip_gen: v5e
topology: v5e:2x2
jax: 0.10.0
libtpu: 0.0.40
codegen_flags: <defaults>
</compile_context>

<pallas_src>
import functools

import jax
import jax.numpy as jnp
from jax import lax
from jax.experimental import pallas as pl
from jax.experimental.pallas import tpu as pltpu

KSIZE = 9     # conv2 kernel size
PAD = 4       # conv2 padding
EPS = 1e-5    # BatchNorm eps
LANE = 128    # TPU lane width
HALO = 8      # sublane-aligned halo rows per side (>= PAD, multiple of 8)


def _round_up(a, b):
    return (a + b - 1) // b * b


def _bottleneck_kernel(x_ref, xh_ref,
                       w1_ref, s1_ref, b1_ref,
                       w2_ref, s2_ref, b2_ref,
                       w3_ref, s3_ref, b3_ref,
                       o_ref, *, l_total, tile_l):
    # x_ref : (TL, Cp)        bf16  current L-tile (also the residual)
    # xh_ref: (2*HALO, Cp)    bf16  halo rows: [0:8] before the tile, [8:16] after
    # w1/w3 : (Cp, Cp)        bf16  raw conv weights
    # w2    : (KSIZE*Cp, Cp)  bf16  raw conv weights, taps flattened tap-major
    # s*/b* : (1, Cp)         f32   folded BN scale / shift per stage
    TL = tile_l
    TLE = TL + 2 * HALO
    i = pl.program_id(1)

    x = x_ref[...]                                   # (TL, Cp)   bf16
    xh = xh_ref[...]                                 # (16, Cp)   bf16

    # 8-row-aligned halo extension: pure aligned VMEM copies, no XLU shuffles.
    xe = jnp.concatenate([xh[:HALO], x, xh[HALO:]], axis=0)      # (TLE, Cp) bf16

    # --- stage 1: 1x1 conv (MXU) + BN scale/shift (f32) + ReLU ---
    h1 = jnp.dot(xe, w1_ref[...], preferred_element_type=jnp.float32)
    h1 = jnp.maximum(h1 * s1_ref[...] + b1_ref[...], 0.0)        # (TLE, Cp) f32

    # conv2 zero-pads its input outside [0, L): zero every row whose global
    # position is outside the real sequence (halo of first/last tile and any
    # L-padding rows of the last tile).
    r = lax.broadcasted_iota(jnp.int32, (TLE, 1), 0)
    g = i * TL + r - HALO
    h1 = jnp.where((g >= 0) & (g < l_total), h1, 0.0)
    h1b = h1.astype(jnp.bfloat16)

    # --- stage 2: 9-tap conv fused as one (TL, 9*Cp) @ (9*Cp, Cp) MXU matmul ---
    # tap k of output row r needs h1 at global position (r + k - PAD), i.e.
    # local row (HALO - PAD + k + r).
    off = HALO - PAD
    taps = jnp.concatenate(
        [h1b[off + k: off + k + TL, :] for k in range(KSIZE)], axis=1)
    h2 = jnp.dot(taps, w2_ref[...], preferred_element_type=jnp.float32)
    h2 = jnp.maximum(h2 * s2_ref[...] + b2_ref[...], 0.0)        # (TL, Cp) f32

    # --- stage 3: 1x1 conv + BN scale/shift (no ReLU) ---
    h3 = jnp.dot(h2.astype(jnp.bfloat16), w3_ref[...],
                 preferred_element_type=jnp.float32)
    h3 = h3 * s3_ref[...] + b3_ref[...]

    # --- identity residual + final ReLU (f32) ---
    out = jnp.maximum(h3 + x.astype(jnp.float32), 0.0)
    o_ref[...] = out.astype(o_ref.dtype)


def _fold_bn(conv_bias, gamma, beta, mean, var):
    """Inference BatchNorm + conv bias -> per-channel (scale, shift)."""
    scale = gamma / jnp.sqrt(var + EPS)
    shift = scale * (conv_bias - mean) + beta
    return scale, shift


def _const_spec(shape, single_buffer):
    """BlockSpec for a grid-constant input; single-buffered when supported."""
    index_map = lambda b, i: (0,) * len(shape)
    if single_buffer and hasattr(pl, "Buffered"):
        try:
            return pl.BlockSpec(shape, index_map, pipeline_mode=pl.Buffered(1))
        except TypeError:       # pipeline_mode kwarg not available in this JAX
            pass
    return pl.BlockSpec(shape, index_map)


def bottleneck_pallas(x_ncl, params, *, tile_l=None):
    """x_ncl: (B, C_in, L) float32.  Returns (B, C_in, L) float32."""
    B, Cin, L = x_ncl.shape
    P = params["w1"].shape[0]
    assert P == Cin, "expansion=1 and downsample=None require planes == in_planes"

    Cp = _round_up(max(Cin, LANE), LANE)              # lane-dense channels

    # ---- tile size from a VMEM budget that fits every generation ----
    # live-VMEM model (perf review): ~48*TL*Cp activation/intermediate bytes
    # + ~22*Cp^2*n_buf weight bytes.  40 MiB of buffers + 48 MiB scoped limit
    # leaves headroom on v7x (64 MiB/TC) and is comfortable on v5e/v6e (128).
    n_wbuf = 2                                        # conservative (fallback path)
    w_bytes = (11 * Cp * Cp * 2 + 6 * Cp * 4) * n_wbuf
    budget = 40 * 1024 * 1024
    tl_auto = max(8, ((budget - w_bytes) // (48 * Cp)) // 8 * 8)
    tl_auto = min(tl_auto, 4096)
    if tile_l is not None:
        tl_auto = min(tl_auto, max(8, _round_up(tile_l, 8)))
    TL = min(tl_auto, _round_up(L, 8))
    NT = -(-L // TL)
    Lp = NT * TL

    # ---- BN folded to per-channel f32 scale & shift (weights stay raw) ----
    s1, sh1 = _fold_bn(params["b1"], params["g1"], params["be1"],
                       params["m1"], params["v1"])
    s2, sh2 = _fold_bn(params["b2"], params["g2"], params["be2"],
                       params["m2"], params["v2"])
    s3, sh3 = _fold_bn(params["b3"], params["g3"], params["be3"],
                       params["m3"], params["v3"])

    def _pad_vec(v):
        return jnp.pad(v, (0, Cp - P)).reshape(1, Cp).astype(jnp.float32)

    w1 = jnp.transpose(params["w1"][:, :, 0], (1, 0))                     # (Cin, P)
    w1 = jnp.pad(w1, ((0, Cp - Cin), (0, Cp - P))).astype(jnp.bfloat16)

    w2 = jnp.transpose(params["w2"], (2, 1, 0))                           # (K, P, P)
    w2 = jnp.pad(w2, ((0, 0), (0, Cp - P), (0, Cp - P)))
    w2 = w2.reshape(KSIZE * Cp, Cp).astype(jnp.bfloat16)                  # (9*Cp, Cp)

    w3 = jnp.transpose(params["w3"][:, :, 0], (1, 0))                     # (P, P)
    w3 = jnp.pad(w3, ((0, Cp - P), (0, Cp - P))).astype(jnp.bfloat16)

    s1v, b1v = _pad_vec(s1), _pad_vec(sh1)
    s2v, b2v = _pad_vec(s2), _pad_vec(sh2)
    s3v, b3v = _pad_vec(s3), _pad_vec(sh3)

    # ---- activations: NCL -> NLC, pad to (Lp, Cp), cast to bf16 (one pass) ----
    x_nlc = jnp.transpose(x_ncl, (0, 2, 1))                               # (B, L, Cin)
    x_pad = jnp.pad(x_nlc, ((0, 0), (0, Lp - L), (0, Cp - Cin))).astype(jnp.bfloat16)

    # ---- tiny per-tile halo side input via gather (no full-size temps) ----
    pos = jnp.arange(NT, dtype=jnp.int32)[:, None] * TL                   # (NT, 1)
    h = jnp.arange(HALO, dtype=jnp.int32)[None, :]                        # (1, 8)
    idx = jnp.concatenate([pos - HALO + h, pos + TL + h], axis=1)         # (NT, 16)
    valid = (idx >= 0) & (idx < L)
    idxc = jnp.clip(idx, 0, Lp - 1)
    x_halo = jnp.where(valid[None, :, :, None], x_pad[:, idxc, :], 0)     # (B,NT,16,Cp)
    x_halo = x_halo.astype(jnp.bfloat16)

    kernel = functools.partial(_bottleneck_kernel, l_total=L, tile_l=TL)

    def _call(single_buffer_weights):
        csp = lambda shp: _const_spec(shp, single_buffer_weights)
        return pl.pallas_call(
            kernel,
            out_shape=jax.ShapeDtypeStruct((B, Lp, Cp), jnp.bfloat16),
            grid=(B, NT),
            in_specs=[
                pl.BlockSpec((None, TL, Cp), lambda b, i: (b, i, 0)),            # x tile
                pl.BlockSpec((None, None, 2 * HALO, Cp),
                             lambda b, i: (b, i, 0, 0)),                          # halo
                csp((Cp, Cp)), csp((1, Cp)), csp((1, Cp)),                        # w1,s1,b1
                csp((KSIZE * Cp, Cp)), csp((1, Cp)), csp((1, Cp)),                # w2,s2,b2
                csp((Cp, Cp)), csp((1, Cp)), csp((1, Cp)),                        # w3,s3,b3
            ],
            out_specs=pl.BlockSpec((None, TL, Cp), lambda b, i: (b, i, 0)),
            compiler_params=pltpu.CompilerParams(
                dimension_semantics=("parallel", "parallel"),
                vmem_limit_bytes=48 * 1024 * 1024),
        )(x_pad, x_halo, w1, s1v, b1v, w2, s2v, b2v, w3, s3v, b3v)

    try:
        out_nlc = _call(True)
        out_nlc.block_until_ready()
    except Exception:           # Buffered(1) rejected by this build -> default buffering
        out_nlc = _call(False)

    return jnp.transpose(out_nlc[:, :L, :Cin], (0, 2, 1)).astype(jnp.float32)


# ----------------------- plain-JAX reference (NCL, f32) -----------------------
def _cbr_ref(x, w, bias, gamma, beta, mean, var, pad, has_relu):
    y = lax.conv_general_dilated(
        x, w, window_strides=(1,), padding=[(pad, pad)],
        dimension_numbers=("NCH", "OIH", "NCH"))
    y = y + bias[None, :, None]
    y = gamma[None, :, None] * (y - mean[None, :, None]) / \
        jnp.sqrt(var[None, :, None] + EPS) + beta[None, :, None]
    if has_relu:
        y = jnp.maximum(y, 0.0)
    return y


def bottleneck_ref(x, p):
    out = _cbr_ref(x, p["w1"], p["b1"], p["g1"], p["be1"], p["m1"], p["v1"], 0, True)
    out = _cbr_ref(out, p["w2"], p["b2"], p["g2"], p["be2"], p["m2"], p["v2"], PAD, True)
    out = _cbr_ref(out, p["w3"], p["b3"], p["g3"], p["be3"], p["m3"], p["v3"], 0, False)
    return jnp.maximum(out + x, 0.0)


def make_params(key, in_planes, planes):
    ks = jax.random.split(key, 16)
    def bn(k, c):
        k1, k2, k3, k4 = jax.random.split(k, 4)
        return (1.0 + 0.1 * jax.random.normal(k1, (c,)),
                0.1 * jax.random.normal(k2, (c,)),
                0.1 * jax.random.normal(k3, (c,)),
                1.0 + 0.1 * jnp.abs(jax.random.normal(k4, (c,))))
    g1, be1, m1, v1 = bn(ks[0], planes)
    g2, be2, m2, v2 = bn(ks[1], planes)
    g3, be3, m3, v3 = bn(ks[2], planes)
    return dict(
        w1=0.1 * jax.random.normal(ks[3], (planes, in_planes, 1)),
        b1=0.1 * jax.random.normal(ks[4], (planes,)),
        g1=g1, be1=be1, m1=m1, v1=v1,
        w2=0.1 * jax.random.normal(ks[5], (planes, planes, KSIZE)),
        b2=0.1 * jax.random.normal(ks[6], (planes,)),
        g2=g2, be2=be2, m2=m2, v2=v2,
        w3=0.1 * jax.random.normal(ks[7], (planes, planes, 1)),
        b3=0.1 * jax.random.normal(ks[8], (planes,)),
        g3=g3, be3=be3, m3=m3, v3=v3,
    )


if __name__ == "__main__":
    key = jax.random.PRNGKey(0)
    kx1, kx2, kp = jax.random.split(key, 3)

    B, C = 2, 8          # in_planes == planes (expansion=1, identity skip)
    params = make_params(kp, C, C)

    # case 1: multiple L tiles, L not a multiple of the tile -> exercises the
    # halo exchange between tiles and the end-of-sequence masking.
    L1 = 100
    x1 = jax.random.normal(kx1, (B, C, L1), dtype=jnp.float32)
    out1 = jax.block_until_ready(bottleneck_pallas(x1, params, tile_l=48))
    ref1 = jax.block_until_ready(bottleneck_ref(x1, params))
    assert out1.shape == (B, C, L1)
    assert jnp.allclose(out1, ref1, atol=3e-2, rtol=3e-2), \
        f"case1 max err {jnp.max(jnp.abs(out1 - ref1))}"

    # case 2: single tile (auto tile size).
    L2 = 32
    x2 = jax.random.normal(kx2, (B, C, L2), dtype=jnp.float32)
    out2 = jax.block_until_ready(bottleneck_pallas(x2, params))
    ref2 = jax.block_until_ready(bottleneck_ref(x2, params))
    assert out2.shape == (B, C, L2)
    assert jnp.allclose(out2, ref2, atol=3e-2, rtol=3e-2), \
        f"case2 max err {jnp.max(jnp.abs(out2 - ref2))}"

    print("KERNEL_OK")
</pallas_src>

<mosaic_0001>
module attributes {stable_mosaic.version = 11 : i64} {
  func.func @_bottleneck_kernel(%arg0: i32, %arg1: i32, %arg2: memref<1x48x128xbf16, #tpu.memory_space<vmem>>, %arg3: memref<1x1x16x128xbf16, #tpu.memory_space<vmem>>, %arg4: memref<128x128xbf16, #tpu.memory_space<vmem>>, %arg5: memref<1x128xf32, #tpu.memory_space<vmem>>, %arg6: memref<1x128xf32, #tpu.memory_space<vmem>>, %arg7: memref<1152x128xbf16, #tpu.memory_space<vmem>>, %arg8: memref<1x128xf32, #tpu.memory_space<vmem>>, %arg9: memref<1x128xf32, #tpu.memory_space<vmem>>, %arg10: memref<128x128xbf16, #tpu.memory_space<vmem>>, %arg11: memref<1x128xf32, #tpu.memory_space<vmem>>, %arg12: memref<1x128xf32, #tpu.memory_space<vmem>>, %arg13: memref<1x48x128xbf16, #tpu.memory_space<vmem>>) attributes {dimension_semantics = [#tpu.dimension_semantics<parallel>, #tpu.dimension_semantics<parallel>], iteration_bounds = array<i64: 2, 3>, scalar_prefetch = 0 : i64, scratch_operands = 0 : i64, tpu.core_type = #tpu.core_type<tc>, window_params = [{transform_indices = @transform_0, window_bounds = array<i64: 1, 48, 128>}, {transform_indices = @transform_1, window_bounds = array<i64: 1, 1, 16, 128>}, {pipeline_mode = #tpu.pipeline_mode<synchronous>, transform_indices = @transform_2, window_bounds = array<i64: 128, 128>}, {pipeline_mode = #tpu.pipeline_mode<synchronous>, transform_indices = @transform_3, window_bounds = array<i64: 1, 128>}, {pipeline_mode = #tpu.pipeline_mode<synchronous>, transform_indices = @transform_4, window_bounds = array<i64: 1, 128>}, {pipeline_mode = #tpu.pipeline_mode<synchronous>, transform_indices = @transform_5, window_bounds = array<i64: 1152, 128>}, {pipeline_mode = #tpu.pipeline_mode<synchronous>, transform_indices = @transform_6, window_bounds = array<i64: 1, 128>}, {pipeline_mode = #tpu.pipeline_mode<synchronous>, transform_indices = @transform_7, window_bounds = array<i64: 1, 128>}, {pipeline_mode = #tpu.pipeline_mode<synchronous>, transform_indices = @transform_8, window_bounds = array<i64: 128, 128>}, {pipeline_mode = #tpu.pipeline_mode<synchronous>, transform_indices = @transform_9, window_bounds = array<i64: 1, 128>}, {pipeline_mode = #tpu.pipeline_mode<synchronous>, transform_indices = @transform_10, window_bounds = array<i64: 1, 128>}, {transform_indices = @transform_11, window_bounds = array<i64: 1, 48, 128>}]} {
    %c0 = arith.constant 0 : index
    %c0_0 = arith.constant 0 : index
    %c0_1 = arith.constant 0 : index
    %0 = vector.load %arg2[%c0, %c0_0, %c0_1] : memref<1x48x128xbf16, #tpu.memory_space<vmem>>, vector<1x48x128xbf16>
    %1 = vector.shape_cast %0 : vector<1x48x128xbf16> to vector<48x128xbf16>
    %c0_2 = arith.constant 0 : index
    %c0_3 = arith.constant 0 : index
    %c0_4 = arith.constant 0 : index
    %c0_5 = arith.constant 0 : index
    %2 = vector.load %arg3[%c0_2, %c0_3, %c0_4, %c0_5] : memref<1x1x16x128xbf16, #tpu.memory_space<vmem>>, vector<1x1x16x128xbf16>
    %3 = vector.shape_cast %2 : vector<1x1x16x128xbf16> to vector<16x128xbf16>
    %4 = vector.extract_strided_slice %3 {offsets = [0, 0], sizes = [8, 128], strides = [1, 1]} : vector<16x128xbf16> to vector<8x128xbf16>
    %5 = vector.extract_strided_slice %3 {offsets = [8, 0], sizes = [8, 128], strides = [1, 1]} : vector<16x128xbf16> to vector<8x128xbf16>
    %6 = tpu.concatenate %4, %1, %5 in 0 : vector<8x128xbf16>, vector<48x128xbf16>, vector<8x128xbf16> -> vector<64x128xbf16>
    %c0_6 = arith.constant 0 : index
    %c0_7 = arith.constant 0 : index
    %7 = vector.load %arg4[%c0_6, %c0_7] : memref<128x128xbf16, #tpu.memory_space<vmem>>, vector<128x128xbf16>
    %cst = arith.constant dense<0.000000e+00> : vector<64x128xf32>
    %8 = tpu.matmul %6, %7, %cst {dimension_numbers = #tpu.dot_dimension_numbers<[1], [0], [0], [1], [0, 0, 1, 1], [], []>} : vector<64x128xbf16>, vector<128x128xbf16>, vector<64x128xf32> -> vector<64x128xf32>
    %c0_8 = arith.constant 0 : index
    %c0_9 = arith.constant 0 : index
    %9 = vector.load %arg5[%c0_8, %c0_9] : memref<1x128xf32, #tpu.memory_space<vmem>>, vector<1x128xf32>
    %10 = vector.broadcast %9 : vector<1x128xf32> to vector<64x128xf32>
    %11 = arith.mulf %8, %10 : vector<64x128xf32>
    %c0_10 = arith.constant 0 : index
    %c0_11 = arith.constant 0 : index
    %12 = vector.load %arg6[%c0_10, %c0_11] : memref<1x128xf32, #tpu.memory_space<vmem>>, vector<1x128xf32>
    %13 = vector.broadcast %12 : vector<1x128xf32> to vector<64x128xf32>
    %14 = arith.addf %11, %13 : vector<64x128xf32>
    %cst_12 = arith.constant 0.000000e+00 : f32
    %15 = vector.broadcast %cst_12 : f32 to vector<64x128xf32>
    %16 = arith.maximumf %14, %15 : vector<64x128xf32>
    %17 = tpu.iota {dimensions = array<i32: 0>} : vector<64x1xi32>
    %c48_i32 = arith.constant 48 : i32
    %18 = arith.muli %arg1, %c48_i32 : i32
    %19 = vector.broadcast %18 : i32 to vector<64x1xi32>
    %20 = arith.addi %19, %17 : vector<64x1xi32>
    %c8_i32 = arith.constant 8 : i32
    %21 = vector.broadcast %c8_i32 : i32 to vector<64x1xi32>
    %22 = arith.subi %20, %21 : vector<64x1xi32>
    %c0_i32 = arith.constant 0 : i32
    %23 = vector.broadcast %c0_i32 : i32 to vector<64x1xi32>
    %24 = arith.cmpi sge, %22, %23 : vector<64x1xi32>
    %c100_i32 = arith.constant 100 : i32
    %25 = vector.broadcast %c100_i32 : i32 to vector<64x1xi32>
    %26 = arith.cmpi slt, %22, %25 : vector<64x1xi32>
    %27 = arith.andi %24, %26 : vector<64x1xi1>
    %cst_13 = arith.constant 0.000000e+00 : f32
    %28 = vector.shape_cast %27 : vector<64x1xi1> to vector<64x1xi1>
    %29 = vector.broadcast %28 : vector<64x1xi1> to vector<64x128xi1>
    %30 = vector.broadcast %cst_13 : f32 to vector<64x128xf32>
    %31 = arith.select %29, %16, %30 : vector<64x128xi1>, vector<64x128xf32>
    %32 = arith.truncf %31 : vector<64x128xf32> to vector<64x128xbf16>
    %33 = vector.extract_strided_slice %32 {offsets = [4, 0], sizes = [48, 128], strides = [1, 1]} : vector<64x128xbf16> to vector<48x128xbf16>
    %34 = vector.extract_strided_slice %32 {offsets = [5, 0], sizes = [48, 128], strides = [1, 1]} : vector<64x128xbf16> to vector<48x128xbf16>
    %35 = vector.extract_strided_slice %32 {offsets = [6, 0], sizes = [48, 128], strides = [1, 1]} : vector<64x128xbf16> to vector<48x128xbf16>
    %36 = vector.extract_strided_slice %32 {offsets = [7, 0], sizes = [48, 128], strides = [1, 1]} : vector<64x128xbf16> to vector<48x128xbf16>
    %37 = vector.extract_strided_slice %32 {offsets = [8, 0], sizes = [48, 128], strides = [1, 1]} : vector<64x128xbf16> to vector<48x128xbf16>
    %38 = vector.extract_strided_slice %32 {offsets = [9, 0], sizes = [48, 128], strides = [1, 1]} : vector<64x128xbf16> to vector<48x128xbf16>
    %39 = vector.extract_strided_slice %32 {offsets = [10, 0], sizes = [48, 128], strides = [1, 1]} : vector<64x128xbf16> to vector<48x128xbf16>
    %40 = vector.extract_strided_slice %32 {offsets = [11, 0], sizes = [48, 128], strides = [1, 1]} : vector<64x128xbf16> to vector<48x128xbf16>
    %41 = vector.extract_strided_slice %32 {offsets = [12, 0], sizes = [48, 128], strides = [1, 1]} : vector<64x128xbf16> to vector<48x128xbf16>
    %42 = tpu.concatenate %33, %34, %35, %36, %37, %38, %39, %40, %41 in 1 : vector<48x128xbf16>, vector<48x128xbf16>, vector<48x128xbf16>, vector<48x128xbf16>, vector<48x128xbf16>, vector<48x128xbf16>, vector<48x128xbf16>, vector<48x128xbf16>, vector<48x128xbf16> -> vector<48x1152xbf16>
    %c0_14 = arith.constant 0 : index
    %c0_15 = arith.constant 0 : index
    %43 = vector.load %arg7[%c0_14, %c0_15] : memref<1152x128xbf16, #tpu.memory_space<vmem>>, vector<1152x128xbf16>
    %cst_16 = arith.constant dense<0.000000e+00> : vector<48x128xf32>
    %44 = tpu.matmul %42, %43, %cst_16 {dimension_numbers = #tpu.dot_dimension_numbers<[1], [0], [0], [1], [0, 0, 1, 1], [], []>} : vector<48x1152xbf16>, vector<1152x128xbf16>, vector<48x128xf32> -> vector<48x128xf32>
    %c0_17 = arith.constant 0 : index
    %c0_18 = arith.constant 0 : index
    %45 = vector.load %arg8[%c0_17, %c0_18] : memref<1x128xf32, #tpu.memory_space<vmem>>, vector<1x128xf32>
    %46 = vector.broadcast %45 : vector<1x128xf32> to vector<48x128xf32>
    %47 = arith.mulf %44, %46 : vector<48x128xf32>
    %c0_19 = arith.constant 0 : index
    %c0_20 = arith.constant 0 : index
    %48 = vector.load %arg9[%c0_19, %c0_20] : memref<1x128xf32, #tpu.memory_space<vmem>>, vector<1x128xf32>
    %49 = vector.broadcast %48 : vector<1x128xf32> to vector<48x128xf32>
    %50 = arith.addf %47, %49 : vector<48x128xf32>
    %cst_21 = arith.constant 0.000000e+00 : f32
    %51 = vector.broadcast %cst_21 : f32 to vector<48x128xf32>
    %52 = arith.maximumf %50, %51 : vector<48x128xf32>
    %53 = arith.truncf %52 : vector<48x128xf32> to vector<48x128xbf16>
    %c0_22 = arith.constant 0 : index
    %c0_23 = arith.constant 0 : index
    %54 = vector.load %arg10[%c0_22, %c0_23] : memref<128x128xbf16, #tpu.memory_space<vmem>>, vector<128x128xbf16>
    %cst_24 = arith.constant dense<0.000000e+00> : vector<48x128xf32>
    %55 = tpu.matmul %53, %54, %cst_24 {dimension_numbers = #tpu.dot_dimension_numbers<[1], [0], [0], [1], [0, 0, 1, 1], [], []>} : vector<48x128xbf16>, vector<128x128xbf16>, vector<48x128xf32> -> vector<48x128xf32>
    %c0_25 = arith.constant 0 : index
    %c0_26 = arith.constant 0 : index
    %56 = vector.load %arg11[%c0_25, %c0_26] : memref<1x128xf32, #tpu.memory_space<vmem>>, vector<1x128xf32>
    %57 = vector.broadcast %56 : vector<1x128xf32> to vector<48x128xf32>
    %58 = arith.mulf %55, %57 : vector<48x128xf32>
    %c0_27 = arith.constant 0 : index
    %c0_28 = arith.constant 0 : index
    %59 = vector.load %arg12[%c0_27, %c0_28] : memref<1x128xf32, #tpu.memory_space<vmem>>, vector<1x128xf32>
    %60 = vector.broadcast %59 : vector<1x128xf32> to vector<48x128xf32>
    %61 = arith.addf %58, %60 : vector<48x128xf32>
    %62 = arith.extf %1 : vector<48x128xbf16> to vector<48x128xf32>
    %63 = arith.addf %61, %62 : vector<48x128xf32>
    %cst_29 = arith.constant 0.000000e+00 : f32
    %64 = vector.broadcast %cst_29 : f32 to vector<48x128xf32>
    %65 = arith.maximumf %63, %64 : vector<48x128xf32>
    %66 = arith.truncf %65 : vector<48x128xf32> to vector<48x128xbf16>
    %c0_30 = arith.constant 0 : index
    %c0_31 = arith.constant 0 : index
    %c0_32 = arith.constant 0 : index
    %67 = vector.load %arg13[%c0_30, %c0_31, %c0_32] : memref<1x48x128xbf16, #tpu.memory_space<vmem>>, vector<1x48x128xbf16>
    %68 = vector.shape_cast %67 : vector<1x48x128xbf16> to vector<48x128xbf16>
    %69 = vector.shape_cast %66 : vector<48x128xbf16> to vector<1x48x128xbf16>
    tpu.vector_store %arg13[%c0_30, %c0_31, %c0_32], %69 {strides = array<i32>} : memref<1x48x128xbf16, #tpu.memory_space<vmem>>, vector<1x48x128xbf16>,
    return
  }
  func.func @transform_0(%arg0: i32, %arg1: i32) -> (i32, i32, i32) {
    %c0_i32 = arith.constant 0 : i32
    %c0_i32_0 = arith.constant 0 : i32
    return %arg0, %arg1, %c0_i32 : i32, i32, i32
  }
  func.func @transform_1(%arg0: i32, %arg1: i32) -> (i32, i32, i32, i32) {
    %c0_i32 = arith.constant 0 : i32
    %c0_i32_0 = arith.constant 0 : i32
    %c0_i32_1 = arith.constant 0 : i32
    return %arg0, %arg1, %c0_i32, %c0_i32_0 : i32, i32, i32, i32
  }
  func.func @transform_2(%arg0: i32, %arg1: i32) -> (i32, i32) {
    %c0_i32 = arith.constant 0 : i32
    %c0_i32_0 = arith.constant 0 : i32
    %c0_i32_1 = arith.constant 0 : i32
    return %c0_i32, %c0_i32_0 : i32, i32
  }
  func.func @transform_3(%arg0: i32, %arg1: i32) -> (i32, i32) {
    %c0_i32 = arith.constant 0 : i32
    %c0_i32_0 = arith.constant 0 : i32
    %c0_i32_1 = arith.constant 0 : i32
    return %c0_i32, %c0_i32_0 : i32, i32
  }
  func.func @transform_4(%arg0: i32, %arg1: i32) -> (i32, i32) {
    %c0_i32 = arith.constant 0 : i32
    %c0_i32_0 = arith.constant 0 : i32
    %c0_i32_1 = arith.constant 0 : i32
    return %c0_i32, %c0_i32_0 : i32, i32
  }
  func.func @transform_5(%arg0: i32, %arg1: i32) -> (i32, i32) {
    %c0_i32 = arith.constant 0 : i32
    %c0_i32_0 = arith.constant 0 : i32
    %c0_i32_1 = arith.constant 0 : i32
    return %c0_i32, %c0_i32_0 : i32, i32
  }
  func.func @transform_6(%arg0: i32, %arg1: i32) -> (i32, i32) {
    %c0_i32 = arith.constant 0 : i32
    %c0_i32_0 = arith.constant 0 : i32
    %c0_i32_1 = arith.constant 0 : i32
    return %c0_i32, %c0_i32_0 : i32, i32
  }
  func.func @transform_7(%arg0: i32, %arg1: i32) -> (i32, i32) {
    %c0_i32 = arith.constant 0 : i32
    %c0_i32_0 = arith.constant 0 : i32
    %c0_i32_1 = arith.constant 0 : i32
    return %c0_i32, %c0_i32_0 : i32, i32
  }
  func.func @transform_8(%arg0: i32, %arg1: i32) -> (i32, i32) {
    %c0_i32 = arith.constant 0 : i32
    %c0_i32_0 = arith.constant 0 : i32
    %c0_i32_1 = arith.constant 0 : i32
    return %c0_i32, %c0_i32_0 : i32, i32
  }
  func.func @transform_9(%arg0: i32, %arg1: i32) -> (i32, i32) {
    %c0_i32 = arith.constant 0 : i32
    %c0_i32_0 = arith.constant 0 : i32
    %c0_i32_1 = arith.constant 0 : i32
    return %c0_i32, %c0_i32_0 : i32, i32
  }
  func.func @transform_10(%arg0: i32, %arg1: i32) -> (i32, i32) {
    %c0_i32 = arith.constant 0 : i32
    %c0_i32_0 = arith.constant 0 : i32
    %c0_i32_1 = arith.constant 0 : i32
    return %c0_i32, %c0_i32_0 : i32, i32
  }
  func.func @transform_11(%arg0: i32, %arg1: i32) -> (i32, i32, i32) {
    %c0_i32 = arith.constant 0 : i32
    %c0_i32_0 = arith.constant 0 : i32
    return %arg0, %arg1, %c0_i32 : i32, i32, i32
  }
}

module attributes {stable_mosaic.version = 11 : i64} {
  func.func @_bottleneck_kernel(%arg0: i32, %arg1: i32, %arg2: memref<1x48x128xbf16, #tpu.memory_space<vmem>>, %arg3: memref<1x1x16x128xbf16, #tpu.memory_space<vmem>>, %arg4: memref<128x128xbf16, #tpu.memory_space<vmem>>, %arg5: memref<1x128xf32, #tpu.memory_space<vmem>>, %arg6: memref<1x128xf32, #tpu.memory_space<vmem>>, %arg7: memref<1152x128xbf16, #tpu.memory_space<vmem>>, %arg8: memref<1x128xf32, #tpu.memory_space<vmem>>, %arg9: memref<1x128xf32, #tpu.memory_space<vmem>>, %arg10: memref<128x128xbf16, #tpu.memory_space<vmem>>, %arg11: memref<1x128xf32, #tpu.memory_space<vmem>>, %arg12: memref<1x128xf32, #tpu.memory_space<vmem>>, %arg13: memref<1x48x128xbf16, #tpu.memory_space<vmem>>) attributes {dimension_semantics = [#tpu.dimension_semantics<parallel>, #tpu.dimension_semantics<parallel>], iteration_bounds = array<i64: 2, 3>, scalar_prefetch = 0 : i64, scratch_operands = 0 : i64, tpu.core_type = #tpu.core_type<tc>, window_params = [{transform_indices = @transform_0, window_bounds = array<i64: 1, 48, 128>}, {transform_indices = @transform_1, window_bounds = array<i64: 1, 1, 16, 128>}, {pipeline_mode = #tpu.pipeline_mode<synchronous>, transform_indices = @transform_2, window_bounds = array<i64: 128, 128>}, {pipeline_mode = #tpu.pipeline_mode<synchronous>, transform_indices = @transform_3, window_bounds = array<i64: 1, 128>}, {pipeline_mode = #tpu.pipeline_mode<synchronous>, transform_indices = @transform_4, window_bounds = array<i64: 1, 128>}, {pipeline_mode = #tpu.pipeline_mode<synchronous>, transform_indices = @transform_5, window_bounds = array<i64: 1152, 128>}, {pipeline_mode = #tpu.pipeline_mode<synchronous>, transform_indices = @transform_6, window_bounds = array<i64: 1, 128>}, {pipeline_mode = #tpu.pipeline_mode<synchronous>, transform_indices = @transform_7, window_bounds = array<i64: 1, 128>}, {pipeline_mode = #tpu.pipeline_mode<synchronous>, transform_indices = @transform_8, window_bounds = array<i64: 128, 128>}, {pipeline_mode = #tpu.pipeline_mode<synchronous>, transform_indices = @transform_9, window_bounds = array<i64: 1, 128>}, {pipeline_mode = #tpu.pipeline_mode<synchronous>, transform_indices = @transform_10, window_bounds = array<i64: 1, 128>}, {transform_indices = @transform_11, window_bounds = array<i64: 1, 48, 128>}]} {
    %c0 = arith.constant 0 : index
    %c0_0 = arith.constant 0 : index
    %c0_1 = arith.constant 0 : index
    %0 = vector.load %arg2[%c0, %c0_0, %c0_1] : memref<1x48x128xbf16, #tpu.memory_space<vmem>>, vector<1x48x128xbf16>
    %1 = vector.shape_cast %0 : vector<1x48x128xbf16> to vector<48x128xbf16>
    %c0_2 = arith.constant 0 : index
    %c0_3 = arith.constant 0 : index
    %c0_4 = arith.constant 0 : index
    %c0_5 = arith.constant 0 : index
    %2 = vector.load %arg3[%c0_2, %c0_3, %c0_4, %c0_5] : memref<1x1x16x128xbf16, #tpu.memory_space<vmem>>, vector<1x1x16x128xbf16>
    %3 = vector.shape_cast %2 : vector<1x1x16x128xbf16> to vector<16x128xbf16>
    %4 = vector.extract_strided_slice %3 {offsets = [0, 0], sizes = [8, 128], strides = [1, 1]} : vector<16x128xbf16> to vector<8x128xbf16>
    %5 = vector.extract_strided_slice %3 {offsets = [8, 0], sizes = [8, 128], strides = [1, 1]} : vector<16x128xbf16> to vector<8x128xbf16>
    %6 = tpu.concatenate %4, %1, %5 in 0 : vector<8x128xbf16>, vector<48x128xbf16>, vector<8x128xbf16> -> vector<64x128xbf16>
    %c0_6 = arith.constant 0 : index
    %c0_7 = arith.constant 0 : index
    %7 = vector.load %arg4[%c0_6, %c0_7] : memref<128x128xbf16, #tpu.memory_space<vmem>>, vector<128x128xbf16>
    %cst = arith.constant dense<0.000000e+00> : vector<64x128xf32>
    %8 = tpu.matmul %6, %7, %cst {dimension_numbers = #tpu.dot_dimension_numbers<[1], [0], [0], [1], [0, 0, 1, 1], [], []>} : vector<64x128xbf16>, vector<128x128xbf16>, vector<64x128xf32> -> vector<64x128xf32>
    %c0_8 = arith.constant 0 : index
    %c0_9 = arith.constant 0 : index
    %9 = vector.load %arg5[%c0_8, %c0_9] : memref<1x128xf32, #tpu.memory_space<vmem>>, vector<1x128xf32>
    %10 = vector.broadcast %9 : vector<1x128xf32> to vector<64x128xf32>
    %11 = arith.mulf %8, %10 : vector<64x128xf32>
    %c0_10 = arith.constant 0 : index
    %c0_11 = arith.constant 0 : index
    %12 = vector.load %arg6[%c0_10, %c0_11] : memref<1x128xf32, #tpu.memory_space<vmem>>, vector<1x128xf32>
    %13 = vector.broadcast %12 : vector<1x128xf32> to vector<64x128xf32>
    %14 = arith.addf %11, %13 : vector<64x128xf32>
    %cst_12 = arith.constant 0.000000e+00 : f32
    %15 = vector.broadcast %cst_12 : f32 to vector<64x128xf32>
    %16 = arith.maximumf %14, %15 : vector<64x128xf32>
    %17 = tpu.iota {dimensions = array<i32: 0>} : vector<64x1xi32>
    %c48_i32 = arith.constant 48 : i32
    %18 = arith.muli %arg1, %c48_i32 : i32
    %19 = vector.broadcast %18 : i32 to vector<64x1xi32>
    %20 = arith.addi %19, %17 : vector<64x1xi32>
    %c8_i32 = arith.constant 8 : i32
    %21 = vector.broadcast %c8_i32 : i32 to vector<64x1xi32>
    %22 = arith.subi %20, %21 : vector<64x1xi32>
    %c0_i32 = arith.constant 0 : i32
    %23 = vector.broadcast %c0_i32 : i32 to vector<64x1xi32>
    %24 = arith.cmpi sge, %22, %23 : vector<64x1xi32>
    %c100_i32 = arith.constant 100 : i32
    %25 = vector.broadcast %c100_i32 : i32 to vector<64x1xi32>
    %26 = arith.cmpi slt, %22, %25 : vector<64x1xi32>
    %27 = arith.andi %24, %26 : vector<64x1xi1>
    %cst_13 = arith.constant 0.000000e+00 : f32
    %28 = vector.shape_cast %27 : vector<64x1xi1> to vector<64x1xi1>
    %29 = vector.broadcast %28 : vector<64x1xi1> to vector<64x128xi1>
    %30 = vector.broadcast %cst_13 : f32 to vector<64x128xf32>
    %31 = arith.select %29, %16, %30 : vector<64x128xi1>, vector<64x128xf32>
    %32 = arith.truncf %31 : vector<64x128xf32> to vector<64x128xbf16>
    %33 = vector.extract_strided_slice %32 {offsets = [4, 0], sizes = [48, 128], strides = [1, 1]} : vector<64x128xbf16> to vector<48x128xbf16>
    %34 = vector.extract_strided_slice %32 {offsets = [5, 0], sizes = [48, 128], strides = [1, 1]} : vector<64x128xbf16> to vector<48x128xbf16>
    %35 = vector.extract_strided_slice %32 {offsets = [6, 0], sizes = [48, 128], strides = [1, 1]} : vector<64x128xbf16> to vector<48x128xbf16>
    %36 = vector.extract_strided_slice %32 {offsets = [7, 0], sizes = [48, 128], strides = [1, 1]} : vector<64x128xbf16> to vector<48x128xbf16>
    %37 = vector.extract_strided_slice %32 {offsets = [8, 0], sizes = [48, 128], strides = [1, 1]} : vector<64x128xbf16> to vector<48x128xbf16>
    %38 = vector.extract_strided_slice %32 {offsets = [9, 0], sizes = [48, 128], strides = [1, 1]} : vector<64x128xbf16> to vector<48x128xbf16>
    %39 = vector.extract_strided_slice %32 {offsets = [10, 0], sizes = [48, 128], strides = [1, 1]} : vector<64x128xbf16> to vector<48x128xbf16>
    %40 = vector.extract_strided_slice %32 {offsets = [11, 0], sizes = [48, 128], strides = [1, 1]} : vector<64x128xbf16> to vector<48x128xbf16>
    %41 = vector.extract_strided_slice %32 {offsets = [12, 0], sizes = [48, 128], strides = [1, 1]} : vector<64x128xbf16> to vector<48x128xbf16>
    %42 = tpu.concatenate %33, %34, %35, %36, %37, %38, %39, %40, %41 in 1 : vector<48x128xbf16>, vector<48x128xbf16>, vector<48x128xbf16>, vector<48x128xbf16>, vector<48x128xbf16>, vector<48x128xbf16>, vector<48x128xbf16>, vector<48x128xbf16>, vector<48x128xbf16> -> vector<48x1152xbf16>
    %c0_14 = arith.constant 0 : index
    %c0_15 = arith.constant 0 : index
    %43 = vector.load %arg7[%c0_14, %c0_15] : memref<1152x128xbf16, #tpu.memory_space<vmem>>, vector<1152x128xbf16>
    %cst_16 = arith.constant dense<0.000000e+00> : vector<48x128xf32>
    %44 = tpu.matmul %42, %43, %cst_16 {dimension_numbers = #tpu.dot_dimension_numbers<[1], [0], [0], [1], [0, 0, 1, 1], [], []>} : vector<48x1152xbf16>, vector<1152x128xbf16>, vector<48x128xf32> -> vector<48x128xf32>
    %c0_17 = arith.constant 0 : index
    %c0_18 = arith.constant 0 : index
    %45 = vector.load %arg8[%c0_17, %c0_18] : memref<1x128xf32, #tpu.memory_space<vmem>>, vector<1x128xf32>
    %46 = vector.broadcast %45 : vector<1x128xf32> to vector<48x128xf32>
    %47 = arith.mulf %44, %46 : vector<48x128xf32>
    %c0_19 = arith.constant 0 : index
    %c0_20 = arith.constant 0 : index
    %48 = vector.load %arg9[%c0_19, %c0_20] : memref<1x128xf32, #tpu.memory_space<vmem>>, vector<1x128xf32>
    %49 = vector.broadcast %48 : vector<1x128xf32> to vector<48x128xf32>
    %50 = arith.addf %47, %49 : vector<48x128xf32>
    %cst_21 = arith.constant 0.000000e+00 : f32
    %51 = vector.broadcast %cst_21 : f32 to vector<48x128xf32>
    %52 = arith.maximumf %50, %51 : vector<48x128xf32>
    %53 = arith.truncf %52 : vector<48x128xf32> to vector<48x128xbf16>
    %c0_22 = arith.constant 0 : index
    %c0_23 = arith.constant 0 : index
    %54 = vector.load %arg10[%c0_22, %c0_23] : memref<128x128xbf16, #tpu.memory_space<vmem>>, vector<128x128xbf16>
    %cst_24 = arith.constant dense<0.000000e+00> : vector<48x128xf32>
    %55 = tpu.matmul %53, %54, %cst_24 {dimension_numbers = #tpu.dot_dimension_numbers<[1], [0], [0], [1], [0, 0, 1, 1], [], []>} : vector<48x128xbf16>, vector<128x128xbf16>, vector<48x128xf32> -> vector<48x128xf32>
    %c0_25 = arith.constant 0 : index
    %c0_26 = arith.constant 0 : index
    %56 = vector.load %arg11[%c0_25, %c0_26] : memref<1x128xf32, #tpu.memory_space<vmem>>, vector<1x128xf32>
    %57 = vector.broadcast %56 : vector<1x128xf32> to vector<48x128xf32>
    %58 = arith.mulf %55, %57 : vector<48x128xf32>
    %c0_27 = arith.constant 0 : index
    %c0_28 = arith.constant 0 : index
    %59 = vector.load %arg12[%c0_27, %c0_28] : memref<1x128xf32, #tpu.memory_space<vmem>>, vector<1x128xf32>
    %60 = vector.broadcast %59 : vector<1x128xf32> to vector<48x128xf32>
    %61 = arith.addf %58, %60 : vector<48x128xf32>
    %62 = arith.extf %1 : vector<48x128xbf16> to vector<48x128xf32>
    %63 = arith.addf %61, %62 : vector<48x128xf32>
    %cst_29 = arith.constant 0.000000e+00 : f32
    %64 = vector.broadcast %cst_29 : f32 to vector<48x128xf32>
    %65 = arith.maximumf %63, %64 : vector<48x128xf32>
    %66 = arith.truncf %65 : vector<48x128xf32> to vector<48x128xbf16>
    %c0_30 = arith.constant 0 : index
    %c0_31 = arith.constant 0 : index
    %c0_32 = arith.constant 0 : index
    %67 = vector.load %arg13[%c0_30, %c0_31, %c0_32] : memref<1x48x128xbf16, #tpu.memory_space<vmem>>, vector<1x48x128xbf16>
    %68 = vector.shape_cast %67 : vector<1x48x128xbf16> to vector<48x128xbf16>
    %69 = vector.shape_cast %66 : vector<48x128xbf16> to vector<1x48x128xbf16>
    tpu.vector_store %arg13[%c0_30, %c0_31, %c0_32], %69 {strides = array<i32>} : memref<1x48x128xbf16, #tpu.memory_space<vmem>>, vector<1x48x128xbf16>,
    return
  }
  func.func @transform_0(%arg0: i32, %arg1: i32) -> (i32, i32, i32) {
    %c0_i32 = arith.constant 0 : i32
    %c0_i32_0 = arith.constant 0 : i32
    return %arg0, %arg1, %c0_i32 : i32, i32, i32
  }
  func.func @transform_1(%arg0: i32, %arg1: i32) -> (i32, i32, i32, i32) {
    %c0_i32 = arith.constant 0 : i32
    %c0_i32_0 = arith.constant 0 : i32
    %c0_i32_1 = arith.constant 0 : i32
    return %arg0, %arg1, %c0_i32, %c0_i32_0 : i32, i32, i32, i32
  }
  func.func @transform_2(%arg0: i32, %arg1: i32) -> (i32, i32) {
    %c0_i32 = arith.constant 0 : i32
    %c0_i32_0 = arith.constant 0 : i32
    %c0_i32_1 = arith.constant 0 : i32
    return %c0_i32, %c0_i32_0 : i32, i32
  }
  func.func @transform_3(%arg0: i32, %arg1: i32) -> (i32, i32) {
    %c0_i32 = arith.constant 0 : i32
    %c0_i32_0 = arith.constant 0 : i32
    %c0_i32_1 = arith.constant 0 : i32
    return %c0_i32, %c0_i32_0 : i32, i32
  }
  func.func @transform_4(%arg0: i32, %arg1: i32) -> (i32, i32) {
    %c0_i32 = arith.constant 0 : i32
    %c0_i32_0 = arith.constant 0 : i32
    %c0_i32_1 = arith.constant 0 : i32
    return %c0_i32, %c0_i32_0 : i32, i32
  }
  func.func @transform_5(%arg0: i32, %arg1: i32) -> (i32, i32) {
    %c0_i32 = arith.constant 0 : i32
    %c0_i32_0 = arith.constant 0 : i32
    %c0_i32_1 = arith.constant 0 : i32
    return %c0_i32, %c0_i32_0 : i32, i32
  }
  func.func @transform_6(%arg0: i32, %arg1: i32) -> (i32, i32) {
    %c0_i32 = arith.constant 0 : i32
    %c0_i32_0 = arith.constant 0 : i32
    %c0_i32_1 = arith.constant 0 : i32
    return %c0_i32, %c0_i32_0 : i32, i32
  }
  func.func @transform_7(%arg0: i32, %arg1: i32) -> (i32, i32) {
    %c0_i32 = arith.constant 0 : i32
    %c0_i32_0 = arith.constant 0 : i32
    %c0_i32_1 = arith.constant 0 : i32
    return %c0_i32, %c0_i32_0 : i32, i32
  }
  func.func @transform_8(%arg0: i32, %arg1: i32) -> (i32, i32) {
    %c0_i32 = arith.constant 0 : i32
    %c0_i32_0 = arith.constant 0 : i32
    %c0_i32_1 = arith.constant 0 : i32
    return %c0_i32, %c0_i32_0 : i32, i32
  }
  func.func @transform_9(%arg0: i32, %arg1: i32) -> (i32, i32) {
    %c0_i32 = arith.constant 0 : i32
    %c0_i32_0 = arith.constant 0 : i32
    %c0_i32_1 = arith.constant 0 : i32
    return %c0_i32, %c0_i32_0 : i32, i32
  }
  func.func @transform_10(%arg0: i32, %arg1: i32) -> (i32, i32) {
    %c0_i32 = arith.constant 0 : i32
    %c0_i32_0 = arith.constant 0 : i32
    %c0_i32_1 = arith.constant 0 : i32
    return %c0_i32, %c0_i32_0 : i32, i32
  }
  func.func @transform_11(%arg0: i32, %arg1: i32) -> (i32, i32, i32) {
    %c0_i32 = arith.constant 0 : i32
    %c0_i32_0 = arith.constant 0 : i32
    return %arg0, %arg1, %c0_i32 : i32, i32, i32
  }
}

</mosaic_0001>

<llo_original>
// kernel: tpu_custom_call.1
$region0: #{tpu_custom_call.1}
  #allocation0 [shape = 'u32[]', space=smem, size = 0x4, offset = 0x4, fixed_abs, tag = 'smem constant byte address 0x4 - core index']
  #allocation1 [shape = 'u32[72,128]{1,0:T(1,128)}', space=vmem, size = 0x9000, scoped, tag = 'internal scratch']
  %s0 = inlined_call_operand.hbm [shape: bf16[2,144,128], index: 0, kind: input, shape index: {}]
  %s1 = inlined_call_operand.hbm [shape: bf16[2,3,16,128], index: 1, kind: input, shape index: {}]
  %s2 = inlined_call_operand.hbm [shape: bf16[128,128], index: 2, kind: input, shape index: {}]
  %s3 = inlined_call_operand.vmem [shape: f32[1,128], index: 3, kind: input, shape index: {}]
  %s4 = inlined_call_operand.vmem [shape: f32[1,128], index: 4, kind: input, shape index: {}]
  %s5 = inlined_call_operand.hbm [shape: bf16[1152,128], index: 5, kind: input, shape index: {}]
  %s6 = inlined_call_operand.vmem [shape: f32[1,128], index: 6, kind: input, shape index: {}]
  %s7 = inlined_call_operand.vmem [shape: f32[1,128], index: 7, kind: input, shape index: {}]
  %s8 = inlined_call_operand.hbm [shape: bf16[128,128], index: 8, kind: input, shape index: {}]
  %s9 = inlined_call_operand.vmem [shape: f32[1,128], index: 9, kind: input, shape index: {}]
  %s10 = inlined_call_operand.vmem [shape: f32[1,128], index: 10, kind: input, shape index: {}]
  %s11 = inlined_call_operand.hbm [shape: bf16[2,144,128], index: 11, kind: output, shape index: {}]
  %s12 = sld [smem:[#allocation0]]
  $region97: #{tpu_custom_call.1} parent=0
    _
  %s14 = ssub.s32 1, %s12
  %s15 = scalar_select 0, %s14, %s12
  $region1: #{tpu_custom_call.1} parent=0
    #allocation2 [shape = 'u8[24576]{0}', space=vmem, size = 0x6000, scoped, tag = 'input window, operand 0']
    #allocation3 [shape = 's32[2]{0}', space=sflag, size = 0x8, scoped, tag = 'scoped memory for tpu_custom_call.1']
    #allocation4 [shape = 's32[2]{0}', space=sflag, size = 0x8, scoped, tag = 'scoped memory for tpu_custom_call.1']
    #allocation5 [shape = 'u8[8192]{0}', space=vmem, size = 0x2000, scoped, tag = 'input window, operand 1']
    #allocation6 [shape = 's32[2]{0}', space=sflag, size = 0x8, scoped, tag = 'scoped memory for tpu_custom_call.1']
    #allocation7 [shape = 'u8[32768]{0}', space=vmem, size = 0x8000, scoped, tag = 'input window, operand 2, single buffered']
    #allocation8 [shape = 'u8[294912]{0}', space=vmem, size = 0x48000, scoped, tag = 'input window, operand 5, single buffered']
    #allocation9 [shape = 's32[1]{0}', space=sflag, size = 0x4, scoped, tag = 'scoped memory for tpu_custom_call.1']
    #allocation10 [shape = 'u8[32768]{0}', space=vmem, size = 0x8000, scoped, tag = 'input window, operand 8, single buffered']
    #allocation11 [shape = 'u8[24576]{0}', space=vmem, size = 0x6000, scoped, tag = 'output window, operand 0']
    %16 = vsyncpa [#allocation3], 0
    %s17 = scalar_lea.sflag [#allocation3], 1
    %18 = vsyncpa %s17, 0
    %19 = vsyncpa [#allocation6], 0
    %s20 = scalar_lea.sflag [#allocation6], 1
    %21 = vsyncpa %s20, 0
    %22 = vsyncpa [#allocation9], 0
    %23 = vsyncpa [#allocation4], 0
    %s24 = scalar_lea.sflag [#allocation4], 1
    %25 = vsyncpa %s24, 0
    loop: start=0, step=1, limit=8
    $region2: #{tpu_custom_call.1} parent=1 // loop_pre_header
      _
    $region3: #{tpu_custom_call.1} parent=1 // loop_header
      %s27 = sphi 0, %s31
      %p28 = scmp.ge.s32.totalorder %s27, 8
      %s34 = sphi 0, %s46
      %s35 = sphi 0, %s42
      %s36 = sphi 0, %s34
      %s37 = sphi 0, %s35
      %s38 = sphi 0, %s36
      %s39 = sphi 0, %s37
      %s51 = sphi 0, %s53
      %s54 = sphi 0, %s51
      %s55 = sphi 0, %s54
      %s71 = sphi 0, %s55
      %s79 = sphi 0, %s81
      %s82 = sphi 0, %s79
      %s83 = sphi 0, %s82
      %s99 = sphi 0, %s83
      %s103 = sphi 0, %s103
      %s105 = sphi 0, %s103
      %s106 = sphi 0, %s105
      %s120 = sphi 0, %s106
      %s124 = sphi 0, %s124
      %s126 = sphi 0, %s124
      %s127 = sphi 0, %s126
      %s141 = sphi 0, %s127
      %s145 = sphi 0, %s145
      %s147 = sphi 0, %s145
      %s148 = sphi 0, %s147
      %s162 = sphi 0, %s148
      %s166 = sphi 0, %s166
      %s168 = sphi 0, %s166
      %s169 = sphi 0, %s168
      %s183 = sphi 0, %s169
      %s187 = sphi 0, %s187
      %s189 = sphi 0, %s187
      %s190 = sphi 0, %s189
      %s204 = sphi 0, %s190
      %s208 = sphi 0, %s208
      %s210 = sphi 0, %s208
      %s211 = sphi 0, %s210
      %s225 = sphi 0, %s211
      %s229 = sphi 0, %s229
      %s231 = sphi 0, %s229
      %s232 = sphi 0, %s231
      %s246 = sphi 0, %s232
      %s250 = sphi 0, %s250
      %s252 = sphi 0, %s250
      %s253 = sphi 0, %s252
      %s267 = sphi 0, %s253
      %s271 = sphi 0, %s271
      %s273 = sphi 0, %s271
      %s274 = sphi 0, %s273
      %s288 = sphi 0, %s274
      %s296 = sphi 0, %s298
      %s299 = sphi 0, %s296
      %s300 = sphi 0, %s299
      %s316 = sphi 0, %s300
    $region4: #{tpu_custom_call.1} parent=1 // loop_header_branch
      %30 = sbr.rel (%p28) target = $region8
    $region5: #{tpu_custom_call.1} parent=1 // loop_body
      %s32 = ssub.s32 %s27, 1
      %s33 = ssub.s32 %s27, 2
      %s40 = sadd.s32 1, %s35
      %p41 = scmp.ge.s32.totalorder %s40, 3
      %s42 = scalar_select %p41, 0, %s40
      %s43 = sadd.s32 1, %s34
      %s44 = scalar_select %p41, %s43, %s34
      %p45 = scmp.ge.s32.totalorder %s44, 2
      %s46 = scalar_select %p45, 0, %s44
      %s47 = ssub.s32 %s34, %s46
      %s48 = ssub.s32 %s35, %s42
      %s49 = sor.u32 %s47, %s48
      %p50 = scmp.eq.s32.totalorder %s49, 0
      %s52 = sadd.s32 %s51, 1
      %s53 = scalar_select %p50, %s51, %s52
      %p56 = pneg %p50
      %p57 = scmp.eq.s32.totalorder %s27, 5
      %p58 = por %p56, %p57
      %p59 = scmp.ne.s32.totalorder %s51, %s54
      %p60 = scmp.eq.s32.totalorder %s27, 0
      %p61 = por %p59, %p60
      %p62 = scmp.ne.s32.totalorder %s51, %s54
      %p63 = scmp.eq.s32.totalorder %s32, 5
      %p64 = por %p62, %p63
      %p65 = scmp.ne.s32.totalorder %s54, %s55
      %p66 = scmp.eq.s32.totalorder %s32, 0
      %p67 = por %p65, %p66
      %p68 = scmp.ne.s32.totalorder %s54, %s55
      %p69 = scmp.eq.s32.totalorder %s33, 5
      %p70 = por %p68, %p69
      %p72 = scmp.ne.s32.totalorder %s55, %s71
      %p73 = scmp.eq.s32.totalorder %s33, 0
      %p74 = por %p72, %p73
      %s75 = ssub.s32 %s34, %s46
      %s76 = ssub.s32 %s35, %s42
      %s77 = sor.u32 %s75, %s76
      %p78 = scmp.eq.s32.totalorder %s77, 0
      %s80 = sadd.s32 %s79, 1
      %s81 = scalar_select %p78, %s79, %s80
      %p84 = pneg %p78
      %p85 = scmp.eq.s32.totalorder %s27, 5
      %p86 = por %p84, %p85
      %p87 = scmp.ne.s32.totalorder %s79, %s82
      %p88 = scmp.eq.s32.totalorder %s27, 0
      %p89 = por %p87, %p88
      %p90 = scmp.ne.s32.totalorder %s79, %s82
      %p91 = scmp.eq.s32.totalorder %s32, 5
      %p92 = por %p90, %p91
      %p93 = scmp.ne.s32.totalorder %s82, %s83
      %p94 = scmp.eq.s32.totalorder %s32, 0
      %p95 = por %p93, %p94
      %p96 = scmp.ne.s32.totalorder %s82, %s83
      %p97 = scmp.eq.s32.totalorder %s33, 5
      %p98 = por %p96, %p97
      %p100 = scmp.ne.s32.totalorder %s83, %s99
      %p101 = scmp.eq.s32.totalorder %s33, 0
      %p102 = por %p100, %p101
      %s104 = sadd.s32 %s103, 1
      %p107 = scmp.eq.s32.totalorder %s27, 5
      %p108 = scmp.ne.s32.totalorder %s103, %s105
      %p109 = scmp.eq.s32.totalorder %s27, 0
      %p110 = por %p108, %p109
      %p111 = scmp.ne.s32.totalorder %s103, %s105
      %p112 = scmp.eq.s32.totalorder %s32, 5
      %p113 = por %p111, %p112
      %p114 = scmp.ne.s32.totalorder %s105, %s106
      %p115 = scmp.eq.s32.totalorder %s32, 0
      %p116 = por %p114, %p115
      %p117 = scmp.ne.s32.totalorder %s105, %s106
      %p118 = scmp.eq.s32.totalorder %s33, 5
      %p119 = por %p117, %p118
      %p121 = scmp.ne.s32.totalorder %s106, %s120
      %p122 = scmp.eq.s32.totalorder %s33, 0
      %p123 = por %p121, %p122
      %s125 = sadd.s32 %s124, 1
      %p128 = scmp.eq.s32.totalorder %s27, 5
      %p129 = scmp.ne.s32.totalorder %s124, %s126
      %p130 = scmp.eq.s32.totalorder %s27, 0
      %p131 = por %p129, %p130
      %p132 = scmp.ne.s32.totalorder %s124, %s126
      %p133 = scmp.eq.s32.totalorder %s32, 5
      %p134 = por %p132, %p133
      %p135 = scmp.ne.s32.totalorder %s126, %s127
      %p136 = scmp.eq.s32.totalorder %s32, 0
      %p137 = por %p135, %p136
      %p138 = scmp.ne.s32.totalorder %s126, %s127
      %p139 = scmp.eq.s32.totalorder %s33, 5
      %p140 = por %p138, %p139
      %p142 = scmp.ne.s32.totalorder %s127, %s141
      %p143 = scmp.eq.s32.totalorder %s33, 0
      %p144 = por %p142, %p143
      %s146 = sadd.s32 %s145, 1
      %p149 = scmp.eq.s32.totalorder %s27, 5
      %p150 = scmp.ne.s32.totalorder %s145, %s147
      %p151 = scmp.eq.s32.totalorder %s27, 0
      %p152 = por %p150, %p151
      %p153 = scmp.ne.s32.totalorder %s145, %s147
      %p154 = scmp.eq.s32.totalorder %s32, 5
      %p155 = por %p153, %p154
      %p156 = scmp.ne.s32.totalorder %s147, %s148
      %p157 = scmp.eq.s32.totalorder %s32, 0
      %p158 = por %p156, %p157
      %p159 = scmp.ne.s32.totalorder %s147, %s148
      %p160 = scmp.eq.s32.totalorder %s33, 5
      %p161 = por %p159, %p160
      %p163 = scmp.ne.s32.totalorder %s148, %s162
      %p164 = scmp.eq.s32.totalorder %s33, 0
      %p165 = por %p163, %p164
      %s167 = sadd.s32 %s166, 1
      %p170 = scmp.eq.s32.totalorder %s27, 5
      %p171 = scmp.ne.s32.totalorder %s166, %s168
      %p172 = scmp.eq.s32.totalorder %s27, 0
      %p173 = por %p171, %p172
      %p174 = scmp.ne.s32.totalorder %s166, %s168
      %p175 = scmp.eq.s32.totalorder %s32, 5
      %p176 = por %p174, %p175
      %p177 = scmp.ne.s32.totalorder %s168, %s169
      %p178 = scmp.eq.s32.totalorder %s32, 0
      %p179 = por %p177, %p178
      %p180 = scmp.ne.s32.totalorder %s168, %s169
      %p181 = scmp.eq.s32.totalorder %s33, 5
      %p182 = por %p180, %p181
      %p184 = scmp.ne.s32.totalorder %s169, %s183
      %p185 = scmp.eq.s32.totalorder %s33, 0
      %p186 = por %p184, %p185
      %s188 = sadd.s32 %s187, 1
      %p191 = scmp.eq.s32.totalorder %s27, 5
      %p192 = scmp.ne.s32.totalorder %s187, %s189
      %p193 = scmp.eq.s32.totalorder %s27, 0
      %p194 = por %p192, %p193
      %p195 = scmp.ne.s32.totalorder %s187, %s189
      %p196 = scmp.eq.s32.totalorder %s32, 5
      %p197 = por %p195, %p196
      %p198 = scmp.ne.s32.totalorder %s189, %s190
      %p199 = scmp.eq.s32.totalorder %s32, 0
      %p200 = por %p198, %p199
      %p201 = scmp.ne.s32.totalorder %s189, %s190
      %p202 = scmp.eq.s32.totalorder %s33, 5
      %p203 = por %p201, %p202
      %p205 = scmp.ne.s32.totalorder %s190, %s204
      %p206 = scmp.eq.s32.totalorder %s33, 0
      %p207 = por %p205, %p206
      %s209 = sadd.s32 %s208, 1
      %p212 = scmp.eq.s32.totalorder %s27, 5
      %p213 = scmp.ne.s32.totalorder %s208, %s210
      %p214 = scmp.eq.s32.totalorder %s27, 0
      %p215 = por %p213, %p214
      %p216 = scmp.ne.s32.totalorder %s208, %s210
      %p217 = scmp.eq.s32.totalorder %s32, 5
      %p218 = por %p216, %p217
      %p219 = scmp.ne.s32.totalorder %s210, %s211
      %p220 = scmp.eq.s32.totalorder %s32, 0
      %p221 = por %p219, %p220
      %p222 = scmp.ne.s32.totalorder %s210, %s211
      %p223 = scmp.eq.s32.totalorder %s33, 5
      %p224 = por %p222, %p223
      %p226 = scmp.ne.s32.totalorder %s211, %s225
      %p227 = scmp.eq.s32.totalorder %s33, 0
      %p228 = por %p226, %p227
      %s230 = sadd.s32 %s229, 1
      %p233 = scmp.eq.s32.totalorder %s27, 5
      %p234 = scmp.ne.s32.totalorder %s229, %s231
      %p235 = scmp.eq.s32.totalorder %s27, 0
      %p236 = por %p234, %p235
      %p237 = scmp.ne.s32.totalorder %s229, %s231
      %p238 = scmp.eq.s32.totalorder %s32, 5
      %p239 = por %p237, %p238
      %p240 = scmp.ne.s32.totalorder %s231, %s232
      %p241 = scmp.eq.s32.totalorder %s32, 0
      %p242 = por %p240, %p241
      %p243 = scmp.ne.s32.totalorder %s231, %s232
      %p244 = scmp.eq.s32.totalorder %s33, 5
      %p245 = por %p243, %p244
      %p247 = scmp.ne.s32.totalorder %s232, %s246
      %p248 = scmp.eq.s32.totalorder %s33, 0
      %p249 = por %p247, %p248
      %s251 = sadd.s32 %s250, 1
      %p254 = scmp.eq.s32.totalorder %s27, 5
      %p255 = scmp.ne.s32.totalorder %s250, %s252
      %p256 = scmp.eq.s32.totalorder %s27, 0
      %p257 = por %p255, %p256
      %p258 = scmp.ne.s32.totalorder %s250, %s252
      %p259 = scmp.eq.s32.totalorder %s32, 5
      %p260 = por %p258, %p259
      %p261 = scmp.ne.s32.totalorder %s252, %s253
      %p262 = scmp.eq.s32.totalorder %s32, 0
      %p263 = por %p261, %p262
      %p264 = scmp.ne.s32.totalorder %s252, %s253
      %p265 = scmp.eq.s32.totalorder %s33, 5
      %p266 = por %p264, %p265
      %p268 = scmp.ne.s32.totalorder %s253, %s267
      %p269 = scmp.eq.s32.totalorder %s33, 0
      %p270 = por %p268, %p269
      %s272 = sadd.s32 %s271, 1
      %p275 = scmp.eq.s32.totalorder %s27, 5
      %p276 = scmp.ne.s32.totalorder %s271, %s273
      %p277 = scmp.eq.s32.totalorder %s27, 0
      %p278 = por %p276, %p277
      %p279 = scmp.ne.s32.totalorder %s271, %s273
      %p280 = scmp.eq.s32.totalorder %s32, 5
      %p281 = por %p279, %p280
      %p282 = scmp.ne.s32.totalorder %s273, %s274
      %p283 = scmp.eq.s32.totalorder %s32, 0
      %p284 = por %p282, %p283
      %p285 = scmp.ne.s32.totalorder %s273, %s274
      %p286 = scmp.eq.s32.totalorder %s33, 5
      %p287 = por %p285, %p286
      %p289 = scmp.ne.s32.totalorder %s274, %s288
      %p290 = scmp.eq.s32.totalorder %s33, 0
      %p291 = por %p289, %p290
      %s292 = ssub.s32 %s34, %s46
      %s293 = ssub.s32 %s35, %s42
      %s294 = sor.u32 %s292, %s293
      %p295 = scmp.eq.s32.totalorder %s294, 0
      %s297 = sadd.s32 %s296, 1
      %s298 = scalar_select %p295, %s296, %s297
      %p301 = pneg %p295
      %p302 = scmp.eq.s32.totalorder %s27, 5
      %p303 = por %p301, %p302
      %p304 = scmp.ne.s32.totalorder %s296, %s299
      %p305 = scmp.eq.s32.totalorder %s27, 0
      %p306 = por %p304, %p305
      %p307 = scmp.ne.s32.totalorder %s296, %s299
      %p308 = scmp.eq.s32.totalorder %s32, 5
      %p309 = por %p307, %p308
      %p310 = scmp.ne.s32.totalorder %s299, %s300
      %p311 = scmp.eq.s32.totalorder %s32, 0
      %p312 = por %p310, %p311
      %p313 = scmp.ne.s32.totalorder %s299, %s300
      %p314 = scmp.eq.s32.totalorder %s33, 5
      %p315 = por %p313, %p314
      %p317 = scmp.ne.s32.totalorder %s300, %s316
      %p318 = scmp.eq.s32.totalorder %s33, 0
      %p319 = por %p317, %p318
      %p320 = scmp.le.s32.totalorder 1, %s27
      %p321 = scmp.lt.s32.totalorder %s27, 7
      %p322 = pnand %p320, %p321
      %p323 = pneg %p322
      // Predicated region
      $region9: #{tpu_custom_call.1} parent=5 // pred_check
        _
      $region10: #{tpu_custom_call.1} parent=5 // pred_check_branch
        %325 = sbr.rel (%p322) target = $region12
      $region11: #{tpu_custom_call.1} parent=5 // pred_region
        %s326 = ssub.s32 %s27, 1
        // Predicated region
        $region13: #{tpu_custom_call.1} parent=11 // pred_check
          %p327 = pneg %p116
        $region14: #{tpu_custom_call.1} parent=11 // pred_check_branch
          %329 = sbr.rel (%p327) target = $region16
        $region15: #{tpu_custom_call.1} parent=11 // pred_region
          %331 = vsyncadd [#allocation6], 0
          %s332 = sshll.u32 %s2, 4
          %s333 = int_to_ptr.hbm [resolvable:$true] %s332
          %s334 = sshll.u32 [#allocation7], 4
          %s335 = int_to_ptr.vmem [resolvable:$true] %s334
          %340 = dma.hbm_to_vmem [thread:$0]  %s333, 1024, %s335, [#allocation6], 64, 64, 4
        $region16: #{tpu_custom_call.1} parent=11 // pred_fallthru
          _
        // Predicated region
        $region17: #{tpu_custom_call.1} parent=11 // pred_check
          %p341 = pneg %p137
        $region18: #{tpu_custom_call.1} parent=11 // pred_check_branch
          %343 = sbr.rel (%p341) target = $region20
        $region19: #{tpu_custom_call.1} parent=11 // pred_region
          _
        $region20: #{tpu_custom_call.1} parent=11 // pred_fallthru
          _
        // Predicated region
        $region21: #{tpu_custom_call.1} parent=11 // pred_check
          %p344 = pneg %p158
        $region22: #{tpu_custom_call.1} parent=11 // pred_check_branch
          %346 = sbr.rel (%p344) target = $region24
        $region23: #{tpu_custom_call.1} parent=11 // pred_region
          _
        $region24: #{tpu_custom_call.1} parent=11 // pred_fallthru
          _
        // Predicated region
        $region25: #{tpu_custom_call.1} parent=11 // pred_check
          %p347 = pneg %p179
        $region26: #{tpu_custom_call.1} parent=11 // pred_check_branch
          %349 = sbr.rel (%p347) target = $region28
        $region27: #{tpu_custom_call.1} parent=11 // pred_region
          %351 = vsyncadd [#allocation9], 0
          %s352 = sshll.u32 %s5, 4
          %s353 = int_to_ptr.hbm [resolvable:$true] %s352
          %s354 = sshll.u32 [#allocation8], 4
          %s355 = int_to_ptr.vmem [resolvable:$true] %s354
          %360 = dma.hbm_to_vmem [thread:$0]  %s353, 9216, %s355, [#allocation9], 64, 64, 4
        $region28: #{tpu_custom_call.1} parent=11 // pred_fallthru
          _
        // Predicated region
        $region29: #{tpu_custom_call.1} parent=11 // pred_check
          %p361 = pneg %p200
        $region30: #{tpu_custom_call.1} parent=11 // pred_check_branch
          %363 = sbr.rel (%p361) target = $region32
        $region31: #{tpu_custom_call.1} parent=11 // pred_region
          _
        $region32: #{tpu_custom_call.1} parent=11 // pred_fallthru
          _
        // Predicated region
        $region33: #{tpu_custom_call.1} parent=11 // pred_check
          %p364 = pneg %p221
        $region34: #{tpu_custom_call.1} parent=11 // pred_check_branch
          %366 = sbr.rel (%p364) target = $region36
        $region35: #{tpu_custom_call.1} parent=11 // pred_region
          _
        $region36: #{tpu_custom_call.1} parent=11 // pred_fallthru
          _
        // Predicated region
        $region37: #{tpu_custom_call.1} parent=11 // pred_check
          %p367 = pneg %p242
        $region38: #{tpu_custom_call.1} parent=11 // pred_check_branch
          %369 = sbr.rel (%p367) target = $region40
        $region39: #{tpu_custom_call.1} parent=11 // pred_region
          %371 = vsyncadd [#allocation9], 0
          %s372 = sshll.u32 %s8, 4
          %s373 = int_to_ptr.hbm [resolvable:$true] %s372
          %s374 = sshll.u32 [#allocation10], 4
          %s375 = int_to_ptr.vmem [resolvable:$true] %s374
          %380 = dma.hbm_to_vmem [thread:$0]  %s373, 1024, %s375, [#allocation9], 64, 64, 4
        $region40: #{tpu_custom_call.1} parent=11 // pred_fallthru
          _
        // Predicated region
        $region41: #{tpu_custom_call.1} parent=11 // pred_check
          %p381 = pneg %p263
        $region42: #{tpu_custom_call.1} parent=11 // pred_check_branch
          %383 = sbr.rel (%p381) target = $region44
        $region43: #{tpu_custom_call.1} parent=11 // pred_region
          _
        $region44: #{tpu_custom_call.1} parent=11 // pred_fallthru
          _
        // Predicated region
        $region45: #{tpu_custom_call.1} parent=11 // pred_check
          %p384 = pneg %p284
        $region46: #{tpu_custom_call.1} parent=11 // pred_check_branch
          %386 = sbr.rel (%p384) target = $region48
        $region47: #{tpu_custom_call.1} parent=11 // pred_region
          _
        $region48: #{tpu_custom_call.1} parent=11 // pred_fallthru
          _
      $region12: #{tpu_custom_call.1} parent=5 // pred_fallthru
        _
      %p387 = scmp.lt.s32.totalorder %s27, 6
      // Predicated region
      $region49: #{tpu_custom_call.1} parent=5 // pred_check
        %p388 = pneg %p387
      $region50: #{tpu_custom_call.1} parent=5 // pred_check_branch
        %390 = sbr.rel (%p388) target = $region52
      $region51: #{tpu_custom_call.1} parent=5 // pred_region
        // Predicated region
        $region53: #{tpu_custom_call.1} parent=51 // pred_check
          %p391 = pneg %p61
        $region54: #{tpu_custom_call.1} parent=51 // pred_check_branch
          %393 = sbr.rel (%p391) target = $region56
        $region55: #{tpu_custom_call.1} parent=51 // pred_region
          %s394 = sand.u32 %s51, 1
          %s395 = scalar_lea.sflag [#allocation3], %s394
          %s396 = sand.u32 %s51, 1
          %s397 = smul.addr %s396, 24
          %s398 = scalar_lea.vmem [#allocation2], %s397
          %s399 = smul.u32 6, %s35
          %401 = vsyncadd %s395, 0
          %s402 = smul.addr %s34, 18
          %s403 = sadd.s32 %s399, %s402
          %s404 = smul.addr %s403, 4
          %s405 = scalar_lea.hbm %s0, %s404
          %s406 = sshll.u32 %s405, 4
          %s407 = int_to_ptr.hbm [resolvable:$true] %s406
          %s408 = sshll.u32 %s398, 4
          %s409 = int_to_ptr.vmem [resolvable:$true] %s408
          %414 = dma.hbm_to_vmem [thread:$0]  %s407, 384, %s409, %s395, 64, 64, 4
        $region56: #{tpu_custom_call.1} parent=51 // pred_fallthru
          _
        // Predicated region
        $region57: #{tpu_custom_call.1} parent=51 // pred_check
          %p415 = pneg %p89
        $region58: #{tpu_custom_call.1} parent=51 // pred_check_branch
          %417 = sbr.rel (%p415) target = $region60
        $region59: #{tpu_custom_call.1} parent=51 // pred_region
          %s418 = sand.u32 %s27, 1
          %s419 = scalar_lea.sflag [#allocation6], %s418
          %s420 = sand.u32 %s79, 1
          %s421 = smul.addr %s420, 8
          %s422 = scalar_lea.vmem [#allocation5], %s421
          %424 = vsyncadd %s419, 0
          %s425 = smul.addr %s35, 2
          %s426 = smul.addr %s34, 6
          %s427 = sadd.s32 %s425, %s426
          %s428 = smul.addr %s427, 4
          %s429 = scalar_lea.hbm %s1, %s428
          %s430 = sshll.u32 %s429, 4
          %s431 = int_to_ptr.hbm [resolvable:$true] %s430
          %s432 = sshll.u32 %s422, 4
          %s433 = int_to_ptr.vmem [resolvable:$true] %s432
          %438 = dma.hbm_to_vmem [thread:$0]  %s431, 128, %s433, %s419, 64, 64, 4
        $region60: #{tpu_custom_call.1} parent=51 // pred_fallthru
          _
      $region52: #{tpu_custom_call.1} parent=5 // pred_fallthru
        _
      %p439 = scmp.le.s32.totalorder 1, %s27
      %p440 = scmp.lt.s32.totalorder %s27, 7
      %p441 = pnand %p439, %p440
      %p442 = pneg %p441
      // Predicated region
      $region61: #{tpu_custom_call.1} parent=5 // pred_check
        _
      $region62: #{tpu_custom_call.1} parent=5 // pred_check_branch
        %444 = sbr.rel (%p441) target = $region64
      $region63: #{tpu_custom_call.1} parent=5 // pred_region
        %s445 = ssub.s32 %s27, 1
        %s446 = sand.u32 %s54, 1
        %s447 = scalar_lea.sflag [#allocation3], %s446
        %s448 = sand.u32 %s54, 1
        %s449 = smul.addr %s448, 24
        %s450 = scalar_lea.vmem [#allocation2], %s449
        // Predicated region
        $region65: #{tpu_custom_call.1} parent=63 // pred_check
          %p451 = pneg %p67
        $region66: #{tpu_custom_call.1} parent=63 // pred_check_branch
          %453 = sbr.rel (%p451) target = $region68
        $region67: #{tpu_custom_call.1} parent=63 // pred_region
          %455 = dma.done %s447, 384
        $region68: #{tpu_custom_call.1} parent=63 // pred_fallthru
          _
        %s456 = sand.u32 %s32, 1
        %s457 = scalar_lea.sflag [#allocation6], %s456
        %s458 = sand.u32 %s82, 1
        %s459 = smul.addr %s458, 8
        %s460 = scalar_lea.vmem [#allocation5], %s459
        // Predicated region
        $region69: #{tpu_custom_call.1} parent=63 // pred_check
          %p461 = pneg %p95
        $region70: #{tpu_custom_call.1} parent=63 // pred_check_branch
          %463 = sbr.rel (%p461) target = $region72
        $region71: #{tpu_custom_call.1} parent=63 // pred_region
          %465 = dma.done %s457, 128
        $region72: #{tpu_custom_call.1} parent=63 // pred_fallthru
          _
        // Predicated region
        $region73: #{tpu_custom_call.1} parent=63 // pred_check
          %p466 = pneg %p116
        $region74: #{tpu_custom_call.1} parent=63 // pred_check_branch
          %468 = sbr.rel (%p466) target = $region76
        $region75: #{tpu_custom_call.1} parent=63 // pred_region
          %470 = dma.done [#allocation6], 1024
        $region76: #{tpu_custom_call.1} parent=63 // pred_fallthru
          _
        // Predicated region
        $region77: #{tpu_custom_call.1} parent=63 // pred_check
          %p471 = pneg %p179
        $region78: #{tpu_custom_call.1} parent=63 // pred_check_branch
          %473 = sbr.rel (%p471) target = $region80
        $region79: #{tpu_custom_call.1} parent=63 // pred_region
          %475 = dma.done [#allocation9], 9216
        $region80: #{tpu_custom_call.1} parent=63 // pred_fallthru
          _
        // Predicated region
        $region81: #{tpu_custom_call.1} parent=63 // pred_check
          %p476 = pneg %p242
        $region82: #{tpu_custom_call.1} parent=63 // pred_check_branch
          %478 = sbr.rel (%p476) target = $region84
        $region83: #{tpu_custom_call.1} parent=63 // pred_region
          %480 = dma.done [#allocation9], 1024
        $region84: #{tpu_custom_call.1} parent=63 // pred_fallthru
          _
        %s481 = sand.u32 %s54, 1
        %s482 = scalar_lea.sflag [#allocation3], %s481
        %s483 = sand.u32 %s54, 1
        %s484 = smul.addr %s483, 24
        %s485 = scalar_lea.vmem [#allocation2], %s484
        %p486 = pneg %p67
        %p487 = pneg %p64
        %s488 = sand.u32 %s32, 1
        %s489 = scalar_lea.sflag [#allocation6], %s488
        %s490 = sand.u32 %s82, 1
        %s491 = smul.addr %s490, 8
        %s492 = scalar_lea.vmem [#allocation5], %s491
        %p493 = pneg %p95
        %p494 = pneg %p92
        %p495 = pneg %p116
        %p496 = pneg %p113
        %p497 = pneg %p137
        %p498 = pneg %p134
        %p499 = pneg %p158
        %p500 = pneg %p155
        %p501 = pneg %p179
        %p502 = pneg %p176
        %p503 = pneg %p200
        %p504 = pneg %p197
        %p505 = pneg %p221
        %p506 = pneg %p218
        %p507 = pneg %p242
        %p508 = pneg %p239
        %p509 = pneg %p263
        %p510 = pneg %p260
        %p511 = pneg %p284
        %p512 = pneg %p281
        %p513 = pneg %p312
        %p514 = pneg %p309
        %s515 = sand.u32 %s299, 1
        %s516 = scalar_lea.sflag [#allocation4], %s515
        %s517 = sand.u32 %s299, 1
        %s518 = smul.addr %s517, 24
        %s519 = scalar_lea.vmem [#allocation11], %s518
        %s520 = smul.u32 6, %s37
        %s521 = smul.u32 6, %s37
        %v522 = vld [vmem:[%s450] sm:$0xf]
        %v523 = vld [vmem:[%s450 + $0x4] sm:$0xf]
        %v524 = vld [vmem:[%s450 + $0x8] sm:$0xf]
        %v525 = vld [vmem:[%s450 + $0xc] sm:$0xf]
        %v526 = vld [vmem:[%s450 + $0x10] sm:$0xf]
        %v527 = vld [vmem:[%s450 + $0x14] sm:$0xf]
        %v528 = vld [vmem:[%s460] sm:$0xf]
        %v529 = vld [vmem:[%s460 + $0x4] sm:$0xf]
        %v536 = vunpack.c.l.b16 %v522
        %v537 = vunpack.c.l.b16 %v523
        %v538 = vunpack.c.l.b16 %v524
        %v539 = vunpack.c.l.b16 %v525
        %v540 = vunpack.c.l.b16 %v526
        %v541 = vunpack.c.l.b16 %v527
        %v542 = vpack.c.b16 %v536, %v536
        %v543 = vpack.c.b16 %v538, %v537
        %v544 = vpack.c.b16 %v540, %v539
        %v545 = vpack.c.b16 %v541, %v541
        %v549 = vunpack.c.l.b16 %v529
        %v550 = vpack.c.b16 %v549, %v549
        %vm551 = vcmask 1043456
        %v554 = vsel %vm551, %v528, %v542
        %v558 = vsel %vm551, %v545, %v550
        %v560 = vld [vmem:[#allocation7] sm:$0xf]
        %v561 = vld [vmem:[#allocation7 + $0x4] sm:$0xf]
        %v562 = vld [vmem:[#allocation7 + $0x8] sm:$0xf]
        %v563 = vld [vmem:[#allocation7 + $0xc] sm:$0xf]
        %v564 = vld [vmem:[#allocation7 + $0x10] sm:$0xf]
        %v565 = vld [vmem:[#allocation7 + $0x14] sm:$0xf]
        %v566 = vld [vmem:[#allocation7 + $0x18] sm:$0xf]
        %v567 = vld [vmem:[#allocation7 + $0x1c] sm:$0xf]
        %v568 = vld [vmem:[#allocation7 + $0x20] sm:$0xf]
        %v569 = vld [vmem:[#allocation7 + $0x24] sm:$0xf]
        %v570 = vld [vmem:[#allocation7 + $0x28] sm:$0xf]
        %v571 = vld [vmem:[#allocation7 + $0x2c] sm:$0xf]
        %v572 = vld [vmem:[#allocation7 + $0x30] sm:$0xf]
        %v573 = vld [vmem:[#allocation7 + $0x34] sm:$0xf]
        %v574 = vld [vmem:[#allocation7 + $0x38] sm:$0xf]
        %v575 = vld [vmem:[#allocation7 + $0x3c] sm:$0xf]
        %v592 = vunpack.c.l.b16 %v560
        %v593 = vunpack.c.l.b16 %v561
        %v594 = vunpack.c.l.b16 %v562
        %v595 = vunpack.c.l.b16 %v563
        %v596 = vunpack.c.l.b16 %v564
        %v597 = vunpack.c.l.b16 %v565
        %v598 = vunpack.c.l.b16 %v566
        %v599 = vunpack.c.l.b16 %v567
        %v600 = vunpack.c.l.b16 %v568
        %v601 = vunpack.c.l.b16 %v569
        %v602 = vunpack.c.l.b16 %v570
        %v603 = vunpack.c.l.b16 %v571
        %v604 = vunpack.c.l.b16 %v572
        %v605 = vunpack.c.l.b16 %v573
        %v606 = vunpack.c.l.b16 %v574
        %v607 = vunpack.c.l.b16 %v575
        %v608 = vpack.c.b16 %v593, %v592
        %v609 = vpack.c.b16 %v595, %v594
        %v610 = vpack.c.b16 %v597, %v596
        %v611 = vpack.c.b16 %v599, %v598
        %v612 = vpack.c.b16 %v601, %v600
        %v613 = vpack.c.b16 %v603, %v602
        %v614 = vpack.c.b16 %v605, %v604
        %v615 = vpack.c.b16 %v607, %v606
        %624 = vmatpush.bf16.msra.mxu0 %v615
        %625 = vmatpush.bf16.msra.mxu0 %v614
        %626 = vmatpush.bf16.msra.mxu0 %v613
        %627 = vmatpush.bf16.msra.mxu0 %v612
        %628 = vmatpush.bf16.msra.mxu0 %v611
        %629 = vmatpush.bf16.msra.mxu0 %v610
        %630 = vmatpush.bf16.msra.mxu0 %v609
        %631 = vmatpush.bf16.msra.mxu0 %v608
        %632 = vmatmul.bf16.gmra.mxu0 %v554
        %v633 = vpop.f32.mrf.mxu0
        %v634 = vadd.f32 0.0, %v633
        %v635 = vpop.f32.mrf.mxu0
        %v636 = vadd.f32 0.0, %v635
        %637 = vmatmul.bf16.gmra.mxu0 %v543
        %v638 = vpop.f32.mrf.mxu0
        %v639 = vadd.f32 0.0, %v638
        %v640 = vpop.f32.mrf.mxu0
        %v641 = vadd.f32 0.0, %v640
        %642 = vmatmul.bf16.gmra.mxu0 %v544
        %v643 = vpop.f32.mrf.mxu0
        %v644 = vadd.f32 0.0, %v643
        %v645 = vpop.f32.mrf.mxu0
        %v646 = vadd.f32 0.0, %v645
        %647 = vmatmul.bf16.gmra.mxu0 %v558
        %v648 = vpop.f32.mrf.mxu0
        %v649 = vadd.f32 0.0, %v648
        %v650 = vpop.f32.mrf.mxu0
        %v651 = vadd.f32 0.0, %v650
        %652 = vdwg.mxu0
        %v653 = vld [vmem:[%s3] sm:$0x1]
        %v655 = vperm.slane %v653, 0
        %v657 = vmul.f32 %v634, %v655
        %v658 = vmul.f32 %v636, %v655
        %v659 = vmul.f32 %v639, %v655
        %v660 = vmul.f32 %v641, %v655
        %v661 = vmul.f32 %v644, %v655
        %v662 = vmul.f32 %v646, %v655
        %v663 = vmul.f32 %v649, %v655
        %v664 = vmul.f32 %v651, %v655
        %v665 = vld [vmem:[%s4] sm:$0x1]
        %v667 = vperm.slane %v665, 0
        %v669 = vadd.f32 %v657, %v667
        %v670 = vadd.f32 %v658, %v667
        %v671 = vadd.f32 %v659, %v667
        %v672 = vadd.f32 %v660, %v667
        %v673 = vadd.f32 %v661, %v667
        %v674 = vadd.f32 %v662, %v667
        %v675 = vadd.f32 %v663, %v667
        %v676 = vadd.f32 %v664, %v667
        %v677 = vmax.f32 %v669, 0.0
        %v678 = vmax.f32 %v670, 0.0
        %v679 = vmax.f32 %v671, 0.0
        %v680 = vmax.f32 %v672, 0.0
        %v681 = vmax.f32 %v673, 0.0
        %v682 = vmax.f32 %v674, 0.0
        %v683 = vmax.f32 %v675, 0.0
        %v684 = vmax.f32 %v676, 0.0
        %v685 = vlaneseq
        %v686 = vshrl.u32 %v685, 7
        %v687 = vadd.s32 %v686, 8
        %v688 = vadd.s32 %v686, 16
        %v689 = vadd.s32 %v686, 24
        %v690 = vadd.s32 %v686, 32
        %v691 = vadd.s32 %v686, 40
        %v692 = vadd.s32 %v686, 48
        %v693 = vadd.s32 %v686, 56
        %s694 = smul.u32 %s37, 48
        %v695 = vstv %s694
        %v696 = vadd.s32 %v695, %v686
        %v697 = vadd.s32 %v695, %v687
        %v698 = vadd.s32 %v695, %v688
        %v699 = vadd.s32 %v695, %v689
        %v700 = vadd.s32 %v695, %v690
        %v701 = vadd.s32 %v695, %v691
        %v702 = vadd.s32 %v695, %v692
        %v703 = vadd.s32 %v695, %v693
        %v704 = vsub.s32 %v696, 8
        %v705 = vsub.s32 %v697, 8
        %v706 = vsub.s32 %v698, 8
        %v707 = vsub.s32 %v699, 8
        %v708 = vsub.s32 %v700, 8
        %v709 = vsub.s32 %v701, 8
        %v710 = vsub.s32 %v702, 8
        %v711 = vsub.s32 %v703, 8
        %vm712 = vcmp.ge.s32.totalorder %v704, 0
        %vm713 = vcmp.ge.s32.totalorder %v705, 0
        %vm714 = vcmp.ge.s32.totalorder %v706, 0
        %vm715 = vcmp.ge.s32.totalorder %v707, 0
        %vm716 = vcmp.ge.s32.totalorder %v708, 0
        %vm717 = vcmp.ge.s32.totalorder %v709, 0
        %vm718 = vcmp.ge.s32.totalorder %v710, 0
        %vm719 = vcmp.ge.s32.totalorder %v711, 0
        %vm720 = vcmp.lt.s32.totalorder %v704, 100
        %vm721 = vcmp.lt.s32.totalorder %v705, 100
        %vm722 = vcmp.lt.s32.totalorder %v706, 100
        %vm723 = vcmp.lt.s32.totalorder %v707, 100
        %vm724 = vcmp.lt.s32.totalorder %v708, 100
        %vm725 = vcmp.lt.s32.totalorder %v709, 100
        %vm726 = vcmp.lt.s32.totalorder %v710, 100
        %vm727 = vcmp.lt.s32.totalorder %v711, 100
        %vm728 = vmand %vm712, %vm720
        %vm729 = vmand %vm713, %vm721
        %vm730 = vmand %vm714, %vm722
        %vm731 = vmand %vm715, %vm723
        %vm732 = vmand %vm716, %vm724
        %vm733 = vmand %vm717, %vm725
        %vm734 = vmand %vm718, %vm726
        %vm735 = vmand %vm719, %vm727
        %v736 = vsel %vm728, 1, 0
        %v737 = vsel %vm729, 1, 0
        %v738 = vsel %vm730, 1, 0
        %v739 = vsel %vm731, 1, 0
        %v740 = vsel %vm732, 1, 0
        %v741 = vsel %vm733, 1, 0
        %v742 = vsel %vm734, 1, 0
        %v743 = vsel %vm735, 1, 0
        %vm744 = vcmp.eq.s32.totalorder %v736, 1
        %vm745 = vcmp.eq.s32.totalorder %v737, 1
        %vm746 = vcmp.eq.s32.totalorder %v738, 1
        %vm747 = vcmp.eq.s32.totalorder %v739, 1
        %vm748 = vcmp.eq.s32.totalorder %v740, 1
        %vm749 = vcmp.eq.s32.totalorder %v741, 1
        %vm750 = vcmp.eq.s32.totalorder %v742, 1
        %vm751 = vcmp.eq.s32.totalorder %v743, 1
        %v752 = vsel %vm744, %v677, 0.0
        %v753 = vsel %vm745, %v678, 0.0
        %v754 = vsel %vm746, %v679, 0.0
        %v755 = vsel %vm747, %v680, 0.0
        %v756 = vsel %vm748, %v681, 0.0
        %v757 = vsel %vm749, %v682, 0.0
        %v758 = vsel %vm750, %v683, 0.0
        %v759 = vsel %vm751, %v684, 0.0
        %v760 = vpack.c.bf16 %v752, %v752
        %v761 = vpack.c.bf16 %v753, %v753
        %v762 = vpack.c.bf16 %v754, %v754
        %v763 = vpack.c.bf16 %v755, %v755
        %v764 = vpack.c.bf16 %v756, %v756
        %v765 = vpack.c.bf16 %v757, %v757
        %v766 = vpack.c.bf16 %v758, %v758
        %v767 = vpack.c.bf16 %v759, %v759
        %v775 = vunpack.c.l.b16 %v760
        %v776 = vunpack.c.l.b16 %v761
        %v777 = vunpack.c.l.b16 %v762
        %v778 = vunpack.c.l.b16 %v763
        %v779 = vunpack.c.l.b16 %v764
        %v780 = vunpack.c.l.b16 %v765
        %v781 = vunpack.c.l.b16 %v766
        %v782 = vpack.c.b16 %v776, %v775
        %v783 = vpack.c.b16 %v778, %v777
        %v784 = vpack.c.b16 %v780, %v779
        %v785 = vpack.c.b16 %v781, %v781
        %vm786 = vsmask.f32 7424
        %v788 = vshrl.u32 %v782, 16
        %v790 = vshll.u32 %v782, 16
        %v792 = vrot.slane %v790, 1
        %v793 = vor.u32 %v788, %v792
        %v795 = vshll.u32 %v783, 16
        %v797 = vrot.slane %v795, 1
        %v798 = vsel %vm786, %v793, %v797
        %v799 = vshrl.u32 %v783, 16
        %v801 = vor.u32 %v799, %v797
        %v803 = vshll.u32 %v784, 16
        %v805 = vrot.slane %v803, 1
        %v806 = vsel %vm786, %v801, %v805
        %v807 = vshrl.u32 %v784, 16
        %v809 = vor.u32 %v807, %v805
        %v811 = vshll.u32 %v785, 16
        %v813 = vrot.slane %v811, 1
        %v814 = vsel %vm786, %v809, %v813
        %v815 = vshrl.u32 %v785, 16
        %v817 = vor.u32 %v815, %v813
        %vm818 = vcmask 1046528
        %v819 = vrot.slane %v782, 1
        %v820 = vrot.slane %v783, 1
        %v821 = vsel %vm818, %v819, %v820
        %v822 = vrot.slane %v784, 1
        %v823 = vsel %vm818, %v820, %v822
        %v824 = vrot.slane %v785, 1
        %v825 = vsel %vm818, %v822, %v824
        %vm826 = vsmask.f32 6400
        %v827 = vrot.slane %v788, 1
        %v828 = vrot.slane %v790, 2
        %v829 = vor.u32 %v827, %v828
        %v830 = vrot.slane %v799, 1
        %v831 = vrot.slane %v795, 2
        %v832 = vor.u32 %v830, %v831
        %v833 = vsel %vm826, %v829, %v832
        %v834 = vrot.slane %v807, 1
        %v835 = vrot.slane %v803, 2
        %v836 = vor.u32 %v834, %v835
        %v837 = vsel %vm826, %v832, %v836
        %v838 = vrot.slane %v815, 1
        %v839 = vrot.slane %v811, 2
        %v840 = vor.u32 %v838, %v839
        %v841 = vsel %vm826, %v836, %v840
        %v842 = vpack.c.b16 %v777, %v776
        %v843 = vpack.c.b16 %v779, %v778
        %v844 = vpack.c.b16 %v781, %v780
        %vm845 = vcmask 1041408
        %v846 = vrot.slane %v842, 6
        %v847 = vrot.slane %v843, 6
        %v848 = vsel %vm845, %v846, %v847
        %v849 = vrot.slane %v844, 6
        %v850 = vsel %vm845, %v847, %v849
        %v852 = vunpack.c.l.b16 %v767
        %v853 = vpack.c.b16 %v852, %v852
        %vm854 = vsmask.f32 1280
        %v856 = vshrl.u32 %v842, 16
        %v858 = vrot.slane %v856, 6
        %v859 = vshll.u32 %v842, 16
        %v861 = vrot.slane %v859, 7
        %v862 = vor.u32 %v858, %v861
        %v864 = vshrl.u32 %v843, 16
        %v866 = vrot.slane %v864, 6
        %v867 = vshll.u32 %v843, 16
        %v869 = vrot.slane %v867, 7
        %v870 = vor.u32 %v866, %v869
        %v871 = vsel %vm854, %v862, %v870
        %v873 = vshrl.u32 %v844, 16
        %v875 = vrot.slane %v873, 6
        %v876 = vshll.u32 %v844, 16
        %v878 = vrot.slane %v876, 7
        %v879 = vor.u32 %v875, %v878
        %v880 = vsel %vm854, %v870, %v879
        %v882 = vshll.u32 %v853, 16
        %v884 = vrot.slane %v882, 7
        %v885 = vsel %vm854, %v879, %v884
        %vm886 = vcmask 1040384
        %v887 = vrot.slane %v842, 7
        %v888 = vrot.slane %v843, 7
        %v889 = vsel %vm886, %v887, %v888
        %v890 = vrot.slane %v844, 7
        %v891 = vsel %vm886, %v888, %v890
        %v892 = vrot.slane %v853, 7
        %v893 = vsel %vm886, %v890, %v892
        %vm894 = vsmask.f32 256
        %v895 = vrot.slane %v856, 7
        %v896 = vor.u32 %v895, %v859
        %v897 = vrot.slane %v864, 7
        %v898 = vor.u32 %v897, %v867
        %v899 = vsel %vm894, %v895, %v898
        %v900 = vrot.slane %v873, 7
        %v901 = vor.u32 %v900, %v876
        %v902 = vsel %vm894, %v897, %v901
        %v903 = vshrl.u32 %v853, 16
        %v905 = vrot.slane %v903, 7
        %v906 = vor.u32 %v905, %v882
        %v907 = vsel %vm894, %v900, %v906
        %v908 = vld [vmem:[#allocation8] sm:$0xf]
        %v909 = vld [vmem:[#allocation8 + $0x4] sm:$0xf]
        %v910 = vld [vmem:[#allocation8 + $0x8] sm:$0xf]
        %v911 = vld [vmem:[#allocation8 + $0xc] sm:$0xf]
        %v912 = vld [vmem:[#allocation8 + $0x10] sm:$0xf]
        %v913 = vld [vmem:[#allocation8 + $0x14] sm:$0xf]
        %v914 = vld [vmem:[#allocation8 + $0x18] sm:$0xf]
        %v915 = vld [vmem:[#allocation8 + $0x1c] sm:$0xf]
        %v916 = vld [vmem:[#allocation8 + $0x20] sm:$0xf]
        %v917 = vld [vmem:[#allocation8 + $0x24] sm:$0xf]
        %v918 = vld [vmem:[#allocation8 + $0x28] sm:$0xf]
        %v919 = vld [vmem:[#allocation8 + $0x2c] sm:$0xf]
        %v920 = vld [vmem:[#allocation8 + $0x30] sm:$0xf]
        %v921 = vld [vmem:[#allocation8 + $0x34] sm:$0xf]
        %v922 = vld [vmem:[#allocation8 + $0x38] sm:$0xf]
        %v923 = vld [vmem:[#allocation8 + $0x3c] sm:$0xf]
        %v924 = vld [vmem:[#allocation8 + $0x40] sm:$0xf]
        %v925 = vld [vmem:[#allocation8 + $0x44] sm:$0xf]
        %v926 = vld [vmem:[#allocation8 + $0x48] sm:$0xf]
        %v927 = vld [vmem:[#allocation8 + $0x4c] sm:$0xf]
        %v928 = vld [vmem:[#allocation8 + $0x50] sm:$0xf]
        %v929 = vld [vmem:[#allocation8 + $0x54] sm:$0xf]
        %v930 = vld [vmem:[#allocation8 + $0x58] sm:$0xf]
        %v931 = vld [vmem:[#allocation8 + $0x5c] sm:$0xf]
        %v932 = vld [vmem:[#allocation8 + $0x60] sm:$0xf]
        %v933 = vld [vmem:[#allocation8 + $0x64] sm:$0xf]
        %v934 = vld [vmem:[#allocation8 + $0x68] sm:$0xf]
        %v935 = vld [vmem:[#allocation8 + $0x6c] sm:$0xf]
        %v936 = vld [vmem:[#allocation8 + $0x70] sm:$0xf]
        %v937 = vld [vmem:[#allocation8 + $0x74] sm:$0xf]
        %v938 = vld [vmem:[#allocation8 + $0x78] sm:$0xf]
        %v939 = vld [vmem:[#allocation8 + $0x7c] sm:$0xf]
        %v940 = vld [vmem:[#allocation8 + $0x80] sm:$0xf]
        %v941 = vld [vmem:[#allocation8 + $0x84] sm:$0xf]
        %v942 = vld [vmem:[#allocation8 + $0x88] sm:$0xf]
        %v943 = vld [vmem:[#allocation8 + $0x8c] sm:$0xf]
        %v944 = vld [vmem:[#allocation8 + $0x90] sm:$0xf]
        %v945 = vld [vmem:[#allocation8 + $0x94] sm:$0xf]
        %v946 = vld [vmem:[#allocation8 + $0x98] sm:$0xf]
        %v947 = vld [vmem:[#allocation8 + $0x9c] sm:$0xf]
        %v948 = vld [vmem:[#allocation8 + $0xa0] sm:$0xf]
        %v949 = vld [vmem:[#allocation8 + $0xa4] sm:$0xf]
        %v950 = vld [vmem:[#allocation8 + $0xa8] sm:$0xf]
        %v951 = vld [vmem:[#allocation8 + $0xac] sm:$0xf]
        %v952 = vld [vmem:[#allocation8 + $0xb0] sm:$0xf]
        %v953 = vld [vmem:[#allocation8 + $0xb4] sm:$0xf]
        %v954 = vld [vmem:[#allocation8 + $0xb8] sm:$0xf]
        %v955 = vld [vmem:[#allocation8 + $0xbc] sm:$0xf]
        %v956 = vld [vmem:[#allocation8 + $0xc0] sm:$0xf]
        %v957 = vld [vmem:[#allocation8 + $0xc4] sm:$0xf]
        %v958 = vld [vmem:[#allocation8 + $0xc8] sm:$0xf]
        %v959 = vld [vmem:[#allocation8 + $0xcc] sm:$0xf]
        %v960 = vld [vmem:[#allocation8 + $0xd0] sm:$0xf]
        %v961 = vld [vmem:[#allocation8 + $0xd4] sm:$0xf]
        %v962 = vld [vmem:[#allocation8 + $0xd8] sm:$0xf]
        %v963 = vld [vmem:[#allocation8 + $0xdc] sm:$0xf]
        %v964 = vld [vmem:[#allocation8 + $0xe0] sm:$0xf]
        %v965 = vld [vmem:[#allocation8 + $0xe4] sm:$0xf]
        %v966 = vld [vmem:[#allocation8 + $0xe8] sm:$0xf]
        %v967 = vld [vmem:[#allocation8 + $0xec] sm:$0xf]
        %v968 = vld [vmem:[#allocation8 + $0xf0] sm:$0xf]
        %v969 = vld [vmem:[#allocation8 + $0xf4] sm:$0xf]
        %v970 = vld [vmem:[#allocation8 + $0xf8] sm:$0xf]
        %v971 = vld [vmem:[#allocation8 + $0xfc] sm:$0xf]
        %v972 = vld [vmem:[#allocation8 + $0x100] sm:$0xf]
        %v973 = vld [vmem:[#allocation8 + $0x104] sm:$0xf]
        %v974 = vld [vmem:[#allocation8 + $0x108] sm:$0xf]
        %v975 = vld [vmem:[#allocation8 + $0x10c] sm:$0xf]
        %v976 = vld [vmem:[#allocation8 + $0x110] sm:$0xf]
        %v977 = vld [vmem:[#allocation8 + $0x114] sm:$0xf]
        %v978 = vld [vmem:[#allocation8 + $0x118] sm:$0xf]
        %v979 = vld [vmem:[#allocation8 + $0x11c] sm:$0xf]
        %v980 = vld [vmem:[#allocation8 + $0x120] sm:$0xf]
        %v981 = vld [vmem:[#allocation8 + $0x124] sm:$0xf]
        %v982 = vld [vmem:[#allocation8 + $0x128] sm:$0xf]
        %v983 = vld [vmem:[#allocation8 + $0x12c] sm:$0xf]
        %v984 = vld [vmem:[#allocation8 + $0x130] sm:$0xf]
        %v985 = vld [vmem:[#allocation8 + $0x134] sm:$0xf]
        %v986 = vld [vmem:[#allocation8 + $0x138] sm:$0xf]
        %v987 = vld [vmem:[#allocation8 + $0x13c] sm:$0xf]
        %v988 = vld [vmem:[#allocation8 + $0x140] sm:$0xf]
        %v989 = vld [vmem:[#allocation8 + $0x144] sm:$0xf]
        %v990 = vld [vmem:[#allocation8 + $0x148] sm:$0xf]
        %v991 = vld [vmem:[#allocation8 + $0x14c] sm:$0xf]
        %v992 = vld [vmem:[#allocation8 + $0x150] sm:$0xf]
        %v993 = vld [vmem:[#allocation8 + $0x154] sm:$0xf]
        %v994 = vld [vmem:[#allocation8 + $0x158] sm:$0xf]
        %v995 = vld [vmem:[#allocation8 + $0x15c] sm:$0xf]
        %v996 = vld [vmem:[#allocation8 + $0x160] sm:$0xf]
        %v997 = vld [vmem:[#allocation8 + $0x164] sm:$0xf]
        %v998 = vld [vmem:[#allocation8 + $0x168] sm:$0xf]
        %v999 = vld [vmem:[#allocation8 + $0x16c] sm:$0xf]
        %v1000 = vld [vmem:[#allocation8 + $0x170] sm:$0xf]
        %v1001 = vld [vmem:[#allocation8 + $0x174] sm:$0xf]
        %v1002 = vld [vmem:[#allocation8 + $0x178] sm:$0xf]
        %v1003 = vld [vmem:[#allocation8 + $0x17c] sm:$0xf]
        %v1004 = vld [vmem:[#allocation8 + $0x180] sm:$0xf]
        %v1005 = vld [vmem:[#allocation8 + $0x184] sm:$0xf]
        %v1006 = vld [vmem:[#allocation8 + $0x188] sm:$0xf]
        %v1007 = vld [vmem:[#allocation8 + $0x18c] sm:$0xf]
        %v1008 = vld [vmem:[#allocation8 + $0x190] sm:$0xf]
        %v1009 = vld [vmem:[#allocation8 + $0x194] sm:$0xf]
        %v1010 = vld [vmem:[#allocation8 + $0x198] sm:$0xf]
        %v1011 = vld [vmem:[#allocation8 + $0x19c] sm:$0xf]
        %v1012 = vld [vmem:[#allocation8 + $0x1a0] sm:$0xf]
        %v1013 = vld [vmem:[#allocation8 + $0x1a4] sm:$0xf]
        %v1014 = vld [vmem:[#allocation8 + $0x1a8] sm:$0xf]
        %v1015 = vld [vmem:[#allocation8 + $0x1ac] sm:$0xf]
        %v1016 = vld [vmem:[#allocation8 + $0x1b0] sm:$0xf]
        %v1017 = vld [vmem:[#allocation8 + $0x1b4] sm:$0xf]
        %v1018 = vld [vmem:[#allocation8 + $0x1b8] sm:$0xf]
        %v1019 = vld [vmem:[#allocation8 + $0x1bc] sm:$0xf]
        %v1020 = vld [vmem:[#allocation8 + $0x1c0] sm:$0xf]
        %v1021 = vld [vmem:[#allocation8 + $0x1c4] sm:$0xf]
        %v1022 = vld [vmem:[#allocation8 + $0x1c8] sm:$0xf]
        %v1023 = vld [vmem:[#allocation8 + $0x1cc] sm:$0xf]
        %v1024 = vld [vmem:[#allocation8 + $0x1d0] sm:$0xf]
        %v1025 = vld [vmem:[#allocation8 + $0x1d4] sm:$0xf]
        %v1026 = vld [vmem:[#allocation8 + $0x1d8] sm:$0xf]
        %v1027 = vld [vmem:[#allocation8 + $0x1dc] sm:$0xf]
        %v1028 = vld [vmem:[#allocation8 + $0x1e0] sm:$0xf]
        %v1029 = vld [vmem:[#allocation8 + $0x1e4] sm:$0xf]
        %v1030 = vld [vmem:[#allocation8 + $0x1e8] sm:$0xf]
        %v1031 = vld [vmem:[#allocation8 + $0x1ec] sm:$0xf]
        %v1032 = vld [vmem:[#allocation8 + $0x1f0] sm:$0xf]
        %v1033 = vld [vmem:[#allocation8 + $0x1f4] sm:$0xf]
        %v1034 = vld [vmem:[#allocation8 + $0x1f8] sm:$0xf]
        %v1035 = vld [vmem:[#allocation8 + $0x1fc] sm:$0xf]
        %v1036 = vld [vmem:[#allocation8 + $0x200] sm:$0xf]
        %v1037 = vld [vmem:[#allocation8 + $0x204] sm:$0xf]
        %v1038 = vld [vmem:[#allocation8 + $0x208] sm:$0xf]
        %v1039 = vld [vmem:[#allocation8 + $0x20c] sm:$0xf]
        %v1040 = vld [vmem:[#allocation8 + $0x210] sm:$0xf]
        %v1041 = vld [vmem:[#allocation8 + $0x214] sm:$0xf]
        %v1042 = vld [vmem:[#allocation8 + $0x218] sm:$0xf]
        %v1043 = vld [vmem:[#allocation8 + $0x21c] sm:$0xf]
        %v1044 = vld [vmem:[#allocation8 + $0x220] sm:$0xf]
        %v1045 = vld [vmem:[#allocation8 + $0x224] sm:$0xf]
        %v1046 = vld [vmem:[#allocation8 + $0x228] sm:$0xf]
        %v1047 = vld [vmem:[#allocation8 + $0x22c] sm:$0xf]
        %v1048 = vld [vmem:[#allocation8 + $0x230] sm:$0xf]
        %v1049 = vld [vmem:[#allocation8 + $0x234] sm:$0xf]
        %v1050 = vld [vmem:[#allocation8 + $0x238] sm:$0xf]
        %v1051 = vld [vmem:[#allocation8 + $0x23c] sm:$0xf]
        %vm1052 = vcmask 1045504
        %v1053 = vrot.slane %v782, 2
        %v1054 = vrot.slane %v783, 2
        %v1055 = vsel %vm1052, %v1053, %v1054
        %v1056 = vrot.slane %v798, 2
        %v1057 = vrot.slane %v806, 2
        %v1058 = vsel %vm1052, %v1056, %v1057
        %v1059 = vrot.slane %v821, 2
        %v1060 = vrot.slane %v823, 2
        %v1061 = vsel %vm1052, %v1059, %v1060
        %v1062 = vrot.slane %v833, 2
        %v1063 = vrot.slane %v837, 2
        %v1064 = vsel %vm1052, %v1062, %v1063
        %v1065 = vrot.slane %v846, 2
        %v1066 = vrot.slane %v848, 2
        %v1067 = vsel %vm1052, %v1065, %v1066
        %v1068 = vrot.slane %v862, 2
        %v1069 = vrot.slane %v871, 2
        %v1070 = vsel %vm1052, %v1068, %v1069
        %v1071 = vrot.slane %v887, 2
        %v1072 = vrot.slane %v889, 2
        %v1073 = vsel %vm1052, %v1071, %v1072
        %v1074 = vrot.slane %v896, 2
        %v1075 = vrot.slane %v899, 2
        %v1076 = vsel %vm1052, %v1074, %v1075
        %v1077 = vrot.slane %v842, 2
        %v1078 = vrot.slane %v843, 2
        %v1079 = vsel %vm1052, %v1077, %v1078
        %v1080 = vrot.slane %v784, 2
        %v1081 = vsel %vm1052, %v1054, %v1080
        %v1082 = vrot.slane %v814, 2
        %v1083 = vsel %vm1052, %v1057, %v1082
        %v1084 = vrot.slane %v825, 2
        %v1085 = vsel %vm1052, %v1060, %v1084
        %v1086 = vrot.slane %v841, 2
        %v1087 = vsel %vm1052, %v1063, %v1086
        %v1088 = vrot.slane %v850, 2
        %v1089 = vsel %vm1052, %v1066, %v1088
        %v1090 = vrot.slane %v880, 2
        %v1091 = vsel %vm1052, %v1069, %v1090
        %v1092 = vrot.slane %v891, 2
        %v1093 = vsel %vm1052, %v1072, %v1092
        %v1094 = vrot.slane %v902, 2
        %v1095 = vsel %vm1052, %v1075, %v1094
        %v1096 = vrot.slane %v844, 2
        %v1097 = vsel %vm1052, %v1078, %v1096
        %v1098 = vrot.slane %v785, 2
        %v1099 = vsel %vm1052, %v1080, %v1098
        %v1100 = vrot.slane %v817, 2
        %v1101 = vsel %vm1052, %v1082, %v1100
        %v1102 = vrot.slane %v824, 2
        %v1103 = vsel %vm1052, %v1084, %v1102
        %v1104 = vrot.slane %v840, 2
        %v1105 = vsel %vm1052, %v1086, %v1104
        %v1106 = vrot.slane %v849, 2
        %v1107 = vsel %vm1052, %v1088, %v1106
        %v1108 = vrot.slane %v885, 2
        %v1109 = vsel %vm1052, %v1090, %v1108
        %v1110 = vrot.slane %v893, 2
        %v1111 = vsel %vm1052, %v1092, %v1110
        %v1112 = vrot.slane %v907, 2
        %v1113 = vsel %vm1052, %v1094, %v1112
        %v1114 = vrot.slane %v853, 2
        %v1115 = vsel %vm1052, %v1096, %v1114
        %v1287 = vunpack.c.l.b16 %v908
        %v1288 = vunpack.c.l.b16 %v909
        %v1289 = vunpack.c.l.b16 %v910
        %v1290 = vunpack.c.l.b16 %v911
        %v1291 = vunpack.c.l.b16 %v912
        %v1292 = vunpack.c.l.b16 %v913
        %v1293 = vunpack.c.l.b16 %v914
        %v1294 = vunpack.c.l.b16 %v915
        %v1295 = vunpack.c.l.b16 %v916
        %v1296 = vunpack.c.l.b16 %v917
        %v1297 = vunpack.c.l.b16 %v918
        %v1298 = vunpack.c.l.b16 %v919
        %v1299 = vunpack.c.l.b16 %v920
        %v1300 = vunpack.c.l.b16 %v921
        %v1301 = vunpack.c.l.b16 %v922
        %v1302 = vunpack.c.l.b16 %v923
        %v1303 = vunpack.c.l.b16 %v924
        %v1304 = vunpack.c.l.b16 %v925
        %v1305 = vunpack.c.l.b16 %v926
        %v1306 = vunpack.c.l.b16 %v927
        %v1307 = vunpack.c.l.b16 %v928
        %v1308 = vunpack.c.l.b16 %v929
        %v1309 = vunpack.c.l.b16 %v930
        %v1310 = vunpack.c.l.b16 %v931
        %v1311 = vunpack.c.l.b16 %v932
        %v1312 = vunpack.c.l.b16 %v933
        %v1313 = vunpack.c.l.b16 %v934
        %v1314 = vunpack.c.l.b16 %v935
        %v1315 = vunpack.c.l.b16 %v936
        %v1316 = vunpack.c.l.b16 %v937
        %v1317 = vunpack.c.l.b16 %v938
        %v1318 = vunpack.c.l.b16 %v939
        %v1319 = vunpack.c.l.b16 %v940
        %v1320 = vunpack.c.l.b16 %v941
        %v1321 = vunpack.c.l.b16 %v942
        %v1322 = vunpack.c.l.b16 %v943
        %v1323 = vunpack.c.l.b16 %v944
        %v1324 = vunpack.c.l.b16 %v945
        %v1325 = vunpack.c.l.b16 %v946
        %v1326 = vunpack.c.l.b16 %v947
        %v1327 = vunpack.c.l.b16 %v948
        %v1328 = vunpack.c.l.b16 %v949
        %v1329 = vunpack.c.l.b16 %v950
        %v1330 = vunpack.c.l.b16 %v951
        %v1331 = vunpack.c.l.b16 %v952
        %v1332 = vunpack.c.l.b16 %v953
        %v1333 = vunpack.c.l.b16 %v954
        %v1334 = vunpack.c.l.b16 %v955
        %v1335 = vunpack.c.l.b16 %v956
        %v1336 = vunpack.c.l.b16 %v957
        %v1337 = vunpack.c.l.b16 %v958
        %v1338 = vunpack.c.l.b16 %v959
        %v1339 = vunpack.c.l.b16 %v960
        %v1340 = vunpack.c.l.b16 %v961
        %v1341 = vunpack.c.l.b16 %v962
        %v1342 = vunpack.c.l.b16 %v963
        %v1343 = vunpack.c.l.b16 %v964
        %v1344 = vunpack.c.l.b16 %v965
        %v1345 = vunpack.c.l.b16 %v966
        %v1346 = vunpack.c.l.b16 %v967
        %v1347 = vunpack.c.l.b16 %v968
        %v1348 = vunpack.c.l.b16 %v969
        %v1349 = vunpack.c.l.b16 %v970
        %v1350 = vunpack.c.l.b16 %v971
        %v1351 = vunpack.c.l.b16 %v972
        %v1352 = vunpack.c.l.b16 %v973
        %v1353 = vunpack.c.l.b16 %v974
        %v1354 = vunpack.c.l.b16 %v975
        %v1355 = vunpack.c.l.b16 %v976
        %v1356 = vunpack.c.l.b16 %v977
        %v1357 = vunpack.c.l.b16 %v978
        %v1358 = vunpack.c.l.b16 %v979
        %v1359 = vunpack.c.l.b16 %v980
        %v1360 = vunpack.c.l.b16 %v981
        %v1361 = vunpack.c.l.b16 %v982
        %v1362 = vunpack.c.l.b16 %v983
        %v1363 = vunpack.c.l.b16 %v984
        %v1364 = vunpack.c.l.b16 %v985
        %v1365 = vunpack.c.l.b16 %v986
        %v1366 = vunpack.c.l.b16 %v987
        %v1367 = vunpack.c.l.b16 %v988
        %v1368 = vunpack.c.l.b16 %v989
        %v1369 = vunpack.c.l.b16 %v990
        %v1370 = vunpack.c.l.b16 %v991
        %v1371 = vunpack.c.l.b16 %v992
        %v1372 = vunpack.c.l.b16 %v993
        %v1373 = vunpack.c.l.b16 %v994
        %v1374 = vunpack.c.l.b16 %v995
        %v1375 = vunpack.c.l.b16 %v996
        %v1376 = vunpack.c.l.b16 %v997
        %v1377 = vunpack.c.l.b16 %v998
        %v1378 = vunpack.c.l.b16 %v999
        %v1379 = vunpack.c.l.b16 %v1000
        %v1380 = vunpack.c.l.b16 %v1001
        %v1381 = vunpack.c.l.b16 %v1002
        %v1382 = vunpack.c.l.b16 %v1003
        %v1383 = vunpack.c.l.b16 %v1004
        %v1384 = vunpack.c.l.b16 %v1005
        %v1385 = vunpack.c.l.b16 %v1006
        %v1386 = vunpack.c.l.b16 %v1007
        %v1387 = vunpack.c.l.b16 %v1008
        %v1388 = vunpack.c.l.b16 %v1009
        %v1389 = vunpack.c.l.b16 %v1010
        %v1390 = vunpack.c.l.b16 %v1011
        %v1391 = vunpack.c.l.b16 %v1012
        %v1392 = vunpack.c.l.b16 %v1013
        %v1393 = vunpack.c.l.b16 %v1014
        %v1394 = vunpack.c.l.b16 %v1015
        %v1395 = vunpack.c.l.b16 %v1016
        %v1396 = vunpack.c.l.b16 %v1017
        %v1397 = vunpack.c.l.b16 %v1018
        %v1398 = vunpack.c.l.b16 %v1019
        %v1399 = vunpack.c.l.b16 %v1020
        %v1400 = vunpack.c.l.b16 %v1021
        %v1401 = vunpack.c.l.b16 %v1022
        %v1402 = vunpack.c.l.b16 %v1023
        %v1403 = vunpack.c.l.b16 %v1024
        %v1404 = vunpack.c.l.b16 %v1025
        %v1405 = vunpack.c.l.b16 %v1026
        %v1406 = vunpack.c.l.b16 %v1027
        %v1407 = vunpack.c.l.b16 %v1028
        %v1408 = vunpack.c.l.b16 %v1029
        %v1409 = vunpack.c.l.b16 %v1030
        %v1410 = vunpack.c.l.b16 %v1031
        %v1411 = vunpack.c.l.b16 %v1032
        %v1412 = vunpack.c.l.b16 %v1033
        %v1413 = vunpack.c.l.b16 %v1034
        %v1414 = vunpack.c.l.b16 %v1035
        %v1415 = vunpack.c.l.b16 %v1036
        %v1416 = vunpack.c.l.b16 %v1037
        %v1417 = vunpack.c.l.b16 %v1038
        %v1418 = vunpack.c.l.b16 %v1039
        %v1419 = vunpack.c.l.b16 %v1040
        %v1420 = vunpack.c.l.b16 %v1041
        %v1421 = vunpack.c.l.b16 %v1042
        %v1422 = vunpack.c.l.b16 %v1043
        %v1423 = vunpack.c.l.b16 %v1044
        %v1424 = vunpack.c.l.b16 %v1045
        %v1425 = vunpack.c.l.b16 %v1046
        %v1426 = vunpack.c.l.b16 %v1047
        %v1427 = vunpack.c.l.b16 %v1048
        %v1428 = vunpack.c.l.b16 %v1049
        %v1429 = vunpack.c.l.b16 %v1050
        %v1430 = vunpack.c.l.b16 %v1051
        %v1431 = vpack.c.b16 %v1288, %v1287
        %v1432 = vpack.c.b16 %v1290, %v1289
        %v1433 = vpack.c.b16 %v1292, %v1291
        %v1434 = vpack.c.b16 %v1294, %v1293
        %v1435 = vpack.c.b16 %v1296, %v1295
        %v1436 = vpack.c.b16 %v1298, %v1297
        %v1437 = vpack.c.b16 %v1300, %v1299
        %v1438 = vpack.c.b16 %v1302, %v1301
        %v1439 = vpack.c.b16 %v1304, %v1303
        %v1440 = vpack.c.b16 %v1306, %v1305
        %v1441 = vpack.c.b16 %v1308, %v1307
        %v1442 = vpack.c.b16 %v1310, %v1309
        %v1443 = vpack.c.b16 %v1312, %v1311
        %v1444 = vpack.c.b16 %v1314, %v1313
        %v1445 = vpack.c.b16 %v1316, %v1315
        %v1446 = vpack.c.b16 %v1318, %v1317
        %v1447 = vpack.c.b16 %v1320, %v1319
        %v1448 = vpack.c.b16 %v1322, %v1321
        %v1449 = vpack.c.b16 %v1324, %v1323
        %v1450 = vpack.c.b16 %v1326, %v1325
        %v1451 = vpack.c.b16 %v1328, %v1327
        %v1452 = vpack.c.b16 %v1330, %v1329
        %v1453 = vpack.c.b16 %v1332, %v1331
        %v1454 = vpack.c.b16 %v1334, %v1333
        %v1455 = vpack.c.b16 %v1336, %v1335
        %v1456 = vpack.c.b16 %v1338, %v1337
        %v1457 = vpack.c.b16 %v1340, %v1339
        %v1458 = vpack.c.b16 %v1342, %v1341
        %v1459 = vpack.c.b16 %v1344, %v1343
        %v1460 = vpack.c.b16 %v1346, %v1345
        %v1461 = vpack.c.b16 %v1348, %v1347
        %v1462 = vpack.c.b16 %v1350, %v1349
        %v1463 = vpack.c.b16 %v1352, %v1351
        %v1464 = vpack.c.b16 %v1354, %v1353
        %v1465 = vpack.c.b16 %v1356, %v1355
        %v1466 = vpack.c.b16 %v1358, %v1357
        %v1467 = vpack.c.b16 %v1360, %v1359
        %v1468 = vpack.c.b16 %v1362, %v1361
        %v1469 = vpack.c.b16 %v1364, %v1363
        %v1470 = vpack.c.b16 %v1366, %v1365
        %v1471 = vpack.c.b16 %v1368, %v1367
        %v1472 = vpack.c.b16 %v1370, %v1369
        %v1473 = vpack.c.b16 %v1372, %v1371
        %v1474 = vpack.c.b16 %v1374, %v1373
        %v1475 = vpack.c.b16 %v1376, %v1375
        %v1476 = vpack.c.b16 %v1378, %v1377
        %v1477 = vpack.c.b16 %v1380, %v1379
        %v1478 = vpack.c.b16 %v1382, %v1381
        %v1479 = vpack.c.b16 %v1384, %v1383
        %v1480 = vpack.c.b16 %v1386, %v1385
        %v1481 = vpack.c.b16 %v1388, %v1387
        %v1482 = vpack.c.b16 %v1390, %v1389
        %v1483 = vpack.c.b16 %v1392, %v1391
        %v1484 = vpack.c.b16 %v1394, %v1393
        %v1485 = vpack.c.b16 %v1396, %v1395
        %v1486 = vpack.c.b16 %v1398, %v1397
        %v1487 = vpack.c.b16 %v1400, %v1399
        %v1488 = vpack.c.b16 %v1402, %v1401
        %v1489 = vpack.c.b16 %v1404, %v1403
        %v1490 = vpack.c.b16 %v1406, %v1405
        %v1491 = vpack.c.b16 %v1408, %v1407
        %v1492 = vpack.c.b16 %v1410, %v1409
        %v1493 = vpack.c.b16 %v1412, %v1411
        %v1494 = vpack.c.b16 %v1414, %v1413
        %v1495 = vpack.c.b16 %v1416, %v1415
        %v1496 = vpack.c.b16 %v1418, %v1417
        %v1497 = vpack.c.b16 %v1420, %v1419
        %v1498 = vpack.c.b16 %v1422, %v1421
        %v1499 = vpack.c.b16 %v1424, %v1423
        %v1500 = vpack.c.b16 %v1426, %v1425
        %v1501 = vpack.c.b16 %v1428, %v1427
        %v1502 = vpack.c.b16 %v1430, %v1429
        %1575 = vmatpush.bf16.msra.mxu0 %v1438
        %1576 = vmatpush.bf16.msra.mxu0 %v1437
        %1577 = vmatpush.bf16.msra.mxu0 %v1436
        %1578 = vmatpush.bf16.msra.mxu0 %v1435
        %1579 = vmatpush.bf16.msra.mxu0 %v1434
        %1580 = vmatpush.bf16.msra.mxu0 %v1433
        %1581 = vmatpush.bf16.msra.mxu0 %v1432
        %1582 = vmatpush.bf16.msra.mxu0 %v1431
        %1583 = vmatmul.bf16.gmra.mxu0 %v1055
        %v1584 = vpop.f32.mrf.mxu0
        %v1585 = vadd.f32 0.0, %v1584
        %v1586 = vpop.f32.mrf.mxu0
        %v1587 = vadd.f32 0.0, %v1586
        %1588 = vmatmul.bf16.gmra.mxu0 %v1081
        %v1589 = vpop.f32.mrf.mxu0
        %v1590 = vadd.f32 0.0, %v1589
        %v1591 = vpop.f32.mrf.mxu0
        %v1592 = vadd.f32 0.0, %v1591
        %1593 = vmatmul.bf16.gmra.mxu0 %v1099
        %v1594 = vpop.f32.mrf.mxu0
        %v1595 = vadd.f32 0.0, %v1594
        %v1596 = vpop.f32.mrf.mxu0
        %v1597 = vadd.f32 0.0, %v1596
        %1598 = vdwg.mxu0
        %1599 = vmatpush.bf16.msra.mxu0 %v1446
        %1600 = vmatpush.bf16.msra.mxu0 %v1445
        %1601 = vmatpush.bf16.msra.mxu0 %v1444
        %1602 = vmatpush.bf16.msra.mxu0 %v1443
        %1603 = vmatpush.bf16.msra.mxu0 %v1442
        %1604 = vmatpush.bf16.msra.mxu0 %v1441
        %1605 = vmatpush.bf16.msra.mxu0 %v1440
        %1606 = vmatpush.bf16.msra.mxu0 %v1439
        %1607 = vmatmul.bf16.gmra.mxu0 %v1058
        %v1608 = vpop.f32.mrf.mxu0
        %v1609 = vadd.f32 %v1585, %v1608
        %v1610 = vpop.f32.mrf.mxu0
        %v1611 = vadd.f32 %v1587, %v1610
        %1612 = vmatmul.bf16.gmra.mxu0 %v1083
        %v1613 = vpop.f32.mrf.mxu0
        %v1614 = vadd.f32 %v1590, %v1613
        %v1615 = vpop.f32.mrf.mxu0
        %v1616 = vadd.f32 %v1592, %v1615
        %1617 = vmatmul.bf16.gmra.mxu0 %v1101
        %v1618 = vpop.f32.mrf.mxu0
        %v1619 = vadd.f32 %v1595, %v1618
        %v1620 = vpop.f32.mrf.mxu0
        %v1621 = vadd.f32 %v1597, %v1620
        %1622 = vdwg.mxu0
        %1623 = vmatpush.bf16.msra.mxu0 %v1454
        %1624 = vmatpush.bf16.msra.mxu0 %v1453
        %1625 = vmatpush.bf16.msra.mxu0 %v1452
        %1626 = vmatpush.bf16.msra.mxu0 %v1451
        %1627 = vmatpush.bf16.msra.mxu0 %v1450
        %1628 = vmatpush.bf16.msra.mxu0 %v1449
        %1629 = vmatpush.bf16.msra.mxu0 %v1448
        %1630 = vmatpush.bf16.msra.mxu0 %v1447
        %1631 = vmatmul.bf16.gmra.mxu0 %v1061
        %v1632 = vpop.f32.mrf.mxu0
        %v1633 = vadd.f32 %v1609, %v1632
        %v1634 = vpop.f32.mrf.mxu0
        %v1635 = vadd.f32 %v1611, %v1634
        %1636 = vmatmul.bf16.gmra.mxu0 %v1085
        %v1637 = vpop.f32.mrf.mxu0
        %v1638 = vadd.f32 %v1614, %v1637
        %v1639 = vpop.f32.mrf.mxu0
        %v1640 = vadd.f32 %v1616, %v1639
        %1641 = vmatmul.bf16.gmra.mxu0 %v1103
        %v1642 = vpop.f32.mrf.mxu0
        %v1643 = vadd.f32 %v1619, %v1642
        %v1644 = vpop.f32.mrf.mxu0
        %v1645 = vadd.f32 %v1621, %v1644
        %1646 = vdwg.mxu0
        %1647 = vmatpush.bf16.msra.mxu0 %v1462
        %1648 = vmatpush.bf16.msra.mxu0 %v1461
        %1649 = vmatpush.bf16.msra.mxu0 %v1460
        %1650 = vmatpush.bf16.msra.mxu0 %v1459
        %1651 = vmatpush.bf16.msra.mxu0 %v1458
        %1652 = vmatpush.bf16.msra.mxu0 %v1457
        %1653 = vmatpush.bf16.msra.mxu0 %v1456
        %1654 = vmatpush.bf16.msra.mxu0 %v1455
        %1655 = vmatmul.bf16.gmra.mxu0 %v1064
        %v1656 = vpop.f32.mrf.mxu0
        %v1657 = vadd.f32 %v1633, %v1656
        %v1658 = vpop.f32.mrf.mxu0
        %v1659 = vadd.f32 %v1635, %v1658
        %1660 = vmatmul.bf16.gmra.mxu0 %v1087
        %v1661 = vpop.f32.mrf.mxu0
        %v1662 = vadd.f32 %v1638, %v1661
        %v1663 = vpop.f32.mrf.mxu0
        %v1664 = vadd.f32 %v1640, %v1663
        %1665 = vmatmul.bf16.gmra.mxu0 %v1105
        %v1666 = vpop.f32.mrf.mxu0
        %v1667 = vadd.f32 %v1643, %v1666
        %v1668 = vpop.f32.mrf.mxu0
        %v1669 = vadd.f32 %v1645, %v1668
        %1670 = vdwg.mxu0
        %1671 = vmatpush.bf16.msra.mxu0 %v1470
        %1672 = vmatpush.bf16.msra.mxu0 %v1469
        %1673 = vmatpush.bf16.msra.mxu0 %v1468
        %1674 = vmatpush.bf16.msra.mxu0 %v1467
        %1675 = vmatpush.bf16.msra.mxu0 %v1466
        %1676 = vmatpush.bf16.msra.mxu0 %v1465
        %1677 = vmatpush.bf16.msra.mxu0 %v1464
        %1678 = vmatpush.bf16.msra.mxu0 %v1463
        %1679 = vmatmul.bf16.gmra.mxu0 %v1067
        %v1680 = vpop.f32.mrf.mxu0
        %v1681 = vadd.f32 %v1657, %v1680
        %v1682 = vpop.f32.mrf.mxu0
        %v1683 = vadd.f32 %v1659, %v1682
        %1684 = vmatmul.bf16.gmra.mxu0 %v1089
        %v1685 = vpop.f32.mrf.mxu0
        %v1686 = vadd.f32 %v1662, %v1685
        %v1687 = vpop.f32.mrf.mxu0
        %v1688 = vadd.f32 %v1664, %v1687
        %1689 = vmatmul.bf16.gmra.mxu0 %v1107
        %v1690 = vpop.f32.mrf.mxu0
        %v1691 = vadd.f32 %v1667, %v1690
        %v1692 = vpop.f32.mrf.mxu0
        %v1693 = vadd.f32 %v1669, %v1692
        %1694 = vdwg.mxu0
        %1695 = vmatpush.bf16.msra.mxu0 %v1478
        %1696 = vmatpush.bf16.msra.mxu0 %v1477
        %1697 = vmatpush.bf16.msra.mxu0 %v1476
        %1698 = vmatpush.bf16.msra.mxu0 %v1475
        %1699 = vmatpush.bf16.msra.mxu0 %v1474
        %1700 = vmatpush.bf16.msra.mxu0 %v1473
        %1701 = vmatpush.bf16.msra.mxu0 %v1472
        %1702 = vmatpush.bf16.msra.mxu0 %v1471
        %1703 = vmatmul.bf16.gmra.mxu0 %v1070
        %v1704 = vpop.f32.mrf.mxu0
        %v1705 = vadd.f32 %v1681, %v1704
        %v1706 = vpop.f32.mrf.mxu0
        %v1707 = vadd.f32 %v1683, %v1706
        %1708 = vmatmul.bf16.gmra.mxu0 %v1091
        %v1709 = vpop.f32.mrf.mxu0
        %v1710 = vadd.f32 %v1686, %v1709
        %v1711 = vpop.f32.mrf.mxu0
        %v1712 = vadd.f32 %v1688, %v1711
        %1713 = vmatmul.bf16.gmra.mxu0 %v1109
        %v1714 = vpop.f32.mrf.mxu0
        %v1715 = vadd.f32 %v1691, %v1714
        %v1716 = vpop.f32.mrf.mxu0
        %v1717 = vadd.f32 %v1693, %v1716
        %1718 = vdwg.mxu0
        %1719 = vmatpush.bf16.msra.mxu0 %v1486
        %1720 = vmatpush.bf16.msra.mxu0 %v1485
        %1721 = vmatpush.bf16.msra.mxu0 %v1484
        %1722 = vmatpush.bf16.msra.mxu0 %v1483
        %1723 = vmatpush.bf16.msra.mxu0 %v1482
        %1724 = vmatpush.bf16.msra.mxu0 %v1481
        %1725 = vmatpush.bf16.msra.mxu0 %v1480
        %1726 = vmatpush.bf16.msra.mxu0 %v1479
        %1727 = vmatmul.bf16.gmra.mxu0 %v1073
        %v1728 = vpop.f32.mrf.mxu0
        %v1729 = vadd.f32 %v1705, %v1728
        %v1730 = vpop.f32.mrf.mxu0
        %v1731 = vadd.f32 %v1707, %v1730
        %1732 = vmatmul.bf16.gmra.mxu0 %v1093
        %v1733 = vpop.f32.mrf.mxu0
        %v1734 = vadd.f32 %v1710, %v1733
        %v1735 = vpop.f32.mrf.mxu0
        %v1736 = vadd.f32 %v1712, %v1735
        %1737 = vmatmul.bf16.gmra.mxu0 %v1111
        %v1738 = vpop.f32.mrf.mxu0
        %v1739 = vadd.f32 %v1715, %v1738
        %v1740 = vpop.f32.mrf.mxu0
        %v1741 = vadd.f32 %v1717, %v1740
        %1742 = vdwg.mxu0
        %1743 = vmatpush.bf16.msra.mxu0 %v1494
        %1744 = vmatpush.bf16.msra.mxu0 %v1493
        %1745 = vmatpush.bf16.msra.mxu0 %v1492
        %1746 = vmatpush.bf16.msra.mxu0 %v1491
        %1747 = vmatpush.bf16.msra.mxu0 %v1490
        %1748 = vmatpush.bf16.msra.mxu0 %v1489
        %1749 = vmatpush.bf16.msra.mxu0 %v1488
        %1750 = vmatpush.bf16.msra.mxu0 %v1487
        %1751 = vmatmul.bf16.gmra.mxu0 %v1076
        %v1752 = vpop.f32.mrf.mxu0
        %v1753 = vadd.f32 %v1729, %v1752
        %v1754 = vpop.f32.mrf.mxu0
        %v1755 = vadd.f32 %v1731, %v1754
        %1756 = vmatmul.bf16.gmra.mxu0 %v1095
        %v1757 = vpop.f32.mrf.mxu0
        %v1758 = vadd.f32 %v1734, %v1757
        %v1759 = vpop.f32.mrf.mxu0
        %v1760 = vadd.f32 %v1736, %v1759
        %1761 = vmatmul.bf16.gmra.mxu0 %v1113
        %v1762 = vpop.f32.mrf.mxu0
        %v1763 = vadd.f32 %v1739, %v1762
        %v1764 = vpop.f32.mrf.mxu0
        %v1765 = vadd.f32 %v1741, %v1764
        %1766 = vdwg.mxu0
        %1767 = vmatpush.bf16.msra.mxu0 %v1502
        %1768 = vmatpush.bf16.msra.mxu0 %v1501
        %1769 = vmatpush.bf16.msra.mxu0 %v1500
        %1770 = vmatpush.bf16.msra.mxu0 %v1499
        %1771 = vmatpush.bf16.msra.mxu0 %v1498
        %1772 = vmatpush.bf16.msra.mxu0 %v1497
        %1773 = vmatpush.bf16.msra.mxu0 %v1496
        %1774 = vmatpush.bf16.msra.mxu0 %v1495
        %1775 = vmatmul.bf16.gmra.mxu0 %v1079
        %v1776 = vpop.f32.mrf.mxu0
        %v1777 = vadd.f32 %v1753, %v1776
        %v1778 = vpop.f32.mrf.mxu0
        %v1779 = vadd.f32 %v1755, %v1778
        %1780 = vmatmul.bf16.gmra.mxu0 %v1097
        %v1781 = vpop.f32.mrf.mxu0
        %v1782 = vadd.f32 %v1758, %v1781
        %v1783 = vpop.f32.mrf.mxu0
        %v1784 = vadd.f32 %v1760, %v1783
        %1785 = vmatmul.bf16.gmra.mxu0 %v1115
        %v1786 = vpop.f32.mrf.mxu0
        %v1787 = vadd.f32 %v1763, %v1786
        %v1788 = vpop.f32.mrf.mxu0
        %v1789 = vadd.f32 %v1765, %v1788
        %1790 = vdwg.mxu0
        %v1791 = vld [vmem:[%s6] sm:$0x1]
        %v1793 = vperm.slane %v1791, 0
        %v1795 = vmul.f32 %v1777, %v1793
        %v1796 = vmul.f32 %v1779, %v1793
        %v1797 = vmul.f32 %v1782, %v1793
        %v1798 = vmul.f32 %v1784, %v1793
        %v1799 = vmul.f32 %v1787, %v1793
        %v1800 = vmul.f32 %v1789, %v1793
        %v1801 = vld [vmem:[%s7] sm:$0x1]
        %v1803 = vperm.slane %v1801, 0
        %v1805 = vadd.f32 %v1795, %v1803
        %v1806 = vadd.f32 %v1796, %v1803
        %v1807 = vadd.f32 %v1797, %v1803
        %v1808 = vadd.f32 %v1798, %v1803
        %v1809 = vadd.f32 %v1799, %v1803
        %v1810 = vadd.f32 %v1800, %v1803
        %v1811 = vmax.f32 %v1805, 0.0
        %v1812 = vmax.f32 %v1806, 0.0
        %v1813 = vmax.f32 %v1807, 0.0
        %v1814 = vmax.f32 %v1808, 0.0
        %v1815 = vmax.f32 %v1809, 0.0
        %v1816 = vmax.f32 %v1810, 0.0
        %v1817 = vpack.c.bf16 %v1812, %v1811
        %v1818 = vpack.c.bf16 %v1814, %v1813
        %v1819 = vpack.c.bf16 %v1816, %v1815
        %v1820 = vld [vmem:[#allocation10] sm:$0xf]
        %v1821 = vld [vmem:[#allocation10 + $0x4] sm:$0xf]
        %v1822 = vld [vmem:[#allocation10 + $0x8] sm:$0xf]
        %v1823 = vld [vmem:[#allocation10 + $0xc] sm:$0xf]
        %v1824 = vld [vmem:[#allocation10 + $0x10] sm:$0xf]
        %v1825 = vld [vmem:[#allocation10 + $0x14] sm:$0xf]
        %v1826 = vld [vmem:[#allocation10 + $0x18] sm:$0xf]
        %v1827 = vld [vmem:[#allocation10 + $0x1c] sm:$0xf]
        %v1828 = vld [vmem:[#allocation10 + $0x20] sm:$0xf]
        %v1829 = vld [vmem:[#allocation10 + $0x24] sm:$0xf]
        %v1830 = vld [vmem:[#allocation10 + $0x28] sm:$0xf]
        %v1831 = vld [vmem:[#allocation10 + $0x2c] sm:$0xf]
        %v1832 = vld [vmem:[#allocation10 + $0x30] sm:$0xf]
        %v1833 = vld [vmem:[#allocation10 + $0x34] sm:$0xf]
        %v1834 = vld [vmem:[#allocation10 + $0x38] sm:$0xf]
        %v1835 = vld [vmem:[#allocation10 + $0x3c] sm:$0xf]
        %v1852 = vunpack.c.l.b16 %v1820
        %v1853 = vunpack.c.l.b16 %v1821
        %v1854 = vunpack.c.l.b16 %v1822
        %v1855 = vunpack.c.l.b16 %v1823
        %v1856 = vunpack.c.l.b16 %v1824
        %v1857 = vunpack.c.l.b16 %v1825
        %v1858 = vunpack.c.l.b16 %v1826
        %v1859 = vunpack.c.l.b16 %v1827
        %v1860 = vunpack.c.l.b16 %v1828
        %v1861 = vunpack.c.l.b16 %v1829
        %v1862 = vunpack.c.l.b16 %v1830
        %v1863 = vunpack.c.l.b16 %v1831
        %v1864 = vunpack.c.l.b16 %v1832
        %v1865 = vunpack.c.l.b16 %v1833
        %v1866 = vunpack.c.l.b16 %v1834
        %v1867 = vunpack.c.l.b16 %v1835
        %v1868 = vpack.c.b16 %v1853, %v1852
        %v1869 = vpack.c.b16 %v1855, %v1854
        %v1870 = vpack.c.b16 %v1857, %v1856
        %v1871 = vpack.c.b16 %v1859, %v1858
        %v1872 = vpack.c.b16 %v1861, %v1860
        %v1873 = vpack.c.b16 %v1863, %v1862
        %v1874 = vpack.c.b16 %v1865, %v1864
        %v1875 = vpack.c.b16 %v1867, %v1866
        %1884 = vmatpush.bf16.msra.mxu0 %v1875
        %1885 = vmatpush.bf16.msra.mxu0 %v1874
        %1886 = vmatpush.bf16.msra.mxu0 %v1873
        %1887 = vmatpush.bf16.msra.mxu0 %v1872
        %1888 = vmatpush.bf16.msra.mxu0 %v1871
        %1889 = vmatpush.bf16.msra.mxu0 %v1870
        %1890 = vmatpush.bf16.msra.mxu0 %v1869
        %1891 = vmatpush.bf16.msra.mxu0 %v1868
        %1892 = vmatmul.bf16.gmra.mxu0 %v1817
        %v1893 = vpop.f32.mrf.mxu0
        %v1894 = vadd.f32 0.0, %v1893
        %v1895 = vpop.f32.mrf.mxu0
        %v1896 = vadd.f32 0.0, %v1895
        %1897 = vmatmul.bf16.gmra.mxu0 %v1818
        %v1898 = vpop.f32.mrf.mxu0
        %v1899 = vadd.f32 0.0, %v1898
        %v1900 = vpop.f32.mrf.mxu0
        %v1901 = vadd.f32 0.0, %v1900
        %1902 = vmatmul.bf16.gmra.mxu0 %v1819
        %v1903 = vpop.f32.mrf.mxu0
        %v1904 = vadd.f32 0.0, %v1903
        %v1905 = vpop.f32.mrf.mxu0
        %v1906 = vadd.f32 0.0, %v1905
        %1907 = vdwg.mxu0
        %v1908 = vld [vmem:[%s9] sm:$0x1]
        %v1910 = vperm.slane %v1908, 0
        %v1912 = vmul.f32 %v1894, %v1910
        %v1913 = vmul.f32 %v1896, %v1910
        %v1914 = vmul.f32 %v1899, %v1910
        %v1915 = vmul.f32 %v1901, %v1910
        %v1916 = vmul.f32 %v1904, %v1910
        %v1917 = vmul.f32 %v1906, %v1910
        %v1918 = vld [vmem:[%s10] sm:$0x1]
        %v1920 = vperm.slane %v1918, 0
        %v1922 = vadd.f32 %v1912, %v1920
        %v1923 = vadd.f32 %v1913, %v1920
        %v1924 = vadd.f32 %v1914, %v1920
        %v1925 = vadd.f32 %v1915, %v1920
        %v1926 = vadd.f32 %v1916, %v1920
        %v1927 = vadd.f32 %v1917, %v1920
        %v1928 = vunpack.c.l.bf16 %v522
        %v1929 = vunpack.c.l.bf16 %v523
        %v1930 = vunpack.c.l.bf16 %v524
        %v1931 = vunpack.c.l.bf16 %v525
        %v1932 = vunpack.c.l.bf16 %v526
        %v1933 = vunpack.c.l.bf16 %v527
        %v1934 = vadd.f32 %v1922, %v1928
        %v1935 = vadd.f32 %v1923, %v1929
        %v1936 = vadd.f32 %v1924, %v1930
        %v1937 = vadd.f32 %v1925, %v1931
        %v1938 = vadd.f32 %v1926, %v1932
        %v1939 = vadd.f32 %v1927, %v1933
        %v1940 = vmax.f32 %v1934, 0.0
        %v1941 = vmax.f32 %v1935, 0.0
        %v1942 = vmax.f32 %v1936, 0.0
        %v1943 = vmax.f32 %v1937, 0.0
        %v1944 = vmax.f32 %v1938, 0.0
        %v1945 = vmax.f32 %v1939, 0.0
        %v1946 = vpack.c.bf16 %v1940, %v1940
        %v1947 = vpack.c.bf16 %v1941, %v1941
        %v1948 = vpack.c.bf16 %v1942, %v1942
        %v1949 = vpack.c.bf16 %v1943, %v1943
        %v1950 = vpack.c.bf16 %v1944, %v1944
        %v1951 = vpack.c.bf16 %v1945, %v1945
        %1952 = vst [vmem:[%s519] sm:$0xf] %v1946
        %1953 = vst [vmem:[%s519 + $0x4] sm:$0xf] %v1947
        %1954 = vst [vmem:[%s519 + $0x8] sm:$0xf] %v1948
        %1955 = vst [vmem:[%s519 + $0xc] sm:$0xf] %v1949
        %1956 = vst [vmem:[%s519 + $0x10] sm:$0xf] %v1950
        %1957 = vst [vmem:[%s519 + $0x14] sm:$0xf] %v1951
        %s1958 = sand.u32 %s299, 1
        %s1959 = scalar_lea.sflag [#allocation4], %s1958
        %s1960 = sand.u32 %s299, 1
        %s1961 = smul.addr %s1960, 24
        %s1962 = scalar_lea.vmem [#allocation11], %s1961
        // Predicated region
        $region85: #{tpu_custom_call.1} parent=63 // pred_check
          %p1963 = pneg %p309
        $region86: #{tpu_custom_call.1} parent=63 // pred_check_branch
          %1965 = sbr.rel (%p1963) target = $region88
        $region87: #{tpu_custom_call.1} parent=63 // pred_region
          %s1966 = smul.u32 6, %s37
          %1968 = vsyncadd %s1959, 0
          %s1969 = smul.addr %s36, 18
          %s1970 = sadd.s32 %s1966, %s1969
          %s1971 = smul.addr %s1970, 4
          %s1972 = scalar_lea.hbm %s11, %s1971
          %s1973 = sshll.u32 %s1962, 4
          %s1974 = int_to_ptr.vmem [resolvable:$true] %s1973
          %s1975 = sshll.u32 %s1972, 4
          %s1976 = int_to_ptr.hbm [resolvable:$true] %s1975
          %1981 = dma.vmem_to_hbm [thread:$0]  %s1974, 384, %s1976, %s1959, 64, 64, 4
        $region88: #{tpu_custom_call.1} parent=63 // pred_fallthru
          _
      $region64: #{tpu_custom_call.1} parent=5 // pred_fallthru
        _
      %p1982 = scmp.le.s32.totalorder 2, %s27
      // Predicated region
      $region89: #{tpu_custom_call.1} parent=5 // pred_check
        %p1983 = pneg %p1982
      $region90: #{tpu_custom_call.1} parent=5 // pred_check_branch
        %1985 = sbr.rel (%p1983) target = $region92
      $region91: #{tpu_custom_call.1} parent=5 // pred_region
        %s1986 = ssub.s32 %s27, 2
        // Predicated region
        $region93: #{tpu_custom_call.1} parent=91 // pred_check
          %p1987 = pneg %p315
        $region94: #{tpu_custom_call.1} parent=91 // pred_check_branch
          %1989 = sbr.rel (%p1987) target = $region96
        $region95: #{tpu_custom_call.1} parent=91 // pred_region
          %s1990 = sand.u32 %s300, 1
          %s1991 = scalar_lea.sflag [#allocation4], %s1990
          %s1992 = sand.u32 %s300, 1
          %s1993 = smul.addr %s1992, 24
          %s1994 = scalar_lea.vmem [#allocation11], %s1993
          %1996 = dma.done %s1991, 384
        $region96: #{tpu_custom_call.1} parent=91 // pred_fallthru
          _
      $region92: #{tpu_custom_call.1} parent=5 // pred_fallthru
        _
    $region6: #{tpu_custom_call.1} parent=1 // loop_footer
      %s31 = sadd.s32 1, %s27
    $region7: #{tpu_custom_call.1} parent=1 // loop_footer_branch
      %26 = sbr.rel target = $region3
    $region8: #{tpu_custom_call.1} parent=1 // loop_exit
      _
    %1997 = vsyncpa [#allocation3], 1
    %s1998 = scalar_lea.sflag [#allocation3], 1
    %1999 = vsyncpa %s1998, 1
    %2000 = vsyncpa [#allocation6], 1
    %s2001 = scalar_lea.sflag [#allocation6], 1
    %2002 = vsyncpa %s2001, 1
    %2003 = vsyncpa [#allocation9], 1
    %2004 = vsyncpa [#allocation4], 1
    %s2005 = scalar_lea.sflag [#allocation4], 1
    %2006 = vsyncpa %s2005, 1

// kernel: tpu_custom_call.1
$region0: #{tpu_custom_call.1}
  #allocation0 [shape = 'u32[]', space=smem, size = 0x4, offset = 0x4, fixed_abs, tag = 'smem constant byte address 0x4 - core index']
  #allocation1 [shape = 'u32[72,128]{1,0:T(1,128)}', space=vmem, size = 0x9000, scoped, tag = 'internal scratch']
  %s0 = inlined_call_operand.hbm [shape: bf16[2,144,128], index: 0, kind: input, shape index: {}]
  %s1 = inlined_call_operand.hbm [shape: bf16[2,3,16,128], index: 1, kind: input, shape index: {}]
  %s2 = inlined_call_operand.hbm [shape: bf16[128,128], index: 2, kind: input, shape index: {}]
  %s3 = inlined_call_operand.vmem [shape: f32[1,128], index: 3, kind: input, shape index: {}]
  %s4 = inlined_call_operand.vmem [shape: f32[1,128], index: 4, kind: input, shape index: {}]
  %s5 = inlined_call_operand.hbm [shape: bf16[1152,128], index: 5, kind: input, shape index: {}]
  %s6 = inlined_call_operand.vmem [shape: f32[1,128], index: 6, kind: input, shape index: {}]
  %s7 = inlined_call_operand.vmem [shape: f32[1,128], index: 7, kind: input, shape index: {}]
  %s8 = inlined_call_operand.hbm [shape: bf16[128,128], index: 8, kind: input, shape index: {}]
  %s9 = inlined_call_operand.vmem [shape: f32[1,128], index: 9, kind: input, shape index: {}]
  %s10 = inlined_call_operand.vmem [shape: f32[1,128], index: 10, kind: input, shape index: {}]
  %s11 = inlined_call_operand.hbm [shape: bf16[2,144,128], index: 11, kind: output, shape index: {}]
  %s12 = sld [smem:[#allocation0]]
  $region97: #{tpu_custom_call.1} parent=0
    _
  %s14 = ssub.s32 1, %s12
  %s15 = scalar_select 0, %s14, %s12
  $region1: #{tpu_custom_call.1} parent=0
    #allocation2 [shape = 'u8[24576]{0}', space=vmem, size = 0x6000, scoped, tag = 'input window, operand 0']
    #allocation3 [shape = 's32[2]{0}', space=sflag, size = 0x8, scoped, tag = 'scoped memory for tpu_custom_call.1']
    #allocation4 [shape = 's32[2]{0}', space=sflag, size = 0x8, scoped, tag = 'scoped memory for tpu_custom_call.1']
    #allocation5 [shape = 'u8[8192]{0}', space=vmem, size = 0x2000, scoped, tag = 'input window, operand 1']
    #allocation6 [shape = 's32[2]{0}', space=sflag, size = 0x8, scoped, tag = 'scoped memory for tpu_custom_call.1']
    #allocation7 [shape = 'u8[32768]{0}', space=vmem, size = 0x8000, scoped, tag = 'input window, operand 2, single buffered']
    #allocation8 [shape = 'u8[294912]{0}', space=vmem, size = 0x48000, scoped, tag = 'input window, operand 5, single buffered']
    #allocation9 [shape = 's32[1]{0}', space=sflag, size = 0x4, scoped, tag = 'scoped memory for tpu_custom_call.1']
    #allocation10 [shape = 'u8[32768]{0}', space=vmem, size = 0x8000, scoped, tag = 'input window, operand 8, single buffered']
    #allocation11 [shape = 'u8[24576]{0}', space=vmem, size = 0x6000, scoped, tag = 'output window, operand 0']
    %16 = vsyncpa [#allocation3], 0
    %s17 = scalar_lea.sflag [#allocation3], 1
    %18 = vsyncpa %s17, 0
    %19 = vsyncpa [#allocation6], 0
    %s20 = scalar_lea.sflag [#allocation6], 1
    %21 = vsyncpa %s20, 0
    %22 = vsyncpa [#allocation9], 0
    %23 = vsyncpa [#allocation4], 0
    %s24 = scalar_lea.sflag [#allocation4], 1
    %25 = vsyncpa %s24, 0
    loop: start=0, step=1, limit=8
    $region2: #{tpu_custom_call.1} parent=1 // loop_pre_header
      _
    $region3: #{tpu_custom_call.1} parent=1 // loop_header
      %s27 = sphi 0, %s31
      %p28 = scmp.ge.s32.totalorder %s27, 8
      %s34 = sphi 0, %s46
      %s35 = sphi 0, %s42
      %s36 = sphi 0, %s34
      %s37 = sphi 0, %s35
      %s38 = sphi 0, %s36
      %s39 = sphi 0, %s37
      %s51 = sphi 0, %s53
      %s54 = sphi 0, %s51
      %s55 = sphi 0, %s54
      %s71 = sphi 0, %s55
      %s79 = sphi 0, %s81
      %s82 = sphi 0, %s79
      %s83 = sphi 0, %s82
      %s99 = sphi 0, %s83
      %s103 = sphi 0, %s103
      %s105 = sphi 0, %s103
      %s106 = sphi 0, %s105
      %s120 = sphi 0, %s106
      %s124 = sphi 0, %s124
      %s126 = sphi 0, %s124
      %s127 = sphi 0, %s126
      %s141 = sphi 0, %s127
      %s145 = sphi 0, %s145
      %s147 = sphi 0, %s145
      %s148 = sphi 0, %s147
      %s162 = sphi 0, %s148
      %s166 = sphi 0, %s166
      %s168 = sphi 0, %s166
      %s169 = sphi 0, %s168
      %s183 = sphi 0, %s169
      %s187 = sphi 0, %s187
      %s189 = sphi 0, %s187
      %s190 = sphi 0, %s189
      %s204 = sphi 0, %s190
      %s208 = sphi 0, %s208
      %s210 = sphi 0, %s208
      %s211 = sphi 0, %s210
      %s225 = sphi 0, %s211
      %s229 = sphi 0, %s229
      %s231 = sphi 0, %s229
      %s232 = sphi 0, %s231
      %s246 = sphi 0, %s232
      %s250 = sphi 0, %s250
      %s252 = sphi 0, %s250
      %s253 = sphi 0, %s252
      %s267 = sphi 0, %s253
      %s271 = sphi 0, %s271
      %s273 = sphi 0, %s271
      %s274 = sphi 0, %s273
      %s288 = sphi 0, %s274
      %s296 = sphi 0, %s298
      %s299 = sphi 0, %s296
      %s300 = sphi 0, %s299
      %s316 = sphi 0, %s300
    $region4: #{tpu_custom_call.1} parent=1 // loop_header_branch
      %30 = sbr.rel (%p28) target = $region8
    $region5: #{tpu_custom_call.1} parent=1 // loop_body
      %s32 = ssub.s32 %s27, 1
      %s33 = ssub.s32 %s27, 2
      %s40 = sadd.s32 1, %s35
      %p41 = scmp.ge.s32.totalorder %s40, 3
      %s42 = scalar_select %p41, 0, %s40
      %s43 = sadd.s32 1, %s34
      %s44 = scalar_select %p41, %s43, %s34
      %p45 = scmp.ge.s32.totalorder %s44, 2
      %s46 = scalar_select %p45, 0, %s44
      %s47 = ssub.s32 %s34, %s46
      %s48 = ssub.s32 %s35, %s42
      %s49 = sor.u32 %s47, %s48
      %p50 = scmp.eq.s32.totalorder %s49, 0
      %s52 = sadd.s32 %s51, 1
      %s53 = scalar_select %p50, %s51, %s52
      %p56 = pneg %p50
      %p57 = scmp.eq.s32.totalorder %s27, 5
      %p58 = por %p56, %p57
      %p59 = scmp.ne.s32.totalorder %s51, %s54
      %p60 = scmp.eq.s32.totalorder %s27, 0
      %p61 = por %p59, %p60
      %p62 = scmp.ne.s32.totalorder %s51, %s54
      %p63 = scmp.eq.s32.totalorder %s32, 5
      %p64 = por %p62, %p63
      %p65 = scmp.ne.s32.totalorder %s54, %s55
      %p66 = scmp.eq.s32.totalorder %s32, 0
      %p67 = por %p65, %p66
      %p68 = scmp.ne.s32.totalorder %s54, %s55
      %p69 = scmp.eq.s32.totalorder %s33, 5
      %p70 = por %p68, %p69
      %p72 = scmp.ne.s32.totalorder %s55, %s71
      %p73 = scmp.eq.s32.totalorder %s33, 0
      %p74 = por %p72, %p73
      %s75 = ssub.s32 %s34, %s46
      %s76 = ssub.s32 %s35, %s42
      %s77 = sor.u32 %s75, %s76
      %p78 = scmp.eq.s32.totalorder %s77, 0
      %s80 = sadd.s32 %s79, 1
      %s81 = scalar_select %p78, %s79, %s80
      %p84 = pneg %p78
      %p85 = scmp.eq.s32.totalorder %s27, 5
      %p86 = por %p84, %p85
      %p87 = scmp.ne.s32.totalorder %s79, %s82
      %p88 = scmp.eq.s32.totalorder %s27, 0
      %p89 = por %p87, %p88
      %p90 = scmp.ne.s32.totalorder %s79, %s82
      %p91 = scmp.eq.s32.totalorder %s32, 5
      %p92 = por %p90, %p91
      %p93 = scmp.ne.s32.totalorder %s82, %s83
      %p94 = scmp.eq.s32.totalorder %s32, 0
      %p95 = por %p93, %p94
      %p96 = scmp.ne.s32.totalorder %s82, %s83
      %p97 = scmp.eq.s32.totalorder %s33, 5
      %p98 = por %p96, %p97
      %p100 = scmp.ne.s32.totalorder %s83, %s99
      %p101 = scmp.eq.s32.totalorder %s33, 0
      %p102 = por %p100, %p101
      %s104 = sadd.s32 %s103, 1
      %p107 = scmp.eq.s32.totalorder %s27, 5
      %p108 = scmp.ne.s32.totalorder %s103, %s105
      %p109 = scmp.eq.s32.totalorder %s27, 0
      %p110 = por %p108, %p109
      %p111 = scmp.ne.s32.totalorder %s103, %s105
      %p112 = scmp.eq.s32.totalorder %s32, 5
      %p113 = por %p111, %p112
      %p114 = scmp.ne.s32.totalorder %s105, %s106
      %p115 = scmp.eq.s32.totalorder %s32, 0
      %p116 = por %p114, %p115
      %p117 = scmp.ne.s32.totalorder %s105, %s106
      %p118 = scmp.eq.s32.totalorder %s33, 5
      %p119 = por %p117, %p118
      %p121 = scmp.ne.s32.totalorder %s106, %s120
      %p122 = scmp.eq.s32.totalorder %s33, 0
      %p123 = por %p121, %p122
      %s125 = sadd.s32 %s124, 1
      %p128 = scmp.eq.s32.totalorder %s27, 5
      %p129 = scmp.ne.s32.totalorder %s124, %s126
      %p130 = scmp.eq.s32.totalorder %s27, 0
      %p131 = por %p129, %p130
      %p132 = scmp.ne.s32.totalorder %s124, %s126
      %p133 = scmp.eq.s32.totalorder %s32, 5
      %p134 = por %p132, %p133
      %p135 = scmp.ne.s32.totalorder %s126, %s127
      %p136 = scmp.eq.s32.totalorder %s32, 0
      %p137 = por %p135, %p136
      %p138 = scmp.ne.s32.totalorder %s126, %s127
      %p139 = scmp.eq.s32.totalorder %s33, 5
      %p140 = por %p138, %p139
      %p142 = scmp.ne.s32.totalorder %s127, %s141
      %p143 = scmp.eq.s32.totalorder %s33, 0
      %p144 = por %p142, %p143
      %s146 = sadd.s32 %s145, 1
      %p149 = scmp.eq.s32.totalorder %s27, 5
      %p150 = scmp.ne.s32.totalorder %s145, %s147
      %p151 = scmp.eq.s32.totalorder %s27, 0
      %p152 = por %p150, %p151
      %p153 = scmp.ne.s32.totalorder %s145, %s147
      %p154 = scmp.eq.s32.totalorder %s32, 5
      %p155 = por %p153, %p154
      %p156 = scmp.ne.s32.totalorder %s147, %s148
      %p157 = scmp.eq.s32.totalorder %s32, 0
      %p158 = por %p156, %p157
      %p159 = scmp.ne.s32.totalorder %s147, %s148
      %p160 = scmp.eq.s32.totalorder %s33, 5
      %p161 = por %p159, %p160
      %p163 = scmp.ne.s32.totalorder %s148, %s162
      %p164 = scmp.eq.s32.totalorder %s33, 0
      %p165 = por %p163, %p164
      %s167 = sadd.s32 %s166, 1
      %p170 = scmp.eq.s32.totalorder %s27, 5
      %p171 = scmp.ne.s32.totalorder %s166, %s168
      %p172 = scmp.eq.s32.totalorder %s27, 0
      %p173 = por %p171, %p172
      %p174 = scmp.ne.s32.totalorder %s166, %s168
      %p175 = scmp.eq.s32.totalorder %s32, 5
      %p176 = por %p174, %p175
      %p177 = scmp.ne.s32.totalorder %s168, %s169
      %p178 = scmp.eq.s32.totalorder %s32, 0
      %p179 = por %p177, %p178
      %p180 = scmp.ne.s32.totalorder %s168, %s169
      %p181 = scmp.eq.s32.totalorder %s33, 5
      %p182 = por %p180, %p181
      %p184 = scmp.ne.s32.totalorder %s169, %s183
      %p185 = scmp.eq.s32.totalorder %s33, 0
      %p186 = por %p184, %p185
      %s188 = sadd.s32 %s187, 1
      %p191 = scmp.eq.s32.totalorder %s27, 5
      %p192 = scmp.ne.s32.totalorder %s187, %s189
      %p193 = scmp.eq.s32.totalorder %s27, 0
      %p194 = por %p192, %p193
      %p195 = scmp.ne.s32.totalorder %s187, %s189
      %p196 = scmp.eq.s32.totalorder %s32, 5
      %p197 = por %p195, %p196
      %p198 = scmp.ne.s32.totalorder %s189, %s190
      %p199 = scmp.eq.s32.totalorder %s32, 0
      %p200 = por %p198, %p199
      %p201 = scmp.ne.s32.totalorder %s189, %s190
      %p202 = scmp.eq.s32.totalorder %s33, 5
      %p203 = por %p201, %p202
      %p205 = scmp.ne.s32.totalorder %s190, %s204
      %p206 = scmp.eq.s32.totalorder %s33, 0
      %p207 = por %p205, %p206
      %s209 = sadd.s32 %s208, 1
      %p212 = scmp.eq.s32.totalorder %s27, 5
      %p213 = scmp.ne.s32.totalorder %s208, %s210
      %p214 = scmp.eq.s32.totalorder %s27, 0
      %p215 = por %p213, %p214
      %p216 = scmp.ne.s32.totalorder %s208, %s210
      %p217 = scmp.eq.s32.totalorder %s32, 5
      %p218 = por %p216, %p217
      %p219 = scmp.ne.s32.totalorder %s210, %s211
      %p220 = scmp.eq.s32.totalorder %s32, 0
      %p221 = por %p219, %p220
      %p222 = scmp.ne.s32.totalorder %s210, %s211
      %p223 = scmp.eq.s32.totalorder %s33, 5
      %p224 = por %p222, %p223
      %p226 = scmp.ne.s32.totalorder %s211, %s225
      %p227 = scmp.eq.s32.totalorder %s33, 0
      %p228 = por %p226, %p227
      %s230 = sadd.s32 %s229, 1
      %p233 = scmp.eq.s32.totalorder %s27, 5
      %p234 = scmp.ne.s32.totalorder %s229, %s231
      %p235 = scmp.eq.s32.totalorder %s27, 0
      %p236 = por %p234, %p235
      %p237 = scmp.ne.s32.totalorder %s229, %s231
      %p238 = scmp.eq.s32.totalorder %s32, 5
      %p239 = por %p237, %p238
      %p240 = scmp.ne.s32.totalorder %s231, %s232
      %p241 = scmp.eq.s32.totalorder %s32, 0
      %p242 = por %p240, %p241
      %p243 = scmp.ne.s32.totalorder %s231, %s232
      %p244 = scmp.eq.s32.totalorder %s33, 5
      %p245 = por %p243, %p244
      %p247 = scmp.ne.s32.totalorder %s232, %s246
      %p248 = scmp.eq.s32.totalorder %s33, 0
      %p249 = por %p247, %p248
      %s251 = sadd.s32 %s250, 1
      %p254 = scmp.eq.s32.totalorder %s27, 5
      %p255 = scmp.ne.s32.totalorder %s250, %s252
      %p256 = scmp.eq.s32.totalorder %s27, 0
      %p257 = por %p255, %p256
      %p258 = scmp.ne.s32.totalorder %s250, %s252
      %p259 = scmp.eq.s32.totalorder %s32, 5
      %p260 = por %p258, %p259
      %p261 = scmp.ne.s32.totalorder %s252, %s253
      %p262 = scmp.eq.s32.totalorder %s32, 0
      %p263 = por %p261, %p262
      %p264 = scmp.ne.s32.totalorder %s252, %s253
      %p265 = scmp.eq.s32.totalorder %s33, 5
      %p266 = por %p264, %p265
      %p268 = scmp.ne.s32.totalorder %s253, %s267
      %p269 = scmp.eq.s32.totalorder %s33, 0
      %p270 = por %p268, %p269
      %s272 = sadd.s32 %s271, 1
      %p275 = scmp.eq.s32.totalorder %s27, 5
      %p276 = scmp.ne.s32.totalorder %s271, %s273
      %p277 = scmp.eq.s32.totalorder %s27, 0
      %p278 = por %p276, %p277
      %p279 = scmp.ne.s32.totalorder %s271, %s273
      %p280 = scmp.eq.s32.totalorder %s32, 5
      %p281 = por %p279, %p280
      %p282 = scmp.ne.s32.totalorder %s273, %s274
      %p283 = scmp.eq.s32.totalorder %s32, 0
      %p284 = por %p282, %p283
      %p285 = scmp.ne.s32.totalorder %s273, %s274
      %p286 = scmp.eq.s32.totalorder %s33, 5
      %p287 = por %p285, %p286
      %p289 = scmp.ne.s32.totalorder %s274, %s288
      %p290 = scmp.eq.s32.totalorder %s33, 0
      %p291 = por %p289, %p290
      %s292 = ssub.s32 %s34, %s46
      %s293 = ssub.s32 %s35, %s42
      %s294 = sor.u32 %s292, %s293
      %p295 = scmp.eq.s32.totalorder %s294, 0
      %s297 = sadd.s32 %s296, 1
      %s298 = scalar_select %p295, %s296, %s297
      %p301 = pneg %p295
      %p302 = scmp.eq.s32.totalorder %s27, 5
      %p303 = por %p301, %p302
      %p304 = scmp.ne.s32.totalorder %s296, %s299
      %p305 = scmp.eq.s32.totalorder %s27, 0
      %p306 = por %p304, %p305
      %p307 = scmp.ne.s32.totalorder %s296, %s299
      %p308 = scmp.eq.s32.totalorder %s32, 5
      %p309 = por %p307, %p308
      %p310 = scmp.ne.s32.totalorder %s299, %s300
      %p311 = scmp.eq.s32.totalorder %s32, 0
      %p312 = por %p310, %p311
      %p313 = scmp.ne.s32.totalorder %s299, %s300
      %p314 = scmp.eq.s32.totalorder %s33, 5
      %p315 = por %p313, %p314
      %p317 = scmp.ne.s32.totalorder %s300, %s316
      %p318 = scmp.eq.s32.totalorder %s33, 0
      %p319 = por %p317, %p318
      %p320 = scmp.le.s32.totalorder 1, %s27
      %p321 = scmp.lt.s32.totalorder %s27, 7
      %p322 = pnand %p320, %p321
      %p323 = pneg %p322
      // Predicated region
      $region9: #{tpu_custom_call.1} parent=5 // pred_check
        _
      $region10: #{tpu_custom_call.1} parent=5 // pred_check_branch
        %325 = sbr.rel (%p322) target = $region12
      $region11: #{tpu_custom_call.1} parent=5 // pred_region
        %s326 = ssub.s32 %s27, 1
        // Predicated region
        $region13: #{tpu_custom_call.1} parent=11 // pred_check
          %p327 = pneg %p116
        $region14: #{tpu_custom_call.1} parent=11 // pred_check_branch
          %329 = sbr.rel (%p327) target = $region16
        $region15: #{tpu_custom_call.1} parent=11 // pred_region
          %331 = vsyncadd [#allocation6], 0
          %s332 = sshll.u32 %s2, 4
          %s333 = int_to_ptr.hbm [resolvable:$true] %s332
          %s334 = sshll.u32 [#allocation7], 4
          %s335 = int_to_ptr.vmem [resolvable:$true] %s334
          %340 = dma.hbm_to_vmem [thread:$0]  %s333, 1024, %s335, [#allocation6], 64, 64, 4
        $region16: #{tpu_custom_call.1} parent=11 // pred_fallthru
          _
        // Predicated region
        $region17: #{tpu_custom_call.1} parent=11 // pred_check
          %p341 = pneg %p137
        $region18: #{tpu_custom_call.1} parent=11 // pred_check_branch
          %343 = sbr.rel (%p341) target = $region20
        $region19: #{tpu_custom_call.1} parent=11 // pred_region
          _
        $region20: #{tpu_custom_call.1} parent=11 // pred_fallthru
          _
        // Predicated region
        $region21: #{tpu_custom_call.1} parent=11 // pred_check
          %p344 = pneg %p158
        $region22: #{tpu_custom_call.1} parent=11 // pred_check_branch
          %346 = sbr.rel (%p344) target = $region24
        $region23: #{tpu_custom_call.1} parent=11 // pred_region
          _
        $region24: #{tpu_custom_call.1} parent=11 // pred_fallthru
          _
        // Predicated region
        $region25: #{tpu_custom_call.1} parent=11 // pred_check
          %p347 = pneg %p179
        $region26: #{tpu_custom_call.1} parent=11 // pred_check_branch
          %349 = sbr.rel (%p347) target = $region28
        $region27: #{tpu_custom_call.1} parent=11 // pred_region
          %351 = vsyncadd [#allocation9], 0
          %s352 = sshll.u32 %s5, 4
          %s353 = int_to_ptr.hbm [resolvable:$true] %s352
          %s354 = sshll.u32 [#allocation8], 4
          %s355 = int_to_ptr.vmem [resolvable:$true] %s354
          %360 = dma.hbm_to_vmem [thread:$0]  %s353, 9216, %s355, [#allocation9], 64, 64, 4
        $region28: #{tpu_custom_call.1} parent=11 // pred_fallthru
          _
        // Predicated region
        $region29: #{tpu_custom_call.1} parent=11 // pred_check
          %p361 = pneg %p200
        $region30: #{tpu_custom_call.1} parent=11 // pred_check_branch
          %363 = sbr.rel (%p361) target = $region32
        $region31: #{tpu_custom_call.1} parent=11 // pred_region
          _
        $region32: #{tpu_custom_call.1} parent=11 // pred_fallthru
          _
        // Predicated region
        $region33: #{tpu_custom_call.1} parent=11 // pred_check
          %p364 = pneg %p221
        $region34: #{tpu_custom_call.1} parent=11 // pred_check_branch
          %366 = sbr.rel (%p364) target = $region36
        $region35: #{tpu_custom_call.1} parent=11 // pred_region
          _
        $region36: #{tpu_custom_call.1} parent=11 // pred_fallthru
          _
        // Predicated region
        $region37: #{tpu_custom_call.1} parent=11 // pred_check
          %p367 = pneg %p242
        $region38: #{tpu_custom_call.1} parent=11 // pred_check_branch
          %369 = sbr.rel (%p367) target = $region40
        $region39: #{tpu_custom_call.1} parent=11 // pred_region
          %371 = vsyncadd [#allocation9], 0
          %s372 = sshll.u32 %s8, 4
          %s373 = int_to_ptr.hbm [resolvable:$true] %s372
          %s374 = sshll.u32 [#allocation10], 4
          %s375 = int_to_ptr.vmem [resolvable:$true] %s374
          %380 = dma.hbm_to_vmem [thread:$0]  %s373, 1024, %s375, [#allocation9], 64, 64, 4
        $region40: #{tpu_custom_call.1} parent=11 // pred_fallthru
          _
        // Predicated region
        $region41: #{tpu_custom_call.1} parent=11 // pred_check
          %p381 = pneg %p263
        $region42: #{tpu_custom_call.1} parent=11 // pred_check_branch
          %383 = sbr.rel (%p381) target = $region44
        $region43: #{tpu_custom_call.1} parent=11 // pred_region
          _
        $region44: #{tpu_custom_call.1} parent=11 // pred_fallthru
          _
        // Predicated region
        $region45: #{tpu_custom_call.1} parent=11 // pred_check
          %p384 = pneg %p284
        $region46: #{tpu_custom_call.1} parent=11 // pred_check_branch
          %386 = sbr.rel (%p384) target = $region48
        $region47: #{tpu_custom_call.1} parent=11 // pred_region
          _
        $region48: #{tpu_custom_call.1} parent=11 // pred_fallthru
          _
      $region12: #{tpu_custom_call.1} parent=5 // pred_fallthru
        _
      %p387 = scmp.lt.s32.totalorder %s27, 6
      // Predicated region
      $region49: #{tpu_custom_call.1} parent=5 // pred_check
        %p388 = pneg %p387
      $region50: #{tpu_custom_call.1} parent=5 // pred_check_branch
        %390 = sbr.rel (%p388) target = $region52
      $region51: #{tpu_custom_call.1} parent=5 // pred_region
        // Predicated region
        $region53: #{tpu_custom_call.1} parent=51 // pred_check
          %p391 = pneg %p61
        $region54: #{tpu_custom_call.1} parent=51 // pred_check_branch
          %393 = sbr.rel (%p391) target = $region56
        $region55: #{tpu_custom_call.1} parent=51 // pred_region
          %s394 = sand.u32 %s51, 1
          %s395 = scalar_lea.sflag [#allocation3], %s394
          %s396 = sand.u32 %s51, 1
          %s397 = smul.addr %s396, 24
          %s398 = scalar_lea.vmem [#allocation2], %s397
          %s399 = smul.u32 6, %s35
          %401 = vsyncadd %s395, 0
          %s402 = smul.addr %s34, 18
          %s403 = sadd.s32 %s399, %s402
          %s404 = smul.addr %s403, 4
          %s405 = scalar_lea.hbm %s0, %s404
          %s406 = sshll.u32 %s405, 4
          %s407 = int_to_ptr.hbm [resolvable:$true] %s406
          %s408 = sshll.u32 %s398, 4
          %s409 = int_to_ptr.vmem [resolvable:$true] %s408
          %414 = dma.hbm_to_vmem [thread:$0]  %s407, 384, %s409, %s395, 64, 64, 4
        $region56: #{tpu_custom_call.1} parent=51 // pred_fallthru
          _
        // Predicated region
        $region57: #{tpu_custom_call.1} parent=51 // pred_check
          %p415 = pneg %p89
        $region58: #{tpu_custom_call.1} parent=51 // pred_check_branch
          %417 = sbr.rel (%p415) target = $region60
        $region59: #{tpu_custom_call.1} parent=51 // pred_region
          %s418 = sand.u32 %s27, 1
          %s419 = scalar_lea.sflag [#allocation6], %s418
          %s420 = sand.u32 %s79, 1
          %s421 = smul.addr %s420, 8
          %s422 = scalar_lea.vmem [#allocation5], %s421
          %424 = vsyncadd %s419, 0
          %s425 = smul.addr %s35, 2
          %s426 = smul.addr %s34, 6
          %s427 = sadd.s32 %s425, %s426
          %s428 = smul.addr %s427, 4
          %s429 = scalar_lea.hbm %s1, %s428
          %s430 = sshll.u32 %s429, 4
          %s431 = int_to_ptr.hbm [resolvable:$true] %s430
          %s432 = sshll.u32 %s422, 4
          %s433 = int_to_ptr.vmem [resolvable:$true] %s432
          %438 = dma.hbm_to_vmem [thread:$0]  %s431, 128, %s433, %s419, 64, 64, 4
        $region60: #{tpu_custom_call.1} parent=51 // pred_fallthru
          _
      $region52: #{tpu_custom_call.1} parent=5 // pred_fallthru
        _
      %p439 = scmp.le.s32.totalorder 1, %s27
      %p440 = scmp.lt.s32.totalorder %s27, 7
      %p441 = pnand %p439, %p440
      %p442 = pneg %p441
      // Predicated region
      $region61: #{tpu_custom_call.1} parent=5 // pred_check
        _
      $region62: #{tpu_custom_call.1} parent=5 // pred_check_branch
        %444 = sbr.rel (%p441) target = $region64
      $region63: #{tpu_custom_call.1} parent=5 // pred_region
        %s445 = ssub.s32 %s27, 1
        %s446 = sand.u32 %s54, 1
        %s447 = scalar_lea.sflag [#allocation3], %s446
        %s448 = sand.u32 %s54, 1
        %s449 = smul.addr %s448, 24
        %s450 = scalar_lea.vmem [#allocation2], %s449
        // Predicated region
        $region65: #{tpu_custom_call.1} parent=63 // pred_check
          %p451 = pneg %p67
        $region66: #{tpu_custom_call.1} parent=63 // pred_check_branch
          %453 = sbr.rel (%p451) target = $region68
        $region67: #{tpu_custom_call.1} parent=63 // pred_region
          %455 = dma.done %s447, 384
        $region68: #{tpu_custom_call.1} parent=63 // pred_fallthru
          _
        %s456 = sand.u32 %s32, 1
        %s457 = scalar_lea.sflag [#allocation6], %s456
        %s458 = sand.u32 %s82, 1
        %s459 = smul.addr %s458, 8
        %s460 = scalar_lea.vmem [#allocation5], %s459
        // Predicated region
        $region69: #{tpu_custom_call.1} parent=63 // pred_check
          %p461 = pneg %p95
        $region70: #{tpu_custom_call.1} parent=63 // pred_check_branch
          %463 = sbr.rel (%p461) target = $region72
        $region71: #{tpu_custom_call.1} parent=63 // pred_region
          %465 = dma.done %s457, 128
        $region72: #{tpu_custom_call.1} parent=63 // pred_fallthru
          _
        // Predicated region
        $region73: #{tpu_custom_call.1} parent=63 // pred_check
          %p466 = pneg %p116
        $region74: #{tpu_custom_call.1} parent=63 // pred_check_branch
          %468 = sbr.rel (%p466) target = $region76
        $region75: #{tpu_custom_call.1} parent=63 // pred_region
          %470 = dma.done [#allocation6], 1024
        $region76: #{tpu_custom_call.1} parent=63 // pred_fallthru
          _
        // Predicated region
        $region77: #{tpu_custom_call.1} parent=63 // pred_check
          %p471 = pneg %p179
        $region78: #{tpu_custom_call.1} parent=63 // pred_check_branch
          %473 = sbr.rel (%p471) target = $region80
        $region79: #{tpu_custom_call.1} parent=63 // pred_region
          %475 = dma.done [#allocation9], 9216
        $region80: #{tpu_custom_call.1} parent=63 // pred_fallthru
          _
        // Predicated region
        $region81: #{tpu_custom_call.1} parent=63 // pred_check
          %p476 = pneg %p242
        $region82: #{tpu_custom_call.1} parent=63 // pred_check_branch
          %478 = sbr.rel (%p476) target = $region84
        $region83: #{tpu_custom_call.1} parent=63 // pred_region
          %480 = dma.done [#allocation9], 1024
        $region84: #{tpu_custom_call.1} parent=63 // pred_fallthru
          _
        %s481 = sand.u32 %s54, 1
        %s482 = scalar_lea.sflag [#allocation3], %s481
        %s483 = sand.u32 %s54, 1
        %s484 = smul.addr %s483, 24
        %s485 = scalar_lea.vmem [#allocation2], %s484
        %p486 = pneg %p67
        %p487 = pneg %p64
        %s488 = sand.u32 %s32, 1
        %s489 = scalar_lea.sflag [#allocation6], %s488
        %s490 = sand.u32 %s82, 1
        %s491 = smul.addr %s490, 8
        %s492 = scalar_lea.vmem [#allocation5], %s491
        %p493 = pneg %p95
        %p494 = pneg %p92
        %p495 = pneg %p116
        %p496 = pneg %p113
        %p497 = pneg %p137
        %p498 = pneg %p134
        %p499 = pneg %p158
        %p500 = pneg %p155
        %p501 = pneg %p179
        %p502 = pneg %p176
        %p503 = pneg %p200
        %p504 = pneg %p197
        %p505 = pneg %p221
        %p506 = pneg %p218
        %p507 = pneg %p242
        %p508 = pneg %p239
        %p509 = pneg %p263
        %p510 = pneg %p260
        %p511 = pneg %p284
        %p512 = pneg %p281
        %p513 = pneg %p312
        %p514 = pneg %p309
        %s515 = sand.u32 %s299, 1
        %s516 = scalar_lea.sflag [#allocation4], %s515
        %s517 = sand.u32 %s299, 1
        %s518 = smul.addr %s517, 24
        %s519 = scalar_lea.vmem [#allocation11], %s518
        %s520 = smul.u32 6, %s37
        %s521 = smul.u32 6, %s37
        %v522 = vld [vmem:[%s450] sm:$0xf]
        %v523 = vld [vmem:[%s450 + $0x4] sm:$0xf]
        %v524 = vld [vmem:[%s450 + $0x8] sm:$0xf]
        %v525 = vld [vmem:[%s450 + $0xc] sm:$0xf]
        %v526 = vld [vmem:[%s450 + $0x10] sm:$0xf]
        %v527 = vld [vmem:[%s450 + $0x14] sm:$0xf]
        %v528 = vld [vmem:[%s460] sm:$0xf]
        %v529 = vld [vmem:[%s460 + $0x4] sm:$0xf]
        %v536 = vunpack.c.l.b16 %v522
        %v537 = vunpack.c.l.b16 %v523
        %v538 = vunpack.c.l.b16 %v524
        %v539 = vunpack.c.l.b16 %v525
        %v540 = vunpack.c.l.b16 %v526
        %v541 = vunpack.c.l.b16 %v527
        %v542 = vpack.c.b16 %v536, %v536
        %v543 = vpack.c.b16 %v538, %v537
        %v544 = vpack.c.b16 %v540, %v539
        %v545 = vpack.c.b16 %v541, %v541
        %v549 = vunpack.c.l.b16 %v529
        %v550 = vpack.c.b16 %v549, %v549
        %vm551 = vcmask 1043456
        %v554 = vsel %vm551, %v528, %v542
        %v558 = vsel %vm551, %v545, %v550
        %v560 = vld [vmem:[#allocation7] sm:$0xf]
        %v561 = vld [vmem:[#allocation7 + $0x4] sm:$0xf]
        %v562 = vld [vmem:[#allocation7 + $0x8] sm:$0xf]
        %v563 = vld [vmem:[#allocation7 + $0xc] sm:$0xf]
        %v564 = vld [vmem:[#allocation7 + $0x10] sm:$0xf]
        %v565 = vld [vmem:[#allocation7 + $0x14] sm:$0xf]
        %v566 = vld [vmem:[#allocation7 + $0x18] sm:$0xf]
        %v567 = vld [vmem:[#allocation7 + $0x1c] sm:$0xf]
        %v568 = vld [vmem:[#allocation7 + $0x20] sm:$0xf]
        %v569 = vld [vmem:[#allocation7 + $0x24] sm:$0xf]
        %v570 = vld [vmem:[#allocation7 + $0x28] sm:$0xf]
        %v571 = vld [vmem:[#allocation7 + $0x2c] sm:$0xf]
        %v572 = vld [vmem:[#allocation7 + $0x30] sm:$0xf]
        %v573 = vld [vmem:[#allocation7 + $0x34] sm:$0xf]
        %v574 = vld [vmem:[#allocation7 + $0x38] sm:$0xf]
        %v575 = vld [vmem:[#allocation7 + $0x3c] sm:$0xf]
        %v592 = vunpack.c.l.b16 %v560
        %v593 = vunpack.c.l.b16 %v561
        %v594 = vunpack.c.l.b16 %v562
        %v595 = vunpack.c.l.b16 %v563
        %v596 = vunpack.c.l.b16 %v564
        %v597 = vunpack.c.l.b16 %v565
        %v598 = vunpack.c.l.b16 %v566
        %v599 = vunpack.c.l.b16 %v567
        %v600 = vunpack.c.l.b16 %v568
        %v601 = vunpack.c.l.b16 %v569
        %v602 = vunpack.c.l.b16 %v570
        %v603 = vunpack.c.l.b16 %v571
        %v604 = vunpack.c.l.b16 %v572
        %v605 = vunpack.c.l.b16 %v573
        %v606 = vunpack.c.l.b16 %v574
        %v607 = vunpack.c.l.b16 %v575
        %v608 = vpack.c.b16 %v593, %v592
        %v609 = vpack.c.b16 %v595, %v594
        %v610 = vpack.c.b16 %v597, %v596
        %v611 = vpack.c.b16 %v599, %v598
        %v612 = vpack.c.b16 %v601, %v600
        %v613 = vpack.c.b16 %v603, %v602
        %v614 = vpack.c.b16 %v605, %v604
        %v615 = vpack.c.b16 %v607, %v606
        %624 = vmatpush.bf16.msra.mxu0 %v615
        %625 = vmatpush.bf16.msra.mxu0 %v614
        %626 = vmatpush.bf16.msra.mxu0 %v613
        %627 = vmatpush.bf16.msra.mxu0 %v612
        %628 = vmatpush.bf16.msra.mxu0 %v611
        %629 = vmatpush.bf16.msra.mxu0 %v610
        %630 = vmatpush.bf16.msra.mxu0 %v609
        %631 = vmatpush.bf16.msra.mxu0 %v608
        %632 = vmatmul.bf16.gmra.mxu0 %v554
        %v633 = vpop.f32.mrf.mxu0
        %v634 = vadd.f32 0.0, %v633
        %v635 = vpop.f32.mrf.mxu0
        %v636 = vadd.f32 0.0, %v635
        %637 = vmatmul.bf16.gmra.mxu0 %v543
        %v638 = vpop.f32.mrf.mxu0
        %v639 = vadd.f32 0.0, %v638
        %v640 = vpop.f32.mrf.mxu0
        %v641 = vadd.f32 0.0, %v640
        %642 = vmatmul.bf16.gmra.mxu0 %v544
        %v643 = vpop.f32.mrf.mxu0
        %v644 = vadd.f32 0.0, %v643
        %v645 = vpop.f32.mrf.mxu0
        %v646 = vadd.f32 0.0, %v645
        %647 = vmatmul.bf16.gmra.mxu0 %v558
        %v648 = vpop.f32.mrf.mxu0
        %v649 = vadd.f32 0.0, %v648
        %v650 = vpop.f32.mrf.mxu0
        %v651 = vadd.f32 0.0, %v650
        %652 = vdwg.mxu0
        %v653 = vld [vmem:[%s3] sm:$0x1]
        %v655 = vperm.slane %v653, 0
        %v657 = vmul.f32 %v634, %v655
        %v658 = vmul.f32 %v636, %v655
        %v659 = vmul.f32 %v639, %v655
        %v660 = vmul.f32 %v641, %v655
        %v661 = vmul.f32 %v644, %v655
        %v662 = vmul.f32 %v646, %v655
        %v663 = vmul.f32 %v649, %v655
        %v664 = vmul.f32 %v651, %v655
        %v665 = vld [vmem:[%s4] sm:$0x1]
        %v667 = vperm.slane %v665, 0
        %v669 = vadd.f32 %v657, %v667
        %v670 = vadd.f32 %v658, %v667
        %v671 = vadd.f32 %v659, %v667
        %v672 = vadd.f32 %v660, %v667
        %v673 = vadd.f32 %v661, %v667
        %v674 = vadd.f32 %v662, %v667
        %v675 = vadd.f32 %v663, %v667
        %v676 = vadd.f32 %v664, %v667
        %v677 = vmax.f32 %v669, 0.0
        %v678 = vmax.f32 %v670, 0.0
        %v679 = vmax.f32 %v671, 0.0
        %v680 = vmax.f32 %v672, 0.0
        %v681 = vmax.f32 %v673, 0.0
        %v682 = vmax.f32 %v674, 0.0
        %v683 = vmax.f32 %v675, 0.0
        %v684 = vmax.f32 %v676, 0.0
        %v685 = vlaneseq
        %v686 = vshrl.u32 %v685, 7
        %v687 = vadd.s32 %v686, 8
        %v688 = vadd.s32 %v686, 16
        %v689 = vadd.s32 %v686, 24
        %v690 = vadd.s32 %v686, 32
        %v691 = vadd.s32 %v686, 40
        %v692 = vadd.s32 %v686, 48
        %v693 = vadd.s32 %v686, 56
        %s694 = smul.u32 %s37, 48
        %v695 = vstv %s694
        %v696 = vadd.s32 %v695, %v686
        %v697 = vadd.s32 %v695, %v687
        %v698 = vadd.s32 %v695, %v688
        %v699 = vadd.s32 %v695, %v689
        %v700 = vadd.s32 %v695, %v690
        %v701 = vadd.s32 %v695, %v691
        %v702 = vadd.s32 %v695, %v692
        %v703 = vadd.s32 %v695, %v693
        %v704 = vsub.s32 %v696, 8
        %v705 = vsub.s32 %v697, 8
        %v706 = vsub.s32 %v698, 8
        %v707 = vsub.s32 %v699, 8
        %v708 = vsub.s32 %v700, 8
        %v709 = vsub.s32 %v701, 8
        %v710 = vsub.s32 %v702, 8
        %v711 = vsub.s32 %v703, 8
        %vm712 = vcmp.ge.s32.totalorder %v704, 0
        %vm713 = vcmp.ge.s32.totalorder %v705, 0
        %vm714 = vcmp.ge.s32.totalorder %v706, 0
        %vm715 = vcmp.ge.s32.totalorder %v707, 0
        %vm716 = vcmp.ge.s32.totalorder %v708, 0
        %vm717 = vcmp.ge.s32.totalorder %v709, 0
        %vm718 = vcmp.ge.s32.totalorder %v710, 0
        %vm719 = vcmp.ge.s32.totalorder %v711, 0
        %vm720 = vcmp.lt.s32.totalorder %v704, 100
        %vm721 = vcmp.lt.s32.totalorder %v705, 100
        %vm722 = vcmp.lt.s32.totalorder %v706, 100
        %vm723 = vcmp.lt.s32.totalorder %v707, 100
        %vm724 = vcmp.lt.s32.totalorder %v708, 100
        %vm725 = vcmp.lt.s32.totalorder %v709, 100
        %vm726 = vcmp.lt.s32.totalorder %v710, 100
        %vm727 = vcmp.lt.s32.totalorder %v711, 100
        %vm728 = vmand %vm712, %vm720
        %vm729 = vmand %vm713, %vm721
        %vm730 = vmand %vm714, %vm722
        %vm731 = vmand %vm715, %vm723
        %vm732 = vmand %vm716, %vm724
        %vm733 = vmand %vm717, %vm725
        %vm734 = vmand %vm718, %vm726
        %vm735 = vmand %vm719, %vm727
        %v736 = vsel %vm728, 1, 0
        %v737 = vsel %vm729, 1, 0
        %v738 = vsel %vm730, 1, 0
        %v739 = vsel %vm731, 1, 0
        %v740 = vsel %vm732, 1, 0
        %v741 = vsel %vm733, 1, 0
        %v742 = vsel %vm734, 1, 0
        %v743 = vsel %vm735, 1, 0
        %vm744 = vcmp.eq.s32.totalorder %v736, 1
        %vm745 = vcmp.eq.s32.totalorder %v737, 1
        %vm746 = vcmp.eq.s32.totalorder %v738, 1
        %vm747 = vcmp.eq.s32.totalorder %v739, 1
        %vm748 = vcmp.eq.s32.totalorder %v740, 1
        %vm749 = vcmp.eq.s32.totalorder %v741, 1
        %vm750 = vcmp.eq.s32.totalorder %v742, 1
        %vm751 = vcmp.eq.s32.totalorder %v743, 1
        %v752 = vsel %vm744, %v677, 0.0
        %v753 = vsel %vm745, %v678, 0.0
        %v754 = vsel %vm746, %v679, 0.0
        %v755 = vsel %vm747, %v680, 0.0
        %v756 = vsel %vm748, %v681, 0.0
        %v757 = vsel %vm749, %v682, 0.0
        %v758 = vsel %vm750, %v683, 0.0
        %v759 = vsel %vm751, %v684, 0.0
        %v760 = vpack.c.bf16 %v752, %v752
        %v761 = vpack.c.bf16 %v753, %v753
        %v762 = vpack.c.bf16 %v754, %v754
        %v763 = vpack.c.bf16 %v755, %v755
        %v764 = vpack.c.bf16 %v756, %v756
        %v765 = vpack.c.bf16 %v757, %v757
        %v766 = vpack.c.bf16 %v758, %v758
        %v767 = vpack.c.bf16 %v759, %v759
        %v775 = vunpack.c.l.b16 %v760
        %v776 = vunpack.c.l.b16 %v761
        %v777 = vunpack.c.l.b16 %v762
        %v778 = vunpack.c.l.b16 %v763
        %v779 = vunpack.c.l.b16 %v764
        %v780 = vunpack.c.l.b16 %v765
        %v781 = vunpack.c.l.b16 %v766
        %v782 = vpack.c.b16 %v776, %v775
        %v783 = vpack.c.b16 %v778, %v777
        %v784 = vpack.c.b16 %v780, %v779
        %v785 = vpack.c.b16 %v781, %v781
        %vm786 = vsmask.f32 7424
        %v788 = vshrl.u32 %v782, 16
        %v790 = vshll.u32 %v782, 16
        %v792 = vrot.slane %v790, 1
        %v793 = vor.u32 %v788, %v792
        %v795 = vshll.u32 %v783, 16
        %v797 = vrot.slane %v795, 1
        %v798 = vsel %vm786, %v793, %v797
        %v799 = vshrl.u32 %v783, 16
        %v801 = vor.u32 %v799, %v797
        %v803 = vshll.u32 %v784, 16
        %v805 = vrot.slane %v803, 1
        %v806 = vsel %vm786, %v801, %v805
        %v807 = vshrl.u32 %v784, 16
        %v809 = vor.u32 %v807, %v805
        %v811 = vshll.u32 %v785, 16
        %v813 = vrot.slane %v811, 1
        %v814 = vsel %vm786, %v809, %v813
        %v815 = vshrl.u32 %v785, 16
        %v817 = vor.u32 %v815, %v813
        %vm818 = vcmask 1046528
        %v819 = vrot.slane %v782, 1
        %v820 = vrot.slane %v783, 1
        %v821 = vsel %vm818, %v819, %v820
        %v822 = vrot.slane %v784, 1
        %v823 = vsel %vm818, %v820, %v822
        %v824 = vrot.slane %v785, 1
        %v825 = vsel %vm818, %v822, %v824
        %vm826 = vsmask.f32 6400
        %v827 = vrot.slane %v788, 1
        %v828 = vrot.slane %v790, 2
        %v829 = vor.u32 %v827, %v828
        %v830 = vrot.slane %v799, 1
        %v831 = vrot.slane %v795, 2
        %v832 = vor.u32 %v830, %v831
        %v833 = vsel %vm826, %v829, %v832
        %v834 = vrot.slane %v807, 1
        %v835 = vrot.slane %v803, 2
        %v836 = vor.u32 %v834, %v835
        %v837 = vsel %vm826, %v832, %v836
        %v838 = vrot.slane %v815, 1
        %v839 = vrot.slane %v811, 2
        %v840 = vor.u32 %v838, %v839
        %v841 = vsel %vm826, %v836, %v840
        %v842 = vpack.c.b16 %v777, %v776
        %v843 = vpack.c.b16 %v779, %v778
        %v844 = vpack.c.b16 %v781, %v780
        %vm845 = vcmask 1041408
        %v846 = vrot.slane %v842, 6
        %v847 = vrot.slane %v843, 6
        %v848 = vsel %vm845, %v846, %v847
        %v849 = vrot.slane %v844, 6
        %v850 = vsel %vm845, %v847, %v849
        %v852 = vunpack.c.l.b16 %v767
        %v853 = vpack.c.b16 %v852, %v852
        %vm854 = vsmask.f32 1280
        %v856 = vshrl.u32 %v842, 16
        %v858 = vrot.slane %v856, 6
        %v859 = vshll.u32 %v842, 16
        %v861 = vrot.slane %v859, 7
        %v862 = vor.u32 %v858, %v861
        %v864 = vshrl.u32 %v843, 16
        %v866 = vrot.slane %v864, 6
        %v867 = vshll.u32 %v843, 16
        %v869 = vrot.slane %v867, 7
        %v870 = vor.u32 %v866, %v869
        %v871 = vsel %vm854, %v862, %v870
        %v873 = vshrl.u32 %v844, 16
        %v875 = vrot.slane %v873, 6
        %v876 = vshll.u32 %v844, 16
        %v878 = vrot.slane %v876, 7
        %v879 = vor.u32 %v875, %v878
        %v880 = vsel %vm854, %v870, %v879
        %v882 = vshll.u32 %v853, 16
        %v884 = vrot.slane %v882, 7
        %v885 = vsel %vm854, %v879, %v884
        %vm886 = vcmask 1040384
        %v887 = vrot.slane %v842, 7
        %v888 = vrot.slane %v843, 7
        %v889 = vsel %vm886, %v887, %v888
        %v890 = vrot.slane %v844, 7
        %v891 = vsel %vm886, %v888, %v890
        %v892 = vrot.slane %v853, 7
        %v893 = vsel %vm886, %v890, %v892
        %vm894 = vsmask.f32 256
        %v895 = vrot.slane %v856, 7
        %v896 = vor.u32 %v895, %v859
        %v897 = vrot.slane %v864, 7
        %v898 = vor.u32 %v897, %v867
        %v899 = vsel %vm894, %v895, %v898
        %v900 = vrot.slane %v873, 7
        %v901 = vor.u32 %v900, %v876
        %v902 = vsel %vm894, %v897, %v901
        %v903 = vshrl.u32 %v853, 16
        %v905 = vrot.slane %v903, 7
        %v906 = vor.u32 %v905, %v882
        %v907 = vsel %vm894, %v900, %v906
        %v908 = vld [vmem:[#allocation8] sm:$0xf]
        %v909 = vld [vmem:[#allocation8 + $0x4] sm:$0xf]
        %v910 = vld [vmem:[#allocation8 + $0x8] sm:$0xf]
        %v911 = vld [vmem:[#allocation8 + $0xc] sm:$0xf]
        %v912 = vld [vmem:[#allocation8 + $0x10] sm:$0xf]
        %v913 = vld [vmem:[#allocation8 + $0x14] sm:$0xf]
        %v914 = vld [vmem:[#allocation8 + $0x18] sm:$0xf]
        %v915 = vld [vmem:[#allocation8 + $0x1c] sm:$0xf]
        %v916 = vld [vmem:[#allocation8 + $0x20] sm:$0xf]
        %v917 = vld [vmem:[#allocation8 + $0x24] sm:$0xf]
        %v918 = vld [vmem:[#allocation8 + $0x28] sm:$0xf]
        %v919 = vld [vmem:[#allocation8 + $0x2c] sm:$0xf]
        %v920 = vld [vmem:[#allocation8 + $0x30] sm:$0xf]
        %v921 = vld [vmem:[#allocation8 + $0x34] sm:$0xf]
        %v922 = vld [vmem:[#allocation8 + $0x38] sm:$0xf]
        %v923 = vld [vmem:[#allocation8 + $0x3c] sm:$0xf]
        %v924 = vld [vmem:[#allocation8 + $0x40] sm:$0xf]
        %v925 = vld [vmem:[#allocation8 + $0x44] sm:$0xf]
        %v926 = vld [vmem:[#allocation8 + $0x48] sm:$0xf]
        %v927 = vld [vmem:[#allocation8 + $0x4c] sm:$0xf]
        %v928 = vld [vmem:[#allocation8 + $0x50] sm:$0xf]
        %v929 = vld [vmem:[#allocation8 + $0x54] sm:$0xf]
        %v930 = vld [vmem:[#allocation8 + $0x58] sm:$0xf]
        %v931 = vld [vmem:[#allocation8 + $0x5c] sm:$0xf]
        %v932 = vld [vmem:[#allocation8 + $0x60] sm:$0xf]
        %v933 = vld [vmem:[#allocation8 + $0x64] sm:$0xf]
        %v934 = vld [vmem:[#allocation8 + $0x68] sm:$0xf]
        %v935 = vld [vmem:[#allocation8 + $0x6c] sm:$0xf]
        %v936 = vld [vmem:[#allocation8 + $0x70] sm:$0xf]
        %v937 = vld [vmem:[#allocation8 + $0x74] sm:$0xf]
        %v938 = vld [vmem:[#allocation8 + $0x78] sm:$0xf]
        %v939 = vld [vmem:[#allocation8 + $0x7c] sm:$0xf]
        %v940 = vld [vmem:[#allocation8 + $0x80] sm:$0xf]
        %v941 = vld [vmem:[#allocation8 + $0x84] sm:$0xf]
        %v942 = vld [vmem:[#allocation8 + $0x88] sm:$0xf]
        %v943 = vld [vmem:[#allocation8 + $0x8c] sm:$0xf]
        %v944 = vld [vmem:[#allocation8 + $0x90] sm:$0xf]
        %v945 = vld [vmem:[#allocation8 + $0x94] sm:$0xf]
        %v946 = vld [vmem:[#allocation8 + $0x98] sm:$0xf]
        %v947 = vld [vmem:[#allocation8 + $0x9c] sm:$0xf]
        %v948 = vld [vmem:[#allocation8 + $0xa0] sm:$0xf]
        %v949 = vld [vmem:[#allocation8 + $0xa4] sm:$0xf]
        %v950 = vld [vmem:[#allocation8 + $0xa8] sm:$0xf]
        %v951 = vld [vmem:[#allocation8 + $0xac] sm:$0xf]
        %v952 = vld [vmem:[#allocation8 + $0xb0] sm:$0xf]
        %v953 = vld [vmem:[#allocation8 + $0xb4] sm:$0xf]
        %v954 = vld [vmem:[#allocation8 + $0xb8] sm:$0xf]
        %v955 = vld [vmem:[#allocation8 + $0xbc] sm:$0xf]
        %v956 = vld [vmem:[#allocation8 + $0xc0] sm:$0xf]
        %v957 = vld [vmem:[#allocation8 + $0xc4] sm:$0xf]
        %v958 = vld [vmem:[#allocation8 + $0xc8] sm:$0xf]
        %v959 = vld [vmem:[#allocation8 + $0xcc] sm:$0xf]
        %v960 = vld [vmem:[#allocation8 + $0xd0] sm:$0xf]
        %v961 = vld [vmem:[#allocation8 + $0xd4] sm:$0xf]
        %v962 = vld [vmem:[#allocation8 + $0xd8] sm:$0xf]
        %v963 = vld [vmem:[#allocation8 + $0xdc] sm:$0xf]
        %v964 = vld [vmem:[#allocation8 + $0xe0] sm:$0xf]
        %v965 = vld [vmem:[#allocation8 + $0xe4] sm:$0xf]
        %v966 = vld [vmem:[#allocation8 + $0xe8] sm:$0xf]
        %v967 = vld [vmem:[#allocation8 + $0xec] sm:$0xf]
        %v968 = vld [vmem:[#allocation8 + $0xf0] sm:$0xf]
        %v969 = vld [vmem:[#allocation8 + $0xf4] sm:$0xf]
        %v970 = vld [vmem:[#allocation8 + $0xf8] sm:$0xf]
        %v971 = vld [vmem:[#allocation8 + $0xfc] sm:$0xf]
        %v972 = vld [vmem:[#allocation8 + $0x100] sm:$0xf]
        %v973 = vld [vmem:[#allocation8 + $0x104] sm:$0xf]
        %v974 = vld [vmem:[#allocation8 + $0x108] sm:$0xf]
        %v975 = vld [vmem:[#allocation8 + $0x10c] sm:$0xf]
        %v976 = vld [vmem:[#allocation8 + $0x110] sm:$0xf]
        %v977 = vld [vmem:[#allocation8 + $0x114] sm:$0xf]
        %v978 = vld [vmem:[#allocation8 + $0x118] sm:$0xf]
        %v979 = vld [vmem:[#allocation8 + $0x11c] sm:$0xf]
        %v980 = vld [vmem:[#allocation8 + $0x120] sm:$0xf]
        %v981 = vld [vmem:[#allocation8 + $0x124] sm:$0xf]
        %v982 = vld [vmem:[#allocation8 + $0x128] sm:$0xf]
        %v983 = vld [vmem:[#allocation8 + $0x12c] sm:$0xf]
        %v984 = vld [vmem:[#allocation8 + $0x130] sm:$0xf]
        %v985 = vld [vmem:[#allocation8 + $0x134] sm:$0xf]
        %v986 = vld [vmem:[#allocation8 + $0x138] sm:$0xf]
        %v987 = vld [vmem:[#allocation8 + $0x13c] sm:$0xf]
        %v988 = vld [vmem:[#allocation8 + $0x140] sm:$0xf]
        %v989 = vld [vmem:[#allocation8 + $0x144] sm:$0xf]
        %v990 = vld [vmem:[#allocation8 + $0x148] sm:$0xf]
        %v991 = vld [vmem:[#allocation8 + $0x14c] sm:$0xf]
        %v992 = vld [vmem:[#allocation8 + $0x150] sm:$0xf]
        %v993 = vld [vmem:[#allocation8 + $0x154] sm:$0xf]
        %v994 = vld [vmem:[#allocation8 + $0x158] sm:$0xf]
        %v995 = vld [vmem:[#allocation8 + $0x15c] sm:$0xf]
        %v996 = vld [vmem:[#allocation8 + $0x160] sm:$0xf]
        %v997 = vld [vmem:[#allocation8 + $0x164] sm:$0xf]
        %v998 = vld [vmem:[#allocation8 + $0x168] sm:$0xf]
        %v999 = vld [vmem:[#allocation8 + $0x16c] sm:$0xf]
        %v1000 = vld [vmem:[#allocation8 + $0x170] sm:$0xf]
        %v1001 = vld [vmem:[#allocation8 + $0x174] sm:$0xf]
        %v1002 = vld [vmem:[#allocation8 + $0x178] sm:$0xf]
        %v1003 = vld [vmem:[#allocation8 + $0x17c] sm:$0xf]
        %v1004 = vld [vmem:[#allocation8 + $0x180] sm:$0xf]
        %v1005 = vld [vmem:[#allocation8 + $0x184] sm:$0xf]
        %v1006 = vld [vmem:[#allocation8 + $0x188] sm:$0xf]
        %v1007 = vld [vmem:[#allocation8 + $0x18c] sm:$0xf]
        %v1008 = vld [vmem:[#allocation8 + $0x190] sm:$0xf]
        %v1009 = vld [vmem:[#allocation8 + $0x194] sm:$0xf]
        %v1010 = vld [vmem:[#allocation8 + $0x198] sm:$0xf]
        %v1011 = vld [vmem:[#allocation8 + $0x19c] sm:$0xf]
        %v1012 = vld [vmem:[#allocation8 + $0x1a0] sm:$0xf]
        %v1013 = vld [vmem:[#allocation8 + $0x1a4] sm:$0xf]
        %v1014 = vld [vmem:[#allocation8 + $0x1a8] sm:$0xf]
        %v1015 = vld [vmem:[#allocation8 + $0x1ac] sm:$0xf]
        %v1016 = vld [vmem:[#allocation8 + $0x1b0] sm:$0xf]
        %v1017 = vld [vmem:[#allocation8 + $0x1b4] sm:$0xf]
        %v1018 = vld [vmem:[#allocation8 + $0x1b8] sm:$0xf]
        %v1019 = vld [vmem:[#allocation8 + $0x1bc] sm:$0xf]
        %v1020 = vld [vmem:[#allocation8 + $0x1c0] sm:$0xf]
        %v1021 = vld [vmem:[#allocation8 + $0x1c4] sm:$0xf]
        %v1022 = vld [vmem:[#allocation8 + $0x1c8] sm:$0xf]
        %v1023 = vld [vmem:[#allocation8 + $0x1cc] sm:$0xf]
        %v1024 = vld [vmem:[#allocation8 + $0x1d0] sm:$0xf]
        %v1025 = vld [vmem:[#allocation8 + $0x1d4] sm:$0xf]
        %v1026 = vld [vmem:[#allocation8 + $0x1d8] sm:$0xf]
        %v1027 = vld [vmem:[#allocation8 + $0x1dc] sm:$0xf]
        %v1028 = vld [vmem:[#allocation8 + $0x1e0] sm:$0xf]
        %v1029 = vld [vmem:[#allocation8 + $0x1e4] sm:$0xf]
        %v1030 = vld [vmem:[#allocation8 + $0x1e8] sm:$0xf]
        %v1031 = vld [vmem:[#allocation8 + $0x1ec] sm:$0xf]
        %v1032 = vld [vmem:[#allocation8 + $0x1f0] sm:$0xf]
        %v1033 = vld [vmem:[#allocation8 + $0x1f4] sm:$0xf]
        %v1034 = vld [vmem:[#allocation8 + $0x1f8] sm:$0xf]
        %v1035 = vld [vmem:[#allocation8 + $0x1fc] sm:$0xf]
        %v1036 = vld [vmem:[#allocation8 + $0x200] sm:$0xf]
        %v1037 = vld [vmem:[#allocation8 + $0x204] sm:$0xf]
        %v1038 = vld [vmem:[#allocation8 + $0x208] sm:$0xf]
        %v1039 = vld [vmem:[#allocation8 + $0x20c] sm:$0xf]
        %v1040 = vld [vmem:[#allocation8 + $0x210] sm:$0xf]
        %v1041 = vld [vmem:[#allocation8 + $0x214] sm:$0xf]
        %v1042 = vld [vmem:[#allocation8 + $0x218] sm:$0xf]
        %v1043 = vld [vmem:[#allocation8 + $0x21c] sm:$0xf]
        %v1044 = vld [vmem:[#allocation8 + $0x220] sm:$0xf]
        %v1045 = vld [vmem:[#allocation8 + $0x224] sm:$0xf]
        %v1046 = vld [vmem:[#allocation8 + $0x228] sm:$0xf]
        %v1047 = vld [vmem:[#allocation8 + $0x22c] sm:$0xf]
        %v1048 = vld [vmem:[#allocation8 + $0x230] sm:$0xf]
        %v1049 = vld [vmem:[#allocation8 + $0x234] sm:$0xf]
        %v1050 = vld [vmem:[#allocation8 + $0x238] sm:$0xf]
        %v1051 = vld [vmem:[#allocation8 + $0x23c] sm:$0xf]
        %vm1052 = vcmask 1045504
        %v1053 = vrot.slane %v782, 2
        %v1054 = vrot.slane %v783, 2
        %v1055 = vsel %vm1052, %v1053, %v1054
        %v1056 = vrot.slane %v798, 2
        %v1057 = vrot.slane %v806, 2
        %v1058 = vsel %vm1052, %v1056, %v1057
        %v1059 = vrot.slane %v821, 2
        %v1060 = vrot.slane %v823, 2
        %v1061 = vsel %vm1052, %v1059, %v1060
        %v1062 = vrot.slane %v833, 2
        %v1063 = vrot.slane %v837, 2
        %v1064 = vsel %vm1052, %v1062, %v1063
        %v1065 = vrot.slane %v846, 2
        %v1066 = vrot.slane %v848, 2
        %v1067 = vsel %vm1052, %v1065, %v1066
        %v1068 = vrot.slane %v862, 2
        %v1069 = vrot.slane %v871, 2
        %v1070 = vsel %vm1052, %v1068, %v1069
        %v1071 = vrot.slane %v887, 2
        %v1072 = vrot.slane %v889, 2
        %v1073 = vsel %vm1052, %v1071, %v1072
        %v1074 = vrot.slane %v896, 2
        %v1075 = vrot.slane %v899, 2
        %v1076 = vsel %vm1052, %v1074, %v1075
        %v1077 = vrot.slane %v842, 2
        %v1078 = vrot.slane %v843, 2
        %v1079 = vsel %vm1052, %v1077, %v1078
        %v1080 = vrot.slane %v784, 2
        %v1081 = vsel %vm1052, %v1054, %v1080
        %v1082 = vrot.slane %v814, 2
        %v1083 = vsel %vm1052, %v1057, %v1082
        %v1084 = vrot.slane %v825, 2
        %v1085 = vsel %vm1052, %v1060, %v1084
        %v1086 = vrot.slane %v841, 2
        %v1087 = vsel %vm1052, %v1063, %v1086
        %v1088 = vrot.slane %v850, 2
        %v1089 = vsel %vm1052, %v1066, %v1088
        %v1090 = vrot.slane %v880, 2
        %v1091 = vsel %vm1052, %v1069, %v1090
        %v1092 = vrot.slane %v891, 2
        %v1093 = vsel %vm1052, %v1072, %v1092
        %v1094 = vrot.slane %v902, 2
        %v1095 = vsel %vm1052, %v1075, %v1094
        %v1096 = vrot.slane %v844, 2
        %v1097 = vsel %vm1052, %v1078, %v1096
        %v1098 = vrot.slane %v785, 2
        %v1099 = vsel %vm1052, %v1080, %v1098
        %v1100 = vrot.slane %v817, 2
        %v1101 = vsel %vm1052, %v1082, %v1100
        %v1102 = vrot.slane %v824, 2
        %v1103 = vsel %vm1052, %v1084, %v1102
        %v1104 = vrot.slane %v840, 2
        %v1105 = vsel %vm1052, %v1086, %v1104
        %v1106 = vrot.slane %v849, 2
        %v1107 = vsel %vm1052, %v1088, %v1106
        %v1108 = vrot.slane %v885, 2
        %v1109 = vsel %vm1052, %v1090, %v1108
        %v1110 = vrot.slane %v893, 2
        %v1111 = vsel %vm1052, %v1092, %v1110
        %v1112 = vrot.slane %v907, 2
        %v1113 = vsel %vm1052, %v1094, %v1112
        %v1114 = vrot.slane %v853, 2
        %v1115 = vsel %vm1052, %v1096, %v1114
        %v1287 = vunpack.c.l.b16 %v908
        %v1288 = vunpack.c.l.b16 %v909
        %v1289 = vunpack.c.l.b16 %v910
        %v1290 = vunpack.c.l.b16 %v911
        %v1291 = vunpack.c.l.b16 %v912
        %v1292 = vunpack.c.l.b16 %v913
        %v1293 = vunpack.c.l.b16 %v914
        %v1294 = vunpack.c.l.b16 %v915
        %v1295 = vunpack.c.l.b16 %v916
        %v1296 = vunpack.c.l.b16 %v917
        %v1297 = vunpack.c.l.b16 %v918
        %v1298 = vunpack.c.l.b16 %v919
        %v1299 = vunpack.c.l.b16 %v920
        %v1300 = vunpack.c.l.b16 %v921
        %v1301 = vunpack.c.l.b16 %v922
        %v1302 = vunpack.c.l.b16 %v923
        %v1303 = vunpack.c.l.b16 %v924
        %v1304 = vunpack.c.l.b16 %v925
        %v1305 = vunpack.c.l.b16 %v926
        %v1306 = vunpack.c.l.b16 %v927
        %v1307 = vunpack.c.l.b16 %v928
        %v1308 = vunpack.c.l.b16 %v929
        %v1309 = vunpack.c.l.b16 %v930
        %v1310 = vunpack.c.l.b16 %v931
        %v1311 = vunpack.c.l.b16 %v932
        %v1312 = vunpack.c.l.b16 %v933
        %v1313 = vunpack.c.l.b16 %v934
        %v1314 = vunpack.c.l.b16 %v935
        %v1315 = vunpack.c.l.b16 %v936
        %v1316 = vunpack.c.l.b16 %v937
        %v1317 = vunpack.c.l.b16 %v938
        %v1318 = vunpack.c.l.b16 %v939
        %v1319 = vunpack.c.l.b16 %v940
        %v1320 = vunpack.c.l.b16 %v941
        %v1321 = vunpack.c.l.b16 %v942
        %v1322 = vunpack.c.l.b16 %v943
        %v1323 = vunpack.c.l.b16 %v944
        %v1324 = vunpack.c.l.b16 %v945
        %v1325 = vunpack.c.l.b16 %v946
        %v1326 = vunpack.c.l.b16 %v947
        %v1327 = vunpack.c.l.b16 %v948
        %v1328 = vunpack.c.l.b16 %v949
        %v1329 = vunpack.c.l.b16 %v950
        %v1330 = vunpack.c.l.b16 %v951
        %v1331 = vunpack.c.l.b16 %v952
        %v1332 = vunpack.c.l.b16 %v953
        %v1333 = vunpack.c.l.b16 %v954
        %v1334 = vunpack.c.l.b16 %v955
        %v1335 = vunpack.c.l.b16 %v956
        %v1336 = vunpack.c.l.b16 %v957
        %v1337 = vunpack.c.l.b16 %v958
        %v1338 = vunpack.c.l.b16 %v959
        %v1339 = vunpack.c.l.b16 %v960
        %v1340 = vunpack.c.l.b16 %v961
        %v1341 = vunpack.c.l.b16 %v962
        %v1342 = vunpack.c.l.b16 %v963
        %v1343 = vunpack.c.l.b16 %v964
        %v1344 = vunpack.c.l.b16 %v965
        %v1345 = vunpack.c.l.b16 %v966
        %v1346 = vunpack.c.l.b16 %v967
        %v1347 = vunpack.c.l.b16 %v968
        %v1348 = vunpack.c.l.b16 %v969
        %v1349 = vunpack.c.l.b16 %v970
        %v1350 = vunpack.c.l.b16 %v971
        %v1351 = vunpack.c.l.b16 %v972
        %v1352 = vunpack.c.l.b16 %v973
        %v1353 = vunpack.c.l.b16 %v974
        %v1354 = vunpack.c.l.b16 %v975
        %v1355 = vunpack.c.l.b16 %v976
        %v1356 = vunpack.c.l.b16 %v977
        %v1357 = vunpack.c.l.b16 %v978
        %v1358 = vunpack.c.l.b16 %v979
        %v1359 = vunpack.c.l.b16 %v980
        %v1360 = vunpack.c.l.b16 %v981
        %v1361 = vunpack.c.l.b16 %v982
        %v1362 = vunpack.c.l.b16 %v983
        %v1363 = vunpack.c.l.b16 %v984
        %v1364 = vunpack.c.l.b16 %v985
        %v1365 = vunpack.c.l.b16 %v986
        %v1366 = vunpack.c.l.b16 %v987
        %v1367 = vunpack.c.l.b16 %v988
        %v1368 = vunpack.c.l.b16 %v989
        %v1369 = vunpack.c.l.b16 %v990
        %v1370 = vunpack.c.l.b16 %v991
        %v1371 = vunpack.c.l.b16 %v992
        %v1372 = vunpack.c.l.b16 %v993
        %v1373 = vunpack.c.l.b16 %v994
        %v1374 = vunpack.c.l.b16 %v995
        %v1375 = vunpack.c.l.b16 %v996
        %v1376 = vunpack.c.l.b16 %v997
        %v1377 = vunpack.c.l.b16 %v998
        %v1378 = vunpack.c.l.b16 %v999
        %v1379 = vunpack.c.l.b16 %v1000
        %v1380 = vunpack.c.l.b16 %v1001
        %v1381 = vunpack.c.l.b16 %v1002
        %v1382 = vunpack.c.l.b16 %v1003
        %v1383 = vunpack.c.l.b16 %v1004
        %v1384 = vunpack.c.l.b16 %v1005
        %v1385 = vunpack.c.l.b16 %v1006
        %v1386 = vunpack.c.l.b16 %v1007
        %v1387 = vunpack.c.l.b16 %v1008
        %v1388 = vunpack.c.l.b16 %v1009
        %v1389 = vunpack.c.l.b16 %v1010
        %v1390 = vunpack.c.l.b16 %v1011
        %v1391 = vunpack.c.l.b16 %v1012
        %v1392 = vunpack.c.l.b16 %v1013
        %v1393 = vunpack.c.l.b16 %v1014
        %v1394 = vunpack.c.l.b16 %v1015
        %v1395 = vunpack.c.l.b16 %v1016
        %v1396 = vunpack.c.l.b16 %v1017
        %v1397 = vunpack.c.l.b16 %v1018
        %v1398 = vunpack.c.l.b16 %v1019
        %v1399 = vunpack.c.l.b16 %v1020
        %v1400 = vunpack.c.l.b16 %v1021
        %v1401 = vunpack.c.l.b16 %v1022
        %v1402 = vunpack.c.l.b16 %v1023
        %v1403 = vunpack.c.l.b16 %v1024
        %v1404 = vunpack.c.l.b16 %v1025
        %v1405 = vunpack.c.l.b16 %v1026
        %v1406 = vunpack.c.l.b16 %v1027
        %v1407 = vunpack.c.l.b16 %v1028
        %v1408 = vunpack.c.l.b16 %v1029
        %v1409 = vunpack.c.l.b16 %v1030
        %v1410 = vunpack.c.l.b16 %v1031
        %v1411 = vunpack.c.l.b16 %v1032
        %v1412 = vunpack.c.l.b16 %v1033
        %v1413 = vunpack.c.l.b16 %v1034
        %v1414 = vunpack.c.l.b16 %v1035
        %v1415 = vunpack.c.l.b16 %v1036
        %v1416 = vunpack.c.l.b16 %v1037
        %v1417 = vunpack.c.l.b16 %v1038
        %v1418 = vunpack.c.l.b16 %v1039
        %v1419 = vunpack.c.l.b16 %v1040
        %v1420 = vunpack.c.l.b16 %v1041
        %v1421 = vunpack.c.l.b16 %v1042
        %v1422 = vunpack.c.l.b16 %v1043
        %v1423 = vunpack.c.l.b16 %v1044
        %v1424 = vunpack.c.l.b16 %v1045
        %v1425 = vunpack.c.l.b16 %v1046
        %v1426 = vunpack.c.l.b16 %v1047
        %v1427 = vunpack.c.l.b16 %v1048
        %v1428 = vunpack.c.l.b16 %v1049
        %v1429 = vunpack.c.l.b16 %v1050
        %v1430 = vunpack.c.l.b16 %v1051
        %v1431 = vpack.c.b16 %v1288, %v1287
        %v1432 = vpack.c.b16 %v1290, %v1289
        %v1433 = vpack.c.b16 %v1292, %v1291
        %v1434 = vpack.c.b16 %v1294, %v1293
        %v1435 = vpack.c.b16 %v1296, %v1295
        %v1436 = vpack.c.b16 %v1298, %v1297
        %v1437 = vpack.c.b16 %v1300, %v1299
        %v1438 = vpack.c.b16 %v1302, %v1301
        %v1439 = vpack.c.b16 %v1304, %v1303
        %v1440 = vpack.c.b16 %v1306, %v1305
        %v1441 = vpack.c.b16 %v1308, %v1307
        %v1442 = vpack.c.b16 %v1310, %v1309
        %v1443 = vpack.c.b16 %v1312, %v1311
        %v1444 = vpack.c.b16 %v1314, %v1313
        %v1445 = vpack.c.b16 %v1316, %v1315
        %v1446 = vpack.c.b16 %v1318, %v1317
        %v1447 = vpack.c.b16 %v1320, %v1319
        %v1448 = vpack.c.b16 %v1322, %v1321
        %v1449 = vpack.c.b16 %v1324, %v1323
        %v1450 = vpack.c.b16 %v1326, %v1325
        %v1451 = vpack.c.b16 %v1328, %v1327
        %v1452 = vpack.c.b16 %v1330, %v1329
        %v1453 = vpack.c.b16 %v1332, %v1331
        %v1454 = vpack.c.b16 %v1334, %v1333
        %v1455 = vpack.c.b16 %v1336, %v1335
        %v1456 = vpack.c.b16 %v1338, %v1337
        %v1457 = vpack.c.b16 %v1340, %v1339
        %v1458 = vpack.c.b16 %v1342, %v1341
        %v1459 = vpack.c.b16 %v1344, %v1343
        %v1460 = vpack.c.b16 %v1346, %v1345
        %v1461 = vpack.c.b16 %v1348, %v1347
        %v1462 = vpack.c.b16 %v1350, %v1349
        %v1463 = vpack.c.b16 %v1352, %v1351
        %v1464 = vpack.c.b16 %v1354, %v1353
        %v1465 = vpack.c.b16 %v1356, %v1355
        %v1466 = vpack.c.b16 %v1358, %v1357
        %v1467 = vpack.c.b16 %v1360, %v1359
        %v1468 = vpack.c.b16 %v1362, %v1361
        %v1469 = vpack.c.b16 %v1364, %v1363
        %v1470 = vpack.c.b16 %v1366, %v1365
        %v1471 = vpack.c.b16 %v1368, %v1367
        %v1472 = vpack.c.b16 %v1370, %v1369
        %v1473 = vpack.c.b16 %v1372, %v1371
        %v1474 = vpack.c.b16 %v1374, %v1373
        %v1475 = vpack.c.b16 %v1376, %v1375
        %v1476 = vpack.c.b16 %v1378, %v1377
        %v1477 = vpack.c.b16 %v1380, %v1379
        %v1478 = vpack.c.b16 %v1382, %v1381
        %v1479 = vpack.c.b16 %v1384, %v1383
        %v1480 = vpack.c.b16 %v1386, %v1385
        %v1481 = vpack.c.b16 %v1388, %v1387
        %v1482 = vpack.c.b16 %v1390, %v1389
        %v1483 = vpack.c.b16 %v1392, %v1391
        %v1484 = vpack.c.b16 %v1394, %v1393
        %v1485 = vpack.c.b16 %v1396, %v1395
        %v1486 = vpack.c.b16 %v1398, %v1397
        %v1487 = vpack.c.b16 %v1400, %v1399
        %v1488 = vpack.c.b16 %v1402, %v1401
        %v1489 = vpack.c.b16 %v1404, %v1403
        %v1490 = vpack.c.b16 %v1406, %v1405
        %v1491 = vpack.c.b16 %v1408, %v1407
        %v1492 = vpack.c.b16 %v1410, %v1409
        %v1493 = vpack.c.b16 %v1412, %v1411
        %v1494 = vpack.c.b16 %v1414, %v1413
        %v1495 = vpack.c.b16 %v1416, %v1415
        %v1496 = vpack.c.b16 %v1418, %v1417
        %v1497 = vpack.c.b16 %v1420, %v1419
        %v1498 = vpack.c.b16 %v1422, %v1421
        %v1499 = vpack.c.b16 %v1424, %v1423
        %v1500 = vpack.c.b16 %v1426, %v1425
        %v1501 = vpack.c.b16 %v1428, %v1427
        %v1502 = vpack.c.b16 %v1430, %v1429
        %1575 = vmatpush.bf16.msra.mxu0 %v1438
        %1576 = vmatpush.bf16.msra.mxu0 %v1437
        %1577 = vmatpush.bf16.msra.mxu0 %v1436
        %1578 = vmatpush.bf16.msra.mxu0 %v1435
        %1579 = vmatpush.bf16.msra.mxu0 %v1434
        %1580 = vmatpush.bf16.msra.mxu0 %v1433
        %1581 = vmatpush.bf16.msra.mxu0 %v1432
        %1582 = vmatpush.bf16.msra.mxu0 %v1431
        %1583 = vmatmul.bf16.gmra.mxu0 %v1055
        %v1584 = vpop.f32.mrf.mxu0
        %v1585 = vadd.f32 0.0, %v1584
        %v1586 = vpop.f32.mrf.mxu0
        %v1587 = vadd.f32 0.0, %v1586
        %1588 = vmatmul.bf16.gmra.mxu0 %v1081
        %v1589 = vpop.f32.mrf.mxu0
        %v1590 = vadd.f32 0.0, %v1589
        %v1591 = vpop.f32.mrf.mxu0
        %v1592 = vadd.f32 0.0, %v1591
        %1593 = vmatmul.bf16.gmra.mxu0 %v1099
        %v1594 = vpop.f32.mrf.mxu0
        %v1595 = vadd.f32 0.0, %v1594
        %v1596 = vpop.f32.mrf.mxu0
        %v1597 = vadd.f32 0.0, %v1596
        %1598 = vdwg.mxu0
        %1599 = vmatpush.bf16.msra.mxu0 %v1446
        %1600 = vmatpush.bf16.msra.mxu0 %v1445
        %1601 = vmatpush.bf16.msra.mxu0 %v1444
        %1602 = vmatpush.bf16.msra.mxu0 %v1443
        %1603 = vmatpush.bf16.msra.mxu0 %v1442
        %1604 = vmatpush.bf16.msra.mxu0 %v1441
        %1605 = vmatpush.bf16.msra.mxu0 %v1440
        %1606 = vmatpush.bf16.msra.mxu0 %v1439
        %1607 = vmatmul.bf16.gmra.mxu0 %v1058
        %v1608 = vpop.f32.mrf.mxu0
        %v1609 = vadd.f32 %v1585, %v1608
        %v1610 = vpop.f32.mrf.mxu0
        %v1611 = vadd.f32 %v1587, %v1610
        %1612 = vmatmul.bf16.gmra.mxu0 %v1083
        %v1613 = vpop.f32.mrf.mxu0
        %v1614 = vadd.f32 %v1590, %v1613
        %v1615 = vpop.f32.mrf.mxu0
        %v1616 = vadd.f32 %v1592, %v1615
        %1617 = vmatmul.bf16.gmra.mxu0 %v1101
        %v1618 = vpop.f32.mrf.mxu0
        %v1619 = vadd.f32 %v1595, %v1618
        %v1620 = vpop.f32.mrf.mxu0
        %v1621 = vadd.f32 %v1597, %v1620
        %1622 = vdwg.mxu0
        %1623 = vmatpush.bf16.msra.mxu0 %v1454
        %1624 = vmatpush.bf16.msra.mxu0 %v1453
        %1625 = vmatpush.bf16.msra.mxu0 %v1452
        %1626 = vmatpush.bf16.msra.mxu0 %v1451
        %1627 = vmatpush.bf16.msra.mxu0 %v1450
        %1628 = vmatpush.bf16.msra.mxu0 %v1449
        %1629 = vmatpush.bf16.msra.mxu0 %v1448
        %1630 = vmatpush.bf16.msra.mxu0 %v1447
        %1631 = vmatmul.bf16.gmra.mxu0 %v1061
        %v1632 = vpop.f32.mrf.mxu0
        %v1633 = vadd.f32 %v1609, %v1632
        %v1634 = vpop.f32.mrf.mxu0
        %v1635 = vadd.f32 %v1611, %v1634
        %1636 = vmatmul.bf16.gmra.mxu0 %v1085
        %v1637 = vpop.f32.mrf.mxu0
        %v1638 = vadd.f32 %v1614, %v1637
        %v1639 = vpop.f32.mrf.mxu0
        %v1640 = vadd.f32 %v1616, %v1639
        %1641 = vmatmul.bf16.gmra.mxu0 %v1103
        %v1642 = vpop.f32.mrf.mxu0
        %v1643 = vadd.f32 %v1619, %v1642
        %v1644 = vpop.f32.mrf.mxu0
        %v1645 = vadd.f32 %v1621, %v1644
        %1646 = vdwg.mxu0
        %1647 = vmatpush.bf16.msra.mxu0 %v1462
        %1648 = vmatpush.bf16.msra.mxu0 %v1461
        %1649 = vmatpush.bf16.msra.mxu0 %v1460
        %1650 = vmatpush.bf16.msra.mxu0 %v1459
        %1651 = vmatpush.bf16.msra.mxu0 %v1458
        %1652 = vmatpush.bf16.msra.mxu0 %v1457
        %1653 = vmatpush.bf16.msra.mxu0 %v1456
        %1654 = vmatpush.bf16.msra.mxu0 %v1455
        %1655 = vmatmul.bf16.gmra.mxu0 %v1064
        %v1656 = vpop.f32.mrf.mxu0
        %v1657 = vadd.f32 %v1633, %v1656
        %v1658 = vpop.f32.mrf.mxu0
        %v1659 = vadd.f32 %v1635, %v1658
        %1660 = vmatmul.bf16.gmra.mxu0 %v1087
        %v1661 = vpop.f32.mrf.mxu0
        %v1662 = vadd.f32 %v1638, %v1661
        %v1663 = vpop.f32.mrf.mxu0
        %v1664 = vadd.f32 %v1640, %v1663
        %1665 = vmatmul.bf16.gmra.mxu0 %v1105
        %v1666 = vpop.f32.mrf.mxu0
        %v1667 = vadd.f32 %v1643, %v1666
        %v1668 = vpop.f32.mrf.mxu0
        %v1669 = vadd.f32 %v1645, %v1668
        %1670 = vdwg.mxu0
        %1671 = vmatpush.bf16.msra.mxu0 %v1470
        %1672 = vmatpush.bf16.msra.mxu0 %v1469
        %1673 = vmatpush.bf16.msra.mxu0 %v1468
        %1674 = vmatpush.bf16.msra.mxu0 %v1467
        %1675 = vmatpush.bf16.msra.mxu0 %v1466
        %1676 = vmatpush.bf16.msra.mxu0 %v1465
        %1677 = vmatpush.bf16.msra.mxu0 %v1464
        %1678 = vmatpush.bf16.msra.mxu0 %v1463
        %1679 = vmatmul.bf16.gmra.mxu0 %v1067
        %v1680 = vpop.f32.mrf.mxu0
        %v1681 = vadd.f32 %v1657, %v1680
        %v1682 = vpop.f32.mrf.mxu0
        %v1683 = vadd.f32 %v1659, %v1682
        %1684 = vmatmul.bf16.gmra.mxu0 %v1089
        %v1685 = vpop.f32.mrf.mxu0
        %v1686 = vadd.f32 %v1662, %v1685
        %v1687 = vpop.f32.mrf.mxu0
        %v1688 = vadd.f32 %v1664, %v1687
        %1689 = vmatmul.bf16.gmra.mxu0 %v1107
        %v1690 = vpop.f32.mrf.mxu0
        %v1691 = vadd.f32 %v1667, %v1690
        %v1692 = vpop.f32.mrf.mxu0
        %v1693 = vadd.f32 %v1669, %v1692
        %1694 = vdwg.mxu0
        %1695 = vmatpush.bf16.msra.mxu0 %v1478
        %1696 = vmatpush.bf16.msra.mxu0 %v1477
        %1697 = vmatpush.bf16.msra.mxu0 %v1476
        %1698 = vmatpush.bf16.msra.mxu0 %v1475
        %1699 = vmatpush.bf16.msra.mxu0 %v1474
        %1700 = vmatpush.bf16.msra.mxu0 %v1473
        %1701 = vmatpush.bf16.msra.mxu0 %v1472
        %1702 = vmatpush.bf16.msra.mxu0 %v1471
        %1703 = vmatmul.bf16.gmra.mxu0 %v1070
        %v1704 = vpop.f32.mrf.mxu0
        %v1705 = vadd.f32 %v1681, %v1704
        %v1706 = vpop.f32.mrf.mxu0
        %v1707 = vadd.f32 %v1683, %v1706
        %1708 = vmatmul.bf16.gmra.mxu0 %v1091
        %v1709 = vpop.f32.mrf.mxu0
        %v1710 = vadd.f32 %v1686, %v1709
        %v1711 = vpop.f32.mrf.mxu0
        %v1712 = vadd.f32 %v1688, %v1711
        %1713 = vmatmul.bf16.gmra.mxu0 %v1109
        %v1714 = vpop.f32.mrf.mxu0
        %v1715 = vadd.f32 %v1691, %v1714
        %v1716 = vpop.f32.mrf.mxu0
        %v1717 = vadd.f32 %v1693, %v1716
        %1718 = vdwg.mxu0
        %1719 = vmatpush.bf16.msra.mxu0 %v1486
        %1720 = vmatpush.bf16.msra.mxu0 %v1485
        %1721 = vmatpush.bf16.msra.mxu0 %v1484
        %1722 = vmatpush.bf16.msra.mxu0 %v1483
        %1723 = vmatpush.bf16.msra.mxu0 %v1482
        %1724 = vmatpush.bf16.msra.mxu0 %v1481
        %1725 = vmatpush.bf16.msra.mxu0 %v1480
        %1726 = vmatpush.bf16.msra.mxu0 %v1479
        %1727 = vmatmul.bf16.gmra.mxu0 %v1073
        %v1728 = vpop.f32.mrf.mxu0
        %v1729 = vadd.f32 %v1705, %v1728
        %v1730 = vpop.f32.mrf.mxu0
        %v1731 = vadd.f32 %v1707, %v1730
        %1732 = vmatmul.bf16.gmra.mxu0 %v1093
        %v1733 = vpop.f32.mrf.mxu0
        %v1734 = vadd.f32 %v1710, %v1733
        %v1735 = vpop.f32.mrf.mxu0
        %v1736 = vadd.f32 %v1712, %v1735
        %1737 = vmatmul.bf16.gmra.mxu0 %v1111
        %v1738 = vpop.f32.mrf.mxu0
        %v1739 = vadd.f32 %v1715, %v1738
        %v1740 = vpop.f32.mrf.mxu0
        %v1741 = vadd.f32 %v1717, %v1740
        %1742 = vdwg.mxu0
        %1743 = vmatpush.bf16.msra.mxu0 %v1494
        %1744 = vmatpush.bf16.msra.mxu0 %v1493
        %1745 = vmatpush.bf16.msra.mxu0 %v1492
        %1746 = vmatpush.bf16.msra.mxu0 %v1491
        %1747 = vmatpush.bf16.msra.mxu0 %v1490
        %1748 = vmatpush.bf16.msra.mxu0 %v1489
        %1749 = vmatpush.bf16.msra.mxu0 %v1488
        %1750 = vmatpush.bf16.msra.mxu0 %v1487
        %1751 = vmatmul.bf16.gmra.mxu0 %v1076
        %v1752 = vpop.f32.mrf.mxu0
        %v1753 = vadd.f32 %v1729, %v1752
        %v1754 = vpop.f32.mrf.mxu0
        %v1755 = vadd.f32 %v1731, %v1754
        %1756 = vmatmul.bf16.gmra.mxu0 %v1095
        %v1757 = vpop.f32.mrf.mxu0
        %v1758 = vadd.f32 %v1734, %v1757
        %v1759 = vpop.f32.mrf.mxu0
        %v1760 = vadd.f32 %v1736, %v1759
        %1761 = vmatmul.bf16.gmra.mxu0 %v1113
        %v1762 = vpop.f32.mrf.mxu0
        %v1763 = vadd.f32 %v1739, %v1762
        %v1764 = vpop.f32.mrf.mxu0
        %v1765 = vadd.f32 %v1741, %v1764
        %1766 = vdwg.mxu0
        %1767 = vmatpush.bf16.msra.mxu0 %v1502
        %1768 = vmatpush.bf16.msra.mxu0 %v1501
        %1769 = vmatpush.bf16.msra.mxu0 %v1500
        %1770 = vmatpush.bf16.msra.mxu0 %v1499
        %1771 = vmatpush.bf16.msra.mxu0 %v1498
        %1772 = vmatpush.bf16.msra.mxu0 %v1497
        %1773 = vmatpush.bf16.msra.mxu0 %v1496
        %1774 = vmatpush.bf16.msra.mxu0 %v1495
        %1775 = vmatmul.bf16.gmra.mxu0 %v1079
        %v1776 = vpop.f32.mrf.mxu0
        %v1777 = vadd.f32 %v1753, %v1776
        %v1778 = vpop.f32.mrf.mxu0
        %v1779 = vadd.f32 %v1755, %v1778
        %1780 = vmatmul.bf16.gmra.mxu0 %v1097
        %v1781 = vpop.f32.mrf.mxu0
        %v1782 = vadd.f32 %v1758, %v1781
        %v1783 = vpop.f32.mrf.mxu0
        %v1784 = vadd.f32 %v1760, %v1783
        %1785 = vmatmul.bf16.gmra.mxu0 %v1115
        %v1786 = vpop.f32.mrf.mxu0
        %v1787 = vadd.f32 %v1763, %v1786
        %v1788 = vpop.f32.mrf.mxu0
        %v1789 = vadd.f32 %v1765, %v1788
        %1790 = vdwg.mxu0
        %v1791 = vld [vmem:[%s6] sm:$0x1]
        %v1793 = vperm.slane %v1791, 0
        %v1795 = vmul.f32 %v1777, %v1793
        %v1796 = vmul.f32 %v1779, %v1793
        %v1797 = vmul.f32 %v1782, %v1793
        %v1798 = vmul.f32 %v1784, %v1793
        %v1799 = vmul.f32 %v1787, %v1793
        %v1800 = vmul.f32 %v1789, %v1793
        %v1801 = vld [vmem:[%s7] sm:$0x1]
        %v1803 = vperm.slane %v1801, 0
        %v1805 = vadd.f32 %v1795, %v1803
        %v1806 = vadd.f32 %v1796, %v1803
        %v1807 = vadd.f32 %v1797, %v1803
        %v1808 = vadd.f32 %v1798, %v1803
        %v1809 = vadd.f32 %v1799, %v1803
        %v1810 = vadd.f32 %v1800, %v1803
        %v1811 = vmax.f32 %v1805, 0.0
        %v1812 = vmax.f32 %v1806, 0.0
        %v1813 = vmax.f32 %v1807, 0.0
        %v1814 = vmax.f32 %v1808, 0.0
        %v1815 = vmax.f32 %v1809, 0.0
        %v1816 = vmax.f32 %v1810, 0.0
        %v1817 = vpack.c.bf16 %v1812, %v1811
        %v1818 = vpack.c.bf16 %v1814, %v1813
        %v1819 = vpack.c.bf16 %v1816, %v1815
        %v1820 = vld [vmem:[#allocation10] sm:$0xf]
        %v1821 = vld [vmem:[#allocation10 + $0x4] sm:$0xf]
        %v1822 = vld [vmem:[#allocation10 + $0x8] sm:$0xf]
        %v1823 = vld [vmem:[#allocation10 + $0xc] sm:$0xf]
        %v1824 = vld [vmem:[#allocation10 + $0x10] sm:$0xf]
        %v1825 = vld [vmem:[#allocation10 + $0x14] sm:$0xf]
        %v1826 = vld [vmem:[#allocation10 + $0x18] sm:$0xf]
        %v1827 = vld [vmem:[#allocation10 + $0x1c] sm:$0xf]
        %v1828 = vld [vmem:[#allocation10 + $0x20] sm:$0xf]
        %v1829 = vld [vmem:[#allocation10 + $0x24] sm:$0xf]
        %v1830 = vld [vmem:[#allocation10 + $0x28] sm:$0xf]
        %v1831 = vld [vmem:[#allocation10 + $0x2c] sm:$0xf]
        %v1832 = vld [vmem:[#allocation10 + $0x30] sm:$0xf]
        %v1833 = vld [vmem:[#allocation10 + $0x34] sm:$0xf]
        %v1834 = vld [vmem:[#allocation10 + $0x38] sm:$0xf]
        %v1835 = vld [vmem:[#allocation10 + $0x3c] sm:$0xf]
        %v1852 = vunpack.c.l.b16 %v1820
        %v1853 = vunpack.c.l.b16 %v1821
        %v1854 = vunpack.c.l.b16 %v1822
        %v1855 = vunpack.c.l.b16 %v1823
        %v1856 = vunpack.c.l.b16 %v1824
        %v1857 = vunpack.c.l.b16 %v1825
        %v1858 = vunpack.c.l.b16 %v1826
        %v1859 = vunpack.c.l.b16 %v1827
        %v1860 = vunpack.c.l.b16 %v1828
        %v1861 = vunpack.c.l.b16 %v1829
        %v1862 = vunpack.c.l.b16 %v1830
        %v1863 = vunpack.c.l.b16 %v1831
        %v1864 = vunpack.c.l.b16 %v1832
        %v1865 = vunpack.c.l.b16 %v1833
        %v1866 = vunpack.c.l.b16 %v1834
        %v1867 = vunpack.c.l.b16 %v1835
        %v1868 = vpack.c.b16 %v1853, %v1852
        %v1869 = vpack.c.b16 %v1855, %v1854
        %v1870 = vpack.c.b16 %v1857, %v1856
        %v1871 = vpack.c.b16 %v1859, %v1858
        %v1872 = vpack.c.b16 %v1861, %v1860
        %v1873 = vpack.c.b16 %v1863, %v1862
        %v1874 = vpack.c.b16 %v1865, %v1864
        %v1875 = vpack.c.b16 %v1867, %v1866
        %1884 = vmatpush.bf16.msra.mxu0 %v1875
        %1885 = vmatpush.bf16.msra.mxu0 %v1874
        %1886 = vmatpush.bf16.msra.mxu0 %v1873
        %1887 = vmatpush.bf16.msra.mxu0 %v1872
        %1888 = vmatpush.bf16.msra.mxu0 %v1871
        %1889 = vmatpush.bf16.msra.mxu0 %v1870
        %1890 = vmatpush.bf16.msra.mxu0 %v1869
        %1891 = vmatpush.bf16.msra.mxu0 %v1868
        %1892 = vmatmul.bf16.gmra.mxu0 %v1817
        %v1893 = vpop.f32.mrf.mxu0
        %v1894 = vadd.f32 0.0, %v1893
        %v1895 = vpop.f32.mrf.mxu0
        %v1896 = vadd.f32 0.0, %v1895
        %1897 = vmatmul.bf16.gmra.mxu0 %v1818
        %v1898 = vpop.f32.mrf.mxu0
        %v1899 = vadd.f32 0.0, %v1898
        %v1900 = vpop.f32.mrf.mxu0
        %v1901 = vadd.f32 0.0, %v1900
        %1902 = vmatmul.bf16.gmra.mxu0 %v1819
        %v1903 = vpop.f32.mrf.mxu0
        %v1904 = vadd.f32 0.0, %v1903
        %v1905 = vpop.f32.mrf.mxu0
        %v1906 = vadd.f32 0.0, %v1905
        %1907 = vdwg.mxu0
        %v1908 = vld [vmem:[%s9] sm:$0x1]
        %v1910 = vperm.slane %v1908, 0
        %v1912 = vmul.f32 %v1894, %v1910
        %v1913 = vmul.f32 %v1896, %v1910
        %v1914 = vmul.f32 %v1899, %v1910
        %v1915 = vmul.f32 %v1901, %v1910
        %v1916 = vmul.f32 %v1904, %v1910
        %v1917 = vmul.f32 %v1906, %v1910
        %v1918 = vld [vmem:[%s10] sm:$0x1]
        %v1920 = vperm.slane %v1918, 0
        %v1922 = vadd.f32 %v1912, %v1920
        %v1923 = vadd.f32 %v1913, %v1920
        %v1924 = vadd.f32 %v1914, %v1920
        %v1925 = vadd.f32 %v1915, %v1920
        %v1926 = vadd.f32 %v1916, %v1920
        %v1927 = vadd.f32 %v1917, %v1920
        %v1928 = vunpack.c.l.bf16 %v522
        %v1929 = vunpack.c.l.bf16 %v523
        %v1930 = vunpack.c.l.bf16 %v524
        %v1931 = vunpack.c.l.bf16 %v525
        %v1932 = vunpack.c.l.bf16 %v526
        %v1933 = vunpack.c.l.bf16 %v527
        %v1934 = vadd.f32 %v1922, %v1928
        %v1935 = vadd.f32 %v1923, %v1929
        %v1936 = vadd.f32 %v1924, %v1930
        %v1937 = vadd.f32 %v1925, %v1931
        %v1938 = vadd.f32 %v1926, %v1932
        %v1939 = vadd.f32 %v1927, %v1933
        %v1940 = vmax.f32 %v1934, 0.0
        %v1941 = vmax.f32 %v1935, 0.0
        %v1942 = vmax.f32 %v1936, 0.0
        %v1943 = vmax.f32 %v1937, 0.0
        %v1944 = vmax.f32 %v1938, 0.0
        %v1945 = vmax.f32 %v1939, 0.0
        %v1946 = vpack.c.bf16 %v1940, %v1940
        %v1947 = vpack.c.bf16 %v1941, %v1941
        %v1948 = vpack.c.bf16 %v1942, %v1942
        %v1949 = vpack.c.bf16 %v1943, %v1943
        %v1950 = vpack.c.bf16 %v1944, %v1944
        %v1951 = vpack.c.bf16 %v1945, %v1945
        %1952 = vst [vmem:[%s519] sm:$0xf] %v1946
        %1953 = vst [vmem:[%s519 + $0x4] sm:$0xf] %v1947
        %1954 = vst [vmem:[%s519 + $0x8] sm:$0xf] %v1948
        %1955 = vst [vmem:[%s519 + $0xc] sm:$0xf] %v1949
        %1956 = vst [vmem:[%s519 + $0x10] sm:$0xf] %v1950
        %1957 = vst [vmem:[%s519 + $0x14] sm:$0xf] %v1951
        %s1958 = sand.u32 %s299, 1
        %s1959 = scalar_lea.sflag [#allocation4], %s1958
        %s1960 = sand.u32 %s299, 1
        %s1961 = smul.addr %s1960, 24
        %s1962 = scalar_lea.vmem [#allocation11], %s1961
        // Predicated region
        $region85: #{tpu_custom_call.1} parent=63 // pred_check
          %p1963 = pneg %p309
        $region86: #{tpu_custom_call.1} parent=63 // pred_check_branch
          %1965 = sbr.rel (%p1963) target = $region88
        $region87: #{tpu_custom_call.1} parent=63 // pred_region
          %s1966 = smul.u32 6, %s37
          %1968 = vsyncadd %s1959, 0
          %s1969 = smul.addr %s36, 18
          %s1970 = sadd.s32 %s1966, %s1969
          %s1971 = smul.addr %s1970, 4
          %s1972 = scalar_lea.hbm %s11, %s1971
          %s1973 = sshll.u32 %s1962, 4
          %s1974 = int_to_ptr.vmem [resolvable:$true] %s1973
          %s1975 = sshll.u32 %s1972, 4
          %s1976 = int_to_ptr.hbm [resolvable:$true] %s1975
          %1981 = dma.vmem_to_hbm [thread:$0]  %s1974, 384, %s1976, %s1959, 64, 64, 4
        $region88: #{tpu_custom_call.1} parent=63 // pred_fallthru
          _
      $region64: #{tpu_custom_call.1} parent=5 // pred_fallthru
        _
      %p1982 = scmp.le.s32.totalorder 2, %s27
      // Predicated region
      $region89: #{tpu_custom_call.1} parent=5 // pred_check
        %p1983 = pneg %p1982
      $region90: #{tpu_custom_call.1} parent=5 // pred_check_branch
        %1985 = sbr.rel (%p1983) target = $region92
      $region91: #{tpu_custom_call.1} parent=5 // pred_region
        %s1986 = ssub.s32 %s27, 2
        // Predicated region
        $region93: #{tpu_custom_call.1} parent=91 // pred_check
          %p1987 = pneg %p315
        $region94: #{tpu_custom_call.1} parent=91 // pred_check_branch
          %1989 = sbr.rel (%p1987) target = $region96
        $region95: #{tpu_custom_call.1} parent=91 // pred_region
          %s1990 = sand.u32 %s300, 1
          %s1991 = scalar_lea.sflag [#allocation4], %s1990
          %s1992 = sand.u32 %s300, 1
          %s1993 = smul.addr %s1992, 24
          %s1994 = scalar_lea.vmem [#allocation11], %s1993
          %1996 = dma.done %s1991, 384
        $region96: #{tpu_custom_call.1} parent=91 // pred_fallthru
          _
      $region92: #{tpu_custom_call.1} parent=5 // pred_fallthru
        _
    $region6: #{tpu_custom_call.1} parent=1 // loop_footer
      %s31 = sadd.s32 1, %s27
    $region7: #{tpu_custom_call.1} parent=1 // loop_footer_branch
      %26 = sbr.rel target = $region3
    $region8: #{tpu_custom_call.1} parent=1 // loop_exit
      _
    %1997 = vsyncpa [#allocation3], 1
    %s1998 = scalar_lea.sflag [#allocation3], 1
    %1999 = vsyncpa %s1998, 1
    %2000 = vsyncpa [#allocation6], 1
    %s2001 = scalar_lea.sflag [#allocation6], 1
    %2002 = vsyncpa %s2001, 1
    %2003 = vsyncpa [#allocation9], 1
    %2004 = vsyncpa [#allocation4], 1
    %s2005 = scalar_lea.sflag [#allocation4], 1
    %2006 = vsyncpa %s2005, 1

</llo_original>
